<compile_context>
chip_gen: v7x
topology: tpu7x:2x2x1
jax: 0.10.0
libtpu: 0.0.40
codegen_flags: <defaults>
</compile_context>

<pallas_src>
import functools

import jax
import jax.numpy as jnp
from jax.experimental import pallas as pl
from jax.experimental.pallas import tpu as pltpu


def conv3x3_kernel(x_ref, w_ref, b_ref, o_ref, xpad_ref, patch_ref, *, nrb):
    """One (batch n, row-block rb) tile of a 3x3 / stride-1 / pad-1 conv.

    x_ref:     (1, H, W, Cin)     bf16  whole NHWC image (resident across rb)
    w_ref:     (9*Cin, Coutp)     bf16  HWIO weights, all 9 taps folded into K
    b_ref:     (1, Coutp)         f32   bias (zero-padded to Coutp)
    o_ref:     (1, RB, W, Coutp)  f32   output row block (lane-dense Coutp)
    xpad_ref:  (RB+2, W+2, Cin)   bf16  scratch: zero-padded halo slab
    patch_ref: (RB, W, 9*Cin)     bf16  scratch: im2col row strip
    nrb:       static number of row blocks (H // RB)
    """
    W = x_ref.shape[2]
    Cin = x_ref.shape[3]
    RB = o_ref.shape[1]
    Coutp = o_ref.shape[3]

    # ---- in-kernel padding=1: build the (RB+2, W+2, Cin) halo slab ---------
    # Full-slab zero is one contiguous vectorized store; it is dwarfed by the
    # 9x patch-build traffic below, so halo-only masked stores are not worth it.
    xpad_ref[...] = jnp.zeros_like(xpad_ref)

    if nrb == 1:
        # Whole image handled in a single row block: purely static slices,
        # no halo conditionals emitted at all.
        xpad_ref[1:RB + 1, 1:W + 1, :] = x_ref[0, :, :, :]
    else:
        rb = pl.program_id(1)
        r0 = pl.multiple_of(rb * RB, RB)
        xpad_ref[1:RB + 1, 1:W + 1, :] = x_ref[0, pl.ds(r0, RB), :, :]

        @pl.when(rb > 0)
        def _():                                           # top halo row
            xpad_ref[0:1, 1:W + 1, :] = x_ref[0, pl.ds(r0 - 1, 1), :, :]

        @pl.when(rb < nrb - 1)
        def _():                                           # bottom halo row
            xpad_ref[RB + 1:RB + 2, 1:W + 1, :] = x_ref[0, pl.ds(r0 + RB, 1), :, :]

    # ---- im2col row strip: fold all 9 taps into the contraction dim --------
    for kh in range(3):
        for kw in range(3):
            j = (kh * 3 + kw) * Cin
            patch_ref[:, :, j:j + Cin] = xpad_ref[kh:kh + RB, kw:kw + W, :]

    patches = patch_ref[...].reshape(RB * W, 9 * Cin)

    # Single deep-K MXU matmul, f32 accumulation; f32 bias fused into the
    # epilogue (no separate zero-init / bias pass over the output tile).
    acc = jnp.dot(patches, w_ref[...], preferred_element_type=jnp.float32)
    acc = acc + b_ref[...]
    o_ref[0, :, :, :] = acc.reshape(RB, W, Coutp).astype(o_ref.dtype)


def _step_vmem_bytes(H, W, Cin, Coutp, rb):
    """Rough per-step VMEM footprint (double-buffered pipeline inputs/outputs)."""
    img = 2 * H * W * Cin * 2            # bf16 image
    wgt = 2 * 9 * Cin * Coutp * 2        # bf16 folded weights
    bias = 2 * Coutp * 4                 # f32 bias
    outb = 2 * rb * W * Coutp * 4        # f32 output row block
    xpad = (rb + 2) * (W + 2) * Cin * 2  # halo slab scratch
    patch = rb * W * 9 * Cin * 2         # im2col scratch
    return img + wgt + bias + outb + xpad + patch


def _pick_row_block(H, W, Cin, Coutp, budget_bytes=24 * 1024 * 1024):
    """Largest divisor of H whose per-step footprint fits the VMEM budget."""
    for d in sorted((d for d in range(1, H + 1) if H % d == 0), reverse=True):
        if _step_vmem_bytes(H, W, Cin, Coutp, d) <= budget_bytes:
            return d
    return 1


def conv3x3(x_nchw, w_oihw, bias, *, row_block=None):
    """Conv3x3.forward: conv2d(k=3, s=1, p=1) + bias.  NCHW in / NCHW out."""
    N, Cin, H, W = x_nchw.shape
    Cout = w_oihw.shape[0]
    Coutp = ((Cout + 127) // 128) * 128                # lane-dense output
    if row_block is None:
        row_block = _pick_row_block(H, W, Cin, Coutp)
    assert H % row_block == 0
    nrb = H // row_block

    # Glue to/from the PyTorch NCHW convention.  bf16 feeds the MXU natively.
    # TODO(synk): in an NHWC end-to-end model the two activation transposes
    # (and the Coutp slice below) disappear; they are layout glue for NCHW.
    x = jnp.transpose(x_nchw, (0, 2, 3, 1)).astype(jnp.bfloat16)      # NHWC
    w = jnp.transpose(w_oihw, (2, 3, 1, 0)).astype(jnp.bfloat16)      # HWIO
    w = w.reshape(9 * Cin, Cout)                                      # taps -> K
    w = jnp.pad(w, ((0, 0), (0, Coutp - Cout)))
    b = jnp.pad(bias.astype(jnp.float32), (0, Coutp - Cout)).reshape(1, Coutp)

    kernel = functools.partial(conv3x3_kernel, nrb=nrb)

    out_nhwc = pl.pallas_call(
        kernel,
        out_shape=jax.ShapeDtypeStruct((N, H, W, Coutp), x_nchw.dtype),
        grid=(N, nrb),
        in_specs=[
            # Whole image stays resident in VMEM while rb sweeps its rows
            # (constant block index along rb -> no re-DMA per row block).
            # TODO(synk): for very large images, stream row strips (+halo) via
            # manual DMA instead of holding the whole image per batch element.
            pl.BlockSpec((1, H, W, Cin), lambda n, rb: (n, 0, 0, 0)),
            # Weights / bias: constant index maps -> fetched once, resident.
            pl.BlockSpec((9 * Cin, Coutp), lambda n, rb: (0, 0)),
            pl.BlockSpec((1, Coutp), lambda n, rb: (0, 0)),
        ],
        out_specs=pl.BlockSpec((1, row_block, W, Coutp),
                               lambda n, rb: (n, rb, 0, 0)),
        scratch_shapes=[
            pltpu.VMEM((row_block + 2, W + 2, Cin), jnp.bfloat16),
            pltpu.VMEM((row_block, W, 9 * Cin), jnp.bfloat16),
        ],
        compiler_params=pltpu.CompilerParams(
            dimension_semantics=("parallel", "parallel"),
            vmem_limit_bytes=32 * 1024 * 1024,
        ),
    )(x, w, b)

    out_nhwc = out_nhwc[:, :, :, :Cout]
    return jnp.transpose(out_nhwc, (0, 3, 1, 2))


if __name__ == "__main__":
    # Shapes implied by nn.Conv2d(in_ch, out_ch, 3, 1, 1).
    N, Cin, Cout, H, W = 2, 4, 8, 16, 16
    key = jax.random.PRNGKey(0)
    kx, kw_, kb = jax.random.split(key, 3)
    x = jax.random.normal(kx, (N, Cin, H, W), dtype=jnp.float32)
    w = jax.random.normal(kw_, (Cout, Cin, 3, 3), dtype=jnp.float32) * 0.1
    b = jax.random.normal(kb, (Cout,), dtype=jnp.float32) * 0.1

    out = jax.block_until_ready(conv3x3(x, w, b))
    assert out.shape == (N, Cout, H, W)

    # Reference on the same bf16-rounded operands (the kernel feeds bf16 to
    # the MXU with f32 accumulation), so this isolates kernel semantics.
    xb = x.astype(jnp.bfloat16).astype(jnp.float32)
    wb = w.astype(jnp.bfloat16).astype(jnp.float32)
    ref = jax.lax.conv_general_dilated(
        xb, wb, window_strides=(1, 1), padding=((1, 1), (1, 1)),
        dimension_numbers=("NCHW", "OIHW", "NCHW"),
        precision=jax.lax.Precision.HIGHEST,
    ) + b[None, :, None, None]
    err = float(jnp.max(jnp.abs(out - ref)))
    assert err < 1e-3, err

    # latency buffer of the module (constant metadata, not part of forward)
    latency = jnp.float32(0.8)
    _ = latency

    print("KERNEL_OK")
</pallas_src>

<mosaic_0001>
module attributes {stable_mosaic.version = 11 : i64} {
  func.func @conv3x3_kernel(%arg0: i32, %arg1: i32, %arg2: memref<1x16x16x4xbf16, #tpu.memory_space<vmem>>, %arg3: memref<36x128xbf16, #tpu.memory_space<vmem>>, %arg4: memref<1x128xf32, #tpu.memory_space<vmem>>, %arg5: memref<1x16x16x128xf32, #tpu.memory_space<vmem>>, %arg6: memref<18x18x4xbf16, #tpu.memory_space<vmem>>, %arg7: memref<16x16x36xbf16, #tpu.memory_space<vmem>>) attributes {dimension_semantics = [#tpu.dimension_semantics<parallel>, #tpu.dimension_semantics<parallel>], iteration_bounds = array<i64: 2, 1>, scalar_prefetch = 0 : i64, scratch_operands = 2 : i64, tpu.core_type = #tpu.core_type<tc>, window_params = [{transform_indices = @transform_0, window_bounds = array<i64: 1, 16, 16, 4>}, {pipeline_mode = #tpu.pipeline_mode<synchronous>, transform_indices = @transform_1, window_bounds = array<i64: 36, 128>}, {pipeline_mode = #tpu.pipeline_mode<synchronous>, transform_indices = @transform_2, window_bounds = array<i64: 1, 128>}, {transform_indices = @transform_3, window_bounds = array<i64: 1, 16, 16, 128>}]} {
    %cst = arith.constant 0.000000e+00 : bf16
    %0 = vector.broadcast %cst : bf16 to vector<18x18x4xbf16>
    %c0 = arith.constant 0 : index
    %c0_0 = arith.constant 0 : index
    %c0_1 = arith.constant 0 : index
    %1 = vector.load %arg6[%c0, %c0_0, %c0_1] : memref<18x18x4xbf16, #tpu.memory_space<vmem>>, vector<18x18x4xbf16>
    tpu.vector_store %arg6[%c0, %c0_0, %c0_1], %0 {strides = array<i32>} : memref<18x18x4xbf16, #tpu.memory_space<vmem>>, vector<18x18x4xbf16>,
    %c0_2 = arith.constant 0 : index
    %c0_3 = arith.constant 0 : index
    %c0_4 = arith.constant 0 : index
    %c0_5 = arith.constant 0 : index
    %2 = vector.load %arg2[%c0_2, %c0_3, %c0_4, %c0_5] : memref<1x16x16x4xbf16, #tpu.memory_space<vmem>>, vector<1x16x16x4xbf16>
    %3 = vector.shape_cast %2 : vector<1x16x16x4xbf16> to vector<16x16x4xbf16>
    %c1 = arith.constant 1 : index
    %c1_6 = arith.constant 1 : index
    %c0_7 = arith.constant 0 : index
    %4 = vector.load %arg6[%c1, %c1_6, %c0_7] : memref<18x18x4xbf16, #tpu.memory_space<vmem>>, vector<16x16x4xbf16>
    tpu.vector_store %arg6[%c1, %c1_6, %c0_7], %3 {strides = array<i32>} : memref<18x18x4xbf16, #tpu.memory_space<vmem>>, vector<16x16x4xbf16>,
    %c0_8 = arith.constant 0 : index
    %c0_9 = arith.constant 0 : index
    %c0_10 = arith.constant 0 : index
    %5 = vector.load %arg6[%c0_8, %c0_9, %c0_10] : memref<18x18x4xbf16, #tpu.memory_space<vmem>>, vector<16x16x4xbf16>
    %c0_11 = arith.constant 0 : index
    %c0_12 = arith.constant 0 : index
    %c0_13 = arith.constant 0 : index
    %6 = vector.load %arg7[%c0_11, %c0_12, %c0_13] : memref<16x16x36xbf16, #tpu.memory_space<vmem>>, vector<16x16x4xbf16>
    tpu.vector_store %arg7[%c0_11, %c0_12, %c0_13], %5 {strides = array<i32>} : memref<16x16x36xbf16, #tpu.memory_space<vmem>>, vector<16x16x4xbf16>,
    %c0_14 = arith.constant 0 : index
    %c1_15 = arith.constant 1 : index
    %c0_16 = arith.constant 0 : index
    %7 = vector.load %arg6[%c0_14, %c1_15, %c0_16] : memref<18x18x4xbf16, #tpu.memory_space<vmem>>, vector<16x16x4xbf16>
    %c0_17 = arith.constant 0 : index
    %c0_18 = arith.constant 0 : index
    %c4 = arith.constant 4 : index
    %8 = vector.load %arg7[%c0_17, %c0_18, %c4] : memref<16x16x36xbf16, #tpu.memory_space<vmem>>, vector<16x16x4xbf16>
    tpu.vector_store %arg7[%c0_17, %c0_18, %c4], %7 {strides = array<i32>} : memref<16x16x36xbf16, #tpu.memory_space<vmem>>, vector<16x16x4xbf16>,
    %c0_19 = arith.constant 0 : index
    %c2 = arith.constant 2 : index
    %c0_20 = arith.constant 0 : index
    %9 = vector.load %arg6[%c0_19, %c2, %c0_20] : memref<18x18x4xbf16, #tpu.memory_space<vmem>>, vector<16x16x4xbf16>
    %c0_21 = arith.constant 0 : index
    %c0_22 = arith.constant 0 : index
    %c8 = arith.constant 8 : index
    %10 = vector.load %arg7[%c0_21, %c0_22, %c8] : memref<16x16x36xbf16, #tpu.memory_space<vmem>>, vector<16x16x4xbf16>
    tpu.vector_store %arg7[%c0_21, %c0_22, %c8], %9 {strides = array<i32>} : memref<16x16x36xbf16, #tpu.memory_space<vmem>>, vector<16x16x4xbf16>,
    %c1_23 = arith.constant 1 : index
    %c0_24 = arith.constant 0 : index
    %c0_25 = arith.constant 0 : index
    %11 = vector.load %arg6[%c1_23, %c0_24, %c0_25] : memref<18x18x4xbf16, #tpu.memory_space<vmem>>, vector<16x16x4xbf16>
    %c0_26 = arith.constant 0 : index
    %c0_27 = arith.constant 0 : index
    %c12 = arith.constant 12 : index
    %12 = vector.load %arg7[%c0_26, %c0_27, %c12] : memref<16x16x36xbf16, #tpu.memory_space<vmem>>, vector<16x16x4xbf16>
    tpu.vector_store %arg7[%c0_26, %c0_27, %c12], %11 {strides = array<i32>} : memref<16x16x36xbf16, #tpu.memory_space<vmem>>, vector<16x16x4xbf16>,
    %c1_28 = arith.constant 1 : index
    %c1_29 = arith.constant 1 : index
    %c0_30 = arith.constant 0 : index
    %13 = vector.load %arg6[%c1_28, %c1_29, %c0_30] : memref<18x18x4xbf16, #tpu.memory_space<vmem>>, vector<16x16x4xbf16>
    %c0_31 = arith.constant 0 : index
    %c0_32 = arith.constant 0 : index
    %c16 = arith.constant 16 : index
    %14 = vector.load %arg7[%c0_31, %c0_32, %c16] : memref<16x16x36xbf16, #tpu.memory_space<vmem>>, vector<16x16x4xbf16>
    tpu.vector_store %arg7[%c0_31, %c0_32, %c16], %13 {strides = array<i32>} : memref<16x16x36xbf16, #tpu.memory_space<vmem>>, vector<16x16x4xbf16>,
    %c1_33 = arith.constant 1 : index
    %c2_34 = arith.constant 2 : index
    %c0_35 = arith.constant 0 : index
    %15 = vector.load %arg6[%c1_33, %c2_34, %c0_35] : memref<18x18x4xbf16, #tpu.memory_space<vmem>>, vector<16x16x4xbf16>
    %c0_36 = arith.constant 0 : index
    %c0_37 = arith.constant 0 : index
    %c20 = arith.constant 20 : index
    %16 = vector.load %arg7[%c0_36, %c0_37, %c20] : memref<16x16x36xbf16, #tpu.memory_space<vmem>>, vector<16x16x4xbf16>
    tpu.vector_store %arg7[%c0_36, %c0_37, %c20], %15 {strides = array<i32>} : memref<16x16x36xbf16, #tpu.memory_space<vmem>>, vector<16x16x4xbf16>,
    %c2_38 = arith.constant 2 : index
    %c0_39 = arith.constant 0 : index
    %c0_40 = arith.constant 0 : index
    %17 = vector.load %arg6[%c2_38, %c0_39, %c0_40] : memref<18x18x4xbf16, #tpu.memory_space<vmem>>, vector<16x16x4xbf16>
    %c0_41 = arith.constant 0 : index
    %c0_42 = arith.constant 0 : index
    %c24 = arith.constant 24 : index
    %18 = vector.load %arg7[%c0_41, %c0_42, %c24] : memref<16x16x36xbf16, #tpu.memory_space<vmem>>, vector<16x16x4xbf16>
    tpu.vector_store %arg7[%c0_41, %c0_42, %c24], %17 {strides = array<i32>} : memref<16x16x36xbf16, #tpu.memory_space<vmem>>, vector<16x16x4xbf16>,
    %c2_43 = arith.constant 2 : index
    %c1_44 = arith.constant 1 : index
    %c0_45 = arith.constant 0 : index
    %19 = vector.load %arg6[%c2_43, %c1_44, %c0_45] : memref<18x18x4xbf16, #tpu.memory_space<vmem>>, vector<16x16x4xbf16>
    %c0_46 = arith.constant 0 : index
    %c0_47 = arith.constant 0 : index
    %c28 = arith.constant 28 : index
    %20 = vector.load %arg7[%c0_46, %c0_47, %c28] : memref<16x16x36xbf16, #tpu.memory_space<vmem>>, vector<16x16x4xbf16>
    tpu.vector_store %arg7[%c0_46, %c0_47, %c28], %19 {strides = array<i32>} : memref<16x16x36xbf16, #tpu.memory_space<vmem>>, vector<16x16x4xbf16>,
    %c2_48 = arith.constant 2 : index
    %c2_49 = arith.constant 2 : index
    %c0_50 = arith.constant 0 : index
    %21 = vector.load %arg6[%c2_48, %c2_49, %c0_50] : memref<18x18x4xbf16, #tpu.memory_space<vmem>>, vector<16x16x4xbf16>
    %c0_51 = arith.constant 0 : index
    %c0_52 = arith.constant 0 : index
    %c32 = arith.constant 32 : index
    %22 = vector.load %arg7[%c0_51, %c0_52, %c32] : memref<16x16x36xbf16, #tpu.memory_space<vmem>>, vector<16x16x4xbf16>
    tpu.vector_store %arg7[%c0_51, %c0_52, %c32], %21 {strides = array<i32>} : memref<16x16x36xbf16, #tpu.memory_space<vmem>>, vector<16x16x4xbf16>,
    %c0_53 = arith.constant 0 : index
    %c0_54 = arith.constant 0 : index
    %c0_55 = arith.constant 0 : index
    %23 = vector.load %arg7[%c0_53, %c0_54, %c0_55] : memref<16x16x36xbf16, #tpu.memory_space<vmem>>, vector<16x16x36xbf16>
    %24 = vector.shape_cast %23 : vector<16x16x36xbf16> to vector<256x36xbf16>
    %c0_56 = arith.constant 0 : index
    %c0_57 = arith.constant 0 : index
    %25 = vector.load %arg3[%c0_56, %c0_57] : memref<36x128xbf16, #tpu.memory_space<vmem>>, vector<36x128xbf16>
    %cst_58 = arith.constant dense<0.000000e+00> : vector<256x128xf32>
    %26 = tpu.matmul %24, %25, %cst_58 {dimension_numbers = #tpu.dot_dimension_numbers<[1], [0], [0], [1], [0, 0, 1, 1], [], []>} : vector<256x36xbf16>, vector<36x128xbf16>, vector<256x128xf32> -> vector<256x128xf32>
    %c0_59 = arith.constant 0 : index
    %c0_60 = arith.constant 0 : index
    %27 = vector.load %arg4[%c0_59, %c0_60] : memref<1x128xf32, #tpu.memory_space<vmem>>, vector<1x128xf32>
    %28 = vector.broadcast %27 : vector<1x128xf32> to vector<256x128xf32>
    %29 = arith.addf %26, %28 : vector<256x128xf32>
    %30 = vector.shape_cast %29 : vector<256x128xf32> to vector<16x16x128xf32>
    %c0_61 = arith.constant 0 : index
    %c0_62 = arith.constant 0 : index
    %c0_63 = arith.constant 0 : index
    %c0_64 = arith.constant 0 : index
    %31 = vector.load %arg5[%c0_61, %c0_62, %c0_63, %c0_64] : memref<1x16x16x128xf32, #tpu.memory_space<vmem>>, vector<1x16x16x128xf32>
    %32 = vector.shape_cast %31 : vector<1x16x16x128xf32> to vector<16x16x128xf32>
    %33 = vector.shape_cast %30 : vector<16x16x128xf32> to vector<1x16x16x128xf32>
    tpu.vector_store %arg5[%c0_61, %c0_62, %c0_63, %c0_64], %33 {strides = array<i32>} : memref<1x16x16x128xf32, #tpu.memory_space<vmem>>, vector<1x16x16x128xf32>,
    return
  }
  func.func @transform_0(%arg0: i32, %arg1: i32) -> (i32, i32, i32, i32) {
    %c0_i32 = arith.constant 0 : i32
    %c0_i32_0 = arith.constant 0 : i32
    %c0_i32_1 = arith.constant 0 : i32
    %c0_i32_2 = arith.constant 0 : i32
    return %arg0, %c0_i32, %c0_i32_0, %c0_i32_1 : i32, i32, i32, i32
  }
  func.func @transform_1(%arg0: i32, %arg1: i32) -> (i32, i32) {
    %c0_i32 = arith.constant 0 : i32
    %c0_i32_0 = arith.constant 0 : i32
    %c0_i32_1 = arith.constant 0 : i32
    return %c0_i32, %c0_i32_0 : i32, i32
  }
  func.func @transform_2(%arg0: i32, %arg1: i32) -> (i32, i32) {
    %c0_i32 = arith.constant 0 : i32
    %c0_i32_0 = arith.constant 0 : i32
    %c0_i32_1 = arith.constant 0 : i32
    return %c0_i32, %c0_i32_0 : i32, i32
  }
  func.func @transform_3(%arg0: i32, %arg1: i32) -> (i32, i32, i32, i32) {
    %c0_i32 = arith.constant 0 : i32
    %c0_i32_0 = arith.constant 0 : i32
    %c0_i32_1 = arith.constant 0 : i32
    return %arg0, %arg1, %c0_i32, %c0_i32_0 : i32, i32, i32, i32
  }
}

</mosaic_0001>

<llo_original>
// kernel: tpu_custom_call.1
$region0: #{tpu_custom_call.1}
  #allocation0 [shape = 'u32[]', space=smem, size = 0x4, offset = 0x4, fixed_abs, tag = 'smem constant byte address 0x4 - core index']
  #allocation1 [shape = 'u32[144,128]{1,0:T(1,128)}', space=vmem, size = 0x12000, scoped, tag = 'internal scratch']
  #allocation2 [shape = 'bf16[18,18,4]{2,1,0:T(8,128)(2,1)}', space=vmem, size = 0x1b000, scoped, tag = 'scratch operand']
  #allocation3 [shape = 'bf16[16,16,36]{2,1,0:T(16,128)(2,1)}', space=vmem, size = 0x10000, scoped, tag = 'scratch operand']
  %s0 = inlined_call_operand.vmem [shape: bf16[2,16,16,4], index: 0, kind: input, shape index: {}]
  %s1 = inlined_call_operand.vmem [shape: bf16[36,128], index: 1, kind: input, shape index: {}]
  %s2 = inlined_call_operand.vmem [shape: f32[1,128], index: 2, kind: input, shape index: {}]
  %s3 = inlined_call_operand.hbm [shape: f32[2,16,16,128], index: 3, kind: output, shape index: {}]
  %s4 = sld [smem:[#allocation0]]
  $region45: #{tpu_custom_call.1} parent=0
    _
  %s6 = ssub.s32 1, %s4
  %s7 = scalar_select 0, %s6, %s4
  $region1: #{tpu_custom_call.1} parent=0
    #allocation4 [shape = 'u8[262144]{0}', space=vmem, size = 0x40000, scoped, tag = 'output window, operand 0']
    #allocation5 [shape = 's32[2]{0}', space=sflag, size = 0x8, scoped, tag = 'scoped memory for tpu_custom_call.1']
    %8 = vsyncpa [#allocation5], 0
    %s9 = scalar_lea.sflag [#allocation5], 1
    %10 = vsyncpa %s9, 0
    loop: start=0, step=1, limit=4
    $region2: #{tpu_custom_call.1} parent=1 // loop_pre_header
      _
    $region3: #{tpu_custom_call.1} parent=1 // loop_header
      %s12 = sphi 0, %s16
      %p13 = scmp.ge.s32.totalorder %s12, 4
      %s19 = sphi 0, %s31
      %s20 = sphi 0, %s27
      %s21 = sphi 0, %s19
      %s22 = sphi 0, %s20
      %s23 = sphi 0, %s21
      %s24 = sphi 0, %s22
      %s34 = sphi 0, %s36
      %s37 = sphi 0, %s34
      %s38 = sphi 0, %s37
      %s54 = sphi 0, %s38
      %s58 = sphi 0, %s58
      %s60 = sphi 0, %s58
      %s61 = sphi 0, %s60
      %s75 = sphi 0, %s61
      %s79 = sphi 0, %s79
      %s81 = sphi 0, %s79
      %s82 = sphi 0, %s81
      %s96 = sphi 0, %s82
      %s104 = sphi 0, %s106
      %s107 = sphi 0, %s104
      %s108 = sphi 0, %s107
      %s124 = sphi 0, %s108
    $region4: #{tpu_custom_call.1} parent=1 // loop_header_branch
      %15 = sbr.rel (%p13) target = $region8
    $region5: #{tpu_custom_call.1} parent=1 // loop_body
      %s17 = ssub.s32 %s12, 1
      %s18 = ssub.s32 %s12, 2
      %s25 = sadd.s32 1, %s20
      %p26 = scmp.ge.s32.totalorder %s25, 1
      %s27 = scalar_select %p26, 0, %s25
      %s28 = sadd.s32 1, %s19
      %s29 = scalar_select %p26, %s28, %s19
      %p30 = scmp.ge.s32.totalorder %s29, 2
      %s31 = scalar_select %p30, 0, %s29
      %s32 = ssub.s32 %s19, %s31
      %p33 = scmp.eq.s32.totalorder %s32, 0
      %s35 = sadd.s32 %s34, 1
      %s36 = scalar_select %p33, %s34, %s35
      %p39 = pneg %p33
      %p40 = scmp.eq.s32.totalorder %s12, 1
      %p41 = por %p39, %p40
      %p42 = scmp.ne.s32.totalorder %s34, %s37
      %p43 = scmp.eq.s32.totalorder %s12, 0
      %p44 = por %p42, %p43
      %p45 = scmp.ne.s32.totalorder %s34, %s37
      %p46 = scmp.eq.s32.totalorder %s17, 1
      %p47 = por %p45, %p46
      %p48 = scmp.ne.s32.totalorder %s37, %s38
      %p49 = scmp.eq.s32.totalorder %s17, 0
      %p50 = por %p48, %p49
      %p51 = scmp.ne.s32.totalorder %s37, %s38
      %p52 = scmp.eq.s32.totalorder %s18, 1
      %p53 = por %p51, %p52
      %p55 = scmp.ne.s32.totalorder %s38, %s54
      %p56 = scmp.eq.s32.totalorder %s18, 0
      %p57 = por %p55, %p56
      %s59 = sadd.s32 %s58, 1
      %p62 = scmp.eq.s32.totalorder %s12, 1
      %p63 = scmp.ne.s32.totalorder %s58, %s60
      %p64 = scmp.eq.s32.totalorder %s12, 0
      %p65 = por %p63, %p64
      %p66 = scmp.ne.s32.totalorder %s58, %s60
      %p67 = scmp.eq.s32.totalorder %s17, 1
      %p68 = por %p66, %p67
      %p69 = scmp.ne.s32.totalorder %s60, %s61
      %p70 = scmp.eq.s32.totalorder %s17, 0
      %p71 = por %p69, %p70
      %p72 = scmp.ne.s32.totalorder %s60, %s61
      %p73 = scmp.eq.s32.totalorder %s18, 1
      %p74 = por %p72, %p73
      %p76 = scmp.ne.s32.totalorder %s61, %s75
      %p77 = scmp.eq.s32.totalorder %s18, 0
      %p78 = por %p76, %p77
      %s80 = sadd.s32 %s79, 1
      %p83 = scmp.eq.s32.totalorder %s12, 1
      %p84 = scmp.ne.s32.totalorder %s79, %s81
      %p85 = scmp.eq.s32.totalorder %s12, 0
      %p86 = por %p84, %p85
      %p87 = scmp.ne.s32.totalorder %s79, %s81
      %p88 = scmp.eq.s32.totalorder %s17, 1
      %p89 = por %p87, %p88
      %p90 = scmp.ne.s32.totalorder %s81, %s82
      %p91 = scmp.eq.s32.totalorder %s17, 0
      %p92 = por %p90, %p91
      %p93 = scmp.ne.s32.totalorder %s81, %s82
      %p94 = scmp.eq.s32.totalorder %s18, 1
      %p95 = por %p93, %p94
      %p97 = scmp.ne.s32.totalorder %s82, %s96
      %p98 = scmp.eq.s32.totalorder %s18, 0
      %p99 = por %p97, %p98
      %s100 = ssub.s32 %s19, %s31
      %s101 = ssub.s32 %s20, %s27
      %s102 = sor.u32 %s100, %s101
      %p103 = scmp.eq.s32.totalorder %s102, 0
      %s105 = sadd.s32 %s104, 1
      %s106 = scalar_select %p103, %s104, %s105
      %p109 = pneg %p103
      %p110 = scmp.eq.s32.totalorder %s12, 1
      %p111 = por %p109, %p110
      %p112 = scmp.ne.s32.totalorder %s104, %s107
      %p113 = scmp.eq.s32.totalorder %s12, 0
      %p114 = por %p112, %p113
      %p115 = scmp.ne.s32.totalorder %s104, %s107
      %p116 = scmp.eq.s32.totalorder %s17, 1
      %p117 = por %p115, %p116
      %p118 = scmp.ne.s32.totalorder %s107, %s108
      %p119 = scmp.eq.s32.totalorder %s17, 0
      %p120 = por %p118, %p119
      %p121 = scmp.ne.s32.totalorder %s107, %s108
      %p122 = scmp.eq.s32.totalorder %s18, 1
      %p123 = por %p121, %p122
      %p125 = scmp.ne.s32.totalorder %s108, %s124
      %p126 = scmp.eq.s32.totalorder %s18, 0
      %p127 = por %p125, %p126
      %p128 = scmp.le.s32.totalorder 1, %s12
      %p129 = scmp.lt.s32.totalorder %s12, 3
      %p130 = pnand %p128, %p129
      %p131 = pneg %p130
      // Predicated region
      $region9: #{tpu_custom_call.1} parent=5 // pred_check
        _
      $region10: #{tpu_custom_call.1} parent=5 // pred_check_branch
        %133 = sbr.rel (%p130) target = $region12
      $region11: #{tpu_custom_call.1} parent=5 // pred_region
        %s134 = ssub.s32 %s12, 1
        // Predicated region
        $region13: #{tpu_custom_call.1} parent=11 // pred_check
          %p135 = pneg %p71
        $region14: #{tpu_custom_call.1} parent=11 // pred_check_branch
          %137 = sbr.rel (%p135) target = $region16
        $region15: #{tpu_custom_call.1} parent=11 // pred_region
          _
        $region16: #{tpu_custom_call.1} parent=11 // pred_fallthru
          _
        // Predicated region
        $region17: #{tpu_custom_call.1} parent=11 // pred_check
          %p138 = pneg %p92
        $region18: #{tpu_custom_call.1} parent=11 // pred_check_branch
          %140 = sbr.rel (%p138) target = $region20
        $region19: #{tpu_custom_call.1} parent=11 // pred_region
          _
        $region20: #{tpu_custom_call.1} parent=11 // pred_fallthru
          _
      $region12: #{tpu_custom_call.1} parent=5 // pred_fallthru
        _
      %p141 = scmp.lt.s32.totalorder %s12, 2
      // Predicated region
      $region21: #{tpu_custom_call.1} parent=5 // pred_check
        %p142 = pneg %p141
      $region22: #{tpu_custom_call.1} parent=5 // pred_check_branch
        %144 = sbr.rel (%p142) target = $region24
      $region23: #{tpu_custom_call.1} parent=5 // pred_region
        // Predicated region
        $region25: #{tpu_custom_call.1} parent=23 // pred_check
          %p145 = pneg %p44
        $region26: #{tpu_custom_call.1} parent=23 // pred_check_branch
          %147 = sbr.rel (%p145) target = $region28
        $region27: #{tpu_custom_call.1} parent=23 // pred_region
          %p148 = scmp.lt.s32.totalorder %s19, 1
          %s149 = scalar_select %p148, %s19, 1
          %s150 = smul.addr %s149, 32
          %s151 = smul.addr %s150, 4
          %s152 = scalar_lea.vmem %s0, %s151
        $region28: #{tpu_custom_call.1} parent=23 // pred_fallthru
          _
      $region24: #{tpu_custom_call.1} parent=5 // pred_fallthru
        _
      %p153 = scmp.le.s32.totalorder 1, %s12
      %p154 = scmp.lt.s32.totalorder %s12, 3
      %p155 = pnand %p153, %p154
      %p156 = pneg %p155
      // Predicated region
      $region29: #{tpu_custom_call.1} parent=5 // pred_check
        _
      $region30: #{tpu_custom_call.1} parent=5 // pred_check_branch
        %158 = sbr.rel (%p155) target = $region32
      $region31: #{tpu_custom_call.1} parent=5 // pred_region
        %s159 = ssub.s32 %s12, 1
        %p160 = scmp.lt.s32.totalorder %s21, 1
        %s161 = scalar_select %p160, %s21, 1
        %s162 = smul.addr %s161, 32
        %s163 = smul.addr %s162, 4
        %s164 = scalar_lea.vmem %s0, %s163
        %p165 = pneg %p50
        %p166 = pneg %p47
        %p167 = pneg %p71
        %p168 = pneg %p68
        %p169 = pneg %p92
        %p170 = pneg %p89
        %p171 = pneg %p120
        %p172 = pneg %p117
        %s173 = sand.u32 %s107, 1
        %s174 = scalar_lea.sflag [#allocation5], %s173
        %s175 = sand.u32 %s107, 1
        %s176 = smul.addr %s175, 256
        %s177 = scalar_lea.vmem [#allocation4], %s176
        %p178 = scmp.lt.s32.totalorder %s21, 1
        %s179 = scalar_select %p178, %s21, 1
        %s180 = smul.addr %s179, 32
        %s181 = smul.addr %s180, 4
        %s182 = scalar_lea.vmem %s0, %s181
        %s183 = smul.u32 16, %s22
        %vm185 = vcmask 27648
        %186 = vst.msk [vmem:[#allocation2] sm:$0xf] %vm185, 0
        %187 = vst.msk [vmem:[#allocation2 + $0x4] sm:$0xf] %vm185, 0
        %vm188 = vcmask 24576
        %189 = vst.msk [vmem:[#allocation2 + $0x8] sm:$0x1] %vm188, 0
        %190 = vst.msk [vmem:[#allocation2 + $0xc] sm:$0xf] %vm185, 0
        %191 = vst.msk [vmem:[#allocation2 + $0x10] sm:$0xf] %vm185, 0
        %192 = vst.msk [vmem:[#allocation2 + $0x14] sm:$0x1] %vm188, 0
        %193 = vst.msk [vmem:[#allocation2 + $0x18] sm:$0xf] %vm185, 0
        %194 = vst.msk [vmem:[#allocation2 + $0x1c] sm:$0xf] %vm185, 0
        %195 = vst.msk [vmem:[#allocation2 + $0x20] sm:$0x1] %vm188, 0
        %196 = vst.msk [vmem:[#allocation2 + $0x24] sm:$0xf] %vm185, 0
        %197 = vst.msk [vmem:[#allocation2 + $0x28] sm:$0xf] %vm185, 0
        %198 = vst.msk [vmem:[#allocation2 + $0x2c] sm:$0x1] %vm188, 0
        %199 = vst.msk [vmem:[#allocation2 + $0x30] sm:$0xf] %vm185, 0
        %200 = vst.msk [vmem:[#allocation2 + $0x34] sm:$0xf] %vm185, 0
        %201 = vst.msk [vmem:[#allocation2 + $0x38] sm:$0x1] %vm188, 0
        %202 = vst.msk [vmem:[#allocation2 + $0x3c] sm:$0xf] %vm185, 0
        %203 = vst.msk [vmem:[#allocation2 + $0x40] sm:$0xf] %vm185, 0
        %204 = vst.msk [vmem:[#allocation2 + $0x44] sm:$0x1] %vm188, 0
        %205 = vst.msk [vmem:[#allocation2 + $0x48] sm:$0xf] %vm185, 0
        %206 = vst.msk [vmem:[#allocation2 + $0x4c] sm:$0xf] %vm185, 0
        %207 = vst.msk [vmem:[#allocation2 + $0x50] sm:$0x1] %vm188, 0
        %208 = vst.msk [vmem:[#allocation2 + $0x54] sm:$0xf] %vm185, 0
        %209 = vst.msk [vmem:[#allocation2 + $0x58] sm:$0xf] %vm185, 0
        %210 = vst.msk [vmem:[#allocation2 + $0x5c] sm:$0x1] %vm188, 0
        %211 = vst.msk [vmem:[#allocation2 + $0x60] sm:$0xf] %vm185, 0
        %212 = vst.msk [vmem:[#allocation2 + $0x64] sm:$0xf] %vm185, 0
        %213 = vst.msk [vmem:[#allocation2 + $0x68] sm:$0x1] %vm188, 0
        %214 = vst.msk [vmem:[#allocation2 + $0x6c] sm:$0xf] %vm185, 0
        %215 = vst.msk [vmem:[#allocation2 + $0x70] sm:$0xf] %vm185, 0
        %216 = vst.msk [vmem:[#allocation2 + $0x74] sm:$0x1] %vm188, 0
        %217 = vst.msk [vmem:[#allocation2 + $0x78] sm:$0xf] %vm185, 0
        %218 = vst.msk [vmem:[#allocation2 + $0x7c] sm:$0xf] %vm185, 0
        %219 = vst.msk [vmem:[#allocation2 + $0x80] sm:$0x1] %vm188, 0
        %220 = vst.msk [vmem:[#allocation2 + $0x84] sm:$0xf] %vm185, 0
        %221 = vst.msk [vmem:[#allocation2 + $0x88] sm:$0xf] %vm185, 0
        %222 = vst.msk [vmem:[#allocation2 + $0x8c] sm:$0x1] %vm188, 0
        %223 = vst.msk [vmem:[#allocation2 + $0x90] sm:$0xf] %vm185, 0
        %224 = vst.msk [vmem:[#allocation2 + $0x94] sm:$0xf] %vm185, 0
        %225 = vst.msk [vmem:[#allocation2 + $0x98] sm:$0x1] %vm188, 0
        %226 = vst.msk [vmem:[#allocation2 + $0x9c] sm:$0xf] %vm185, 0
        %227 = vst.msk [vmem:[#allocation2 + $0xa0] sm:$0xf] %vm185, 0
        %228 = vst.msk [vmem:[#allocation2 + $0xa4] sm:$0x1] %vm188, 0
        %229 = vst.msk [vmem:[#allocation2 + $0xa8] sm:$0xf] %vm185, 0
        %230 = vst.msk [vmem:[#allocation2 + $0xac] sm:$0xf] %vm185, 0
        %231 = vst.msk [vmem:[#allocation2 + $0xb0] sm:$0x1] %vm188, 0
        %232 = vst.msk [vmem:[#allocation2 + $0xb4] sm:$0xf] %vm185, 0
        %233 = vst.msk [vmem:[#allocation2 + $0xb8] sm:$0xf] %vm185, 0
        %234 = vst.msk [vmem:[#allocation2 + $0xbc] sm:$0x1] %vm188, 0
        %235 = vst.msk [vmem:[#allocation2 + $0xc0] sm:$0xf] %vm185, 0
        %236 = vst.msk [vmem:[#allocation2 + $0xc4] sm:$0xf] %vm185, 0
        %237 = vst.msk [vmem:[#allocation2 + $0xc8] sm:$0x1] %vm188, 0
        %238 = vst.msk [vmem:[#allocation2 + $0xcc] sm:$0xf] %vm185, 0
        %239 = vst.msk [vmem:[#allocation2 + $0xd0] sm:$0xf] %vm185, 0
        %240 = vst.msk [vmem:[#allocation2 + $0xd4] sm:$0x1] %vm188, 0
        %v241 = vld [vmem:[%s182] sm:$0xf]
        %v242 = vld [vmem:[%s182 + $0x4] sm:$0xf]
        %v243 = vld [vmem:[%s182 + $0x8] sm:$0xf]
        %v244 = vld [vmem:[%s182 + $0xc] sm:$0xf]
        %v245 = vld [vmem:[%s182 + $0x10] sm:$0xf]
        %v246 = vld [vmem:[%s182 + $0x14] sm:$0xf]
        %v247 = vld [vmem:[%s182 + $0x18] sm:$0xf]
        %v248 = vld [vmem:[%s182 + $0x1c] sm:$0xf]
        %v249 = vld [vmem:[%s182 + $0x20] sm:$0xf]
        %v250 = vld [vmem:[%s182 + $0x24] sm:$0xf]
        %v251 = vld [vmem:[%s182 + $0x28] sm:$0xf]
        %v252 = vld [vmem:[%s182 + $0x2c] sm:$0xf]
        %v253 = vld [vmem:[%s182 + $0x30] sm:$0xf]
        %v254 = vld [vmem:[%s182 + $0x34] sm:$0xf]
        %v255 = vld [vmem:[%s182 + $0x38] sm:$0xf]
        %v256 = vld [vmem:[%s182 + $0x3c] sm:$0xf]
        %v257 = vld [vmem:[%s182 + $0x40] sm:$0xf]
        %v258 = vld [vmem:[%s182 + $0x44] sm:$0xf]
        %v259 = vld [vmem:[%s182 + $0x48] sm:$0xf]
        %v260 = vld [vmem:[%s182 + $0x4c] sm:$0xf]
        %v261 = vld [vmem:[%s182 + $0x50] sm:$0xf]
        %v262 = vld [vmem:[%s182 + $0x54] sm:$0xf]
        %v263 = vld [vmem:[%s182 + $0x58] sm:$0xf]
        %v264 = vld [vmem:[%s182 + $0x5c] sm:$0xf]
        %v265 = vld [vmem:[%s182 + $0x60] sm:$0xf]
        %v266 = vld [vmem:[%s182 + $0x64] sm:$0xf]
        %v267 = vld [vmem:[%s182 + $0x68] sm:$0xf]
        %v268 = vld [vmem:[%s182 + $0x6c] sm:$0xf]
        %v269 = vld [vmem:[%s182 + $0x70] sm:$0xf]
        %v270 = vld [vmem:[%s182 + $0x74] sm:$0xf]
        %v271 = vld [vmem:[%s182 + $0x78] sm:$0xf]
        %v272 = vld [vmem:[%s182 + $0x7c] sm:$0xf]
        %vm273 = vsmask.f32 256
        %vm274 = vsmask.f32 4368
        %vm275 = vmor %vm273, %vm274
        %v277 = vshrl.u32 %v241, 16
        %v279 = vrot.slane %v277, 7
        %v280 = vshll.u32 %v241, 16
        %v282 = vor.u32 %v279, %v280
        %v283 = vrot.slane %v279, 4
        %v285 = vshrl.u32 %v242, 16
        %v287 = vrot.slane %v285, 7
        %v288 = vshll.u32 %v242, 16
        %v290 = vor.u32 %v287, %v288
        %v291 = vsel %vm275, %v283, %v290
        %v292 = vrot.slane %v287, 4
        %v294 = vshrl.u32 %v243, 16
        %v296 = vrot.slane %v294, 7
        %v297 = vshll.u32 %v243, 16
        %v299 = vor.u32 %v296, %v297
        %v300 = vrot.slane %v296, 4
        %v302 = vshrl.u32 %v244, 16
        %v304 = vrot.slane %v302, 7
        %v305 = vshll.u32 %v244, 16
        %v307 = vor.u32 %v304, %v305
        %v308 = vsel %vm275, %v300, %v307
        %v309 = vrot.slane %v304, 4
        %v311 = vshrl.u32 %v245, 16
        %v313 = vrot.slane %v311, 7
        %v314 = vshll.u32 %v245, 16
        %v316 = vor.u32 %v313, %v314
        %v317 = vrot.slane %v313, 4
        %v319 = vshrl.u32 %v246, 16
        %v321 = vrot.slane %v319, 7
        %v322 = vshll.u32 %v246, 16
        %v324 = vor.u32 %v321, %v322
        %v325 = vsel %vm275, %v317, %v324
        %v326 = vrot.slane %v321, 4
        %v328 = vshrl.u32 %v247, 16
        %v330 = vrot.slane %v328, 7
        %v331 = vshll.u32 %v247, 16
        %v333 = vor.u32 %v330, %v331
        %v334 = vrot.slane %v330, 4
        %v336 = vshrl.u32 %v248, 16
        %v338 = vrot.slane %v336, 7
        %v339 = vshll.u32 %v248, 16
        %v341 = vor.u32 %v338, %v339
        %v342 = vsel %vm275, %v334, %v341
        %v343 = vrot.slane %v338, 4
        %v345 = vshrl.u32 %v249, 16
        %v347 = vrot.slane %v345, 7
        %v348 = vshll.u32 %v249, 16
        %v350 = vor.u32 %v347, %v348
        %v351 = vrot.slane %v347, 4
        %v353 = vshrl.u32 %v250, 16
        %v355 = vrot.slane %v353, 7
        %v356 = vshll.u32 %v250, 16
        %v358 = vor.u32 %v355, %v356
        %v359 = vsel %vm275, %v351, %v358
        %v360 = vrot.slane %v355, 4
        %v362 = vshrl.u32 %v251, 16
        %v364 = vrot.slane %v362, 7
        %v365 = vshll.u32 %v251, 16
        %v367 = vor.u32 %v364, %v365
        %v368 = vrot.slane %v364, 4
        %v370 = vshrl.u32 %v252, 16
        %v372 = vrot.slane %v370, 7
        %v373 = vshll.u32 %v252, 16
        %v375 = vor.u32 %v372, %v373
        %v376 = vsel %vm275, %v368, %v375
        %v377 = vrot.slane %v372, 4
        %v379 = vshrl.u32 %v253, 16
        %v381 = vrot.slane %v379, 7
        %v382 = vshll.u32 %v253, 16
        %v384 = vor.u32 %v381, %v382
        %v385 = vrot.slane %v381, 4
        %v387 = vshrl.u32 %v254, 16
        %v389 = vrot.slane %v387, 7
        %v390 = vshll.u32 %v254, 16
        %v392 = vor.u32 %v389, %v390
        %v393 = vsel %vm275, %v385, %v392
        %v394 = vrot.slane %v389, 4
        %v396 = vshrl.u32 %v255, 16
        %v398 = vrot.slane %v396, 7
        %v399 = vshll.u32 %v255, 16
        %v401 = vor.u32 %v398, %v399
        %v402 = vrot.slane %v398, 4
        %v404 = vshrl.u32 %v256, 16
        %v406 = vrot.slane %v404, 7
        %v407 = vshll.u32 %v256, 16
        %v409 = vor.u32 %v406, %v407
        %v410 = vsel %vm275, %v402, %v409
        %v411 = vrot.slane %v406, 4
        %v413 = vshrl.u32 %v257, 16
        %v415 = vrot.slane %v413, 7
        %v416 = vshll.u32 %v257, 16
        %v418 = vor.u32 %v415, %v416
        %v419 = vrot.slane %v415, 4
        %v421 = vshrl.u32 %v258, 16
        %v423 = vrot.slane %v421, 7
        %v424 = vshll.u32 %v258, 16
        %v426 = vor.u32 %v423, %v424
        %v427 = vsel %vm275, %v419, %v426
        %v428 = vrot.slane %v423, 4
        %v430 = vshrl.u32 %v259, 16
        %v432 = vrot.slane %v430, 7
        %v433 = vshll.u32 %v259, 16
        %v435 = vor.u32 %v432, %v433
        %v436 = vrot.slane %v432, 4
        %v438 = vshrl.u32 %v260, 16
        %v440 = vrot.slane %v438, 7
        %v441 = vshll.u32 %v260, 16
        %v443 = vor.u32 %v440, %v441
        %v444 = vsel %vm275, %v436, %v443
        %v445 = vrot.slane %v440, 4
        %v447 = vshrl.u32 %v261, 16
        %v449 = vrot.slane %v447, 7
        %v450 = vshll.u32 %v261, 16
        %v452 = vor.u32 %v449, %v450
        %v453 = vrot.slane %v449, 4
        %v455 = vshrl.u32 %v262, 16
        %v457 = vrot.slane %v455, 7
        %v458 = vshll.u32 %v262, 16
        %v460 = vor.u32 %v457, %v458
        %v461 = vsel %vm275, %v453, %v460
        %v462 = vrot.slane %v457, 4
        %v464 = vshrl.u32 %v263, 16
        %v466 = vrot.slane %v464, 7
        %v467 = vshll.u32 %v263, 16
        %v469 = vor.u32 %v466, %v467
        %v470 = vrot.slane %v466, 4
        %v472 = vshrl.u32 %v264, 16
        %v474 = vrot.slane %v472, 7
        %v475 = vshll.u32 %v264, 16
        %v477 = vor.u32 %v474, %v475
        %v478 = vsel %vm275, %v470, %v477
        %v479 = vrot.slane %v474, 4
        %v481 = vshrl.u32 %v265, 16
        %v483 = vrot.slane %v481, 7
        %v484 = vshll.u32 %v265, 16
        %v486 = vor.u32 %v483, %v484
        %v487 = vrot.slane %v483, 4
        %v489 = vshrl.u32 %v266, 16
        %v491 = vrot.slane %v489, 7
        %v492 = vshll.u32 %v266, 16
        %v494 = vor.u32 %v491, %v492
        %v495 = vsel %vm275, %v487, %v494
        %v496 = vrot.slane %v491, 4
        %v498 = vshrl.u32 %v267, 16
        %v500 = vrot.slane %v498, 7
        %v501 = vshll.u32 %v267, 16
        %v503 = vor.u32 %v500, %v501
        %v504 = vrot.slane %v500, 4
        %v506 = vshrl.u32 %v268, 16
        %v508 = vrot.slane %v506, 7
        %v509 = vshll.u32 %v268, 16
        %v511 = vor.u32 %v508, %v509
        %v512 = vsel %vm275, %v504, %v511
        %v513 = vrot.slane %v508, 4
        %v515 = vshrl.u32 %v269, 16
        %v517 = vrot.slane %v515, 7
        %v518 = vshll.u32 %v269, 16
        %v520 = vor.u32 %v517, %v518
        %v521 = vrot.slane %v517, 4
        %v523 = vshrl.u32 %v270, 16
        %v525 = vrot.slane %v523, 7
        %v526 = vshll.u32 %v270, 16
        %v528 = vor.u32 %v525, %v526
        %v529 = vsel %vm275, %v521, %v528
        %v530 = vrot.slane %v525, 4
        %v532 = vshrl.u32 %v271, 16
        %v534 = vrot.slane %v532, 7
        %v535 = vshll.u32 %v271, 16
        %v537 = vor.u32 %v534, %v535
        %v538 = vrot.slane %v534, 4
        %v540 = vshrl.u32 %v272, 16
        %v542 = vrot.slane %v540, 7
        %v543 = vshll.u32 %v272, 16
        %v545 = vor.u32 %v542, %v543
        %v546 = vsel %vm275, %v538, %v545
        %v547 = vrot.slane %v542, 4
        %s596 = scalar_lea.vmem [#allocation2], 12
        %vm597 = vcmask 27648
        %vm598 = vsmask.f32 7938
        %vm599 = vmand %vm597, %vm598
        %v600 = vld [vmem:[%s596] sm:$0xf]
        %v601 = vsel %vm599, %v282, %v600
        %602 = vst [vmem:[%s596] sm:$0xf] %v601
        %603 = vst.msk [vmem:[%s596 + $0x4] sm:$0xf] %vm185, %v291
        %vm604 = vcmask 24576
        %vm605 = vmand %vm604, %vm273
        %v606 = vld [vmem:[%s596 + $0x8] sm:$0x1]
        %v607 = vsel %vm605, %v292, %v606
        %608 = vst [vmem:[%s596 + $0x8] sm:$0x1] %v607
        %v609 = vld [vmem:[%s596 + $0xc] sm:$0xf]
        %v610 = vsel %vm599, %v299, %v609
        %611 = vst [vmem:[%s596 + $0xc] sm:$0xf] %v610
        %612 = vst.msk [vmem:[%s596 + $0x10] sm:$0xf] %vm185, %v308
        %v613 = vld [vmem:[%s596 + $0x14] sm:$0x1]
        %v614 = vsel %vm605, %v309, %v613
        %615 = vst [vmem:[%s596 + $0x14] sm:$0x1] %v614
        %v616 = vld [vmem:[%s596 + $0x18] sm:$0xf]
        %v617 = vsel %vm599, %v316, %v616
        %618 = vst [vmem:[%s596 + $0x18] sm:$0xf] %v617
        %619 = vst.msk [vmem:[%s596 + $0x1c] sm:$0xf] %vm185, %v325
        %v620 = vld [vmem:[%s596 + $0x20] sm:$0x1]
        %v621 = vsel %vm605, %v326, %v620
        %622 = vst [vmem:[%s596 + $0x20] sm:$0x1] %v621
        %v623 = vld [vmem:[%s596 + $0x24] sm:$0xf]
        %v624 = vsel %vm599, %v333, %v623
        %625 = vst [vmem:[%s596 + $0x24] sm:$0xf] %v624
        %626 = vst.msk [vmem:[%s596 + $0x28] sm:$0xf] %vm185, %v342
        %v627 = vld [vmem:[%s596 + $0x2c] sm:$0x1]
        %v628 = vsel %vm605, %v343, %v627
        %629 = vst [vmem:[%s596 + $0x2c] sm:$0x1] %v628
        %v630 = vld [vmem:[%s596 + $0x30] sm:$0xf]
        %v631 = vsel %vm599, %v350, %v630
        %632 = vst [vmem:[%s596 + $0x30] sm:$0xf] %v631
        %633 = vst.msk [vmem:[%s596 + $0x34] sm:$0xf] %vm185, %v359
        %v634 = vld [vmem:[%s596 + $0x38] sm:$0x1]
        %v635 = vsel %vm605, %v360, %v634
        %636 = vst [vmem:[%s596 + $0x38] sm:$0x1] %v635
        %v637 = vld [vmem:[%s596 + $0x3c] sm:$0xf]
        %v638 = vsel %vm599, %v367, %v637
        %639 = vst [vmem:[%s596 + $0x3c] sm:$0xf] %v638
        %640 = vst.msk [vmem:[%s596 + $0x40] sm:$0xf] %vm185, %v376
        %v641 = vld [vmem:[%s596 + $0x44] sm:$0x1]
        %v642 = vsel %vm605, %v377, %v641
        %643 = vst [vmem:[%s596 + $0x44] sm:$0x1] %v642
        %v644 = vld [vmem:[%s596 + $0x48] sm:$0xf]
        %v645 = vsel %vm599, %v384, %v644
        %646 = vst [vmem:[%s596 + $0x48] sm:$0xf] %v645
        %647 = vst.msk [vmem:[%s596 + $0x4c] sm:$0xf] %vm185, %v393
        %v648 = vld [vmem:[%s596 + $0x50] sm:$0x1]
        %v649 = vsel %vm605, %v394, %v648
        %650 = vst [vmem:[%s596 + $0x50] sm:$0x1] %v649
        %v651 = vld [vmem:[%s596 + $0x54] sm:$0xf]
        %v652 = vsel %vm599, %v401, %v651
        %653 = vst [vmem:[%s596 + $0x54] sm:$0xf] %v652
        %654 = vst.msk [vmem:[%s596 + $0x58] sm:$0xf] %vm185, %v410
        %v655 = vld [vmem:[%s596 + $0x5c] sm:$0x1]
        %v656 = vsel %vm605, %v411, %v655
        %657 = vst [vmem:[%s596 + $0x5c] sm:$0x1] %v656
        %v658 = vld [vmem:[%s596 + $0x60] sm:$0xf]
        %v659 = vsel %vm599, %v418, %v658
        %660 = vst [vmem:[%s596 + $0x60] sm:$0xf] %v659
        %661 = vst.msk [vmem:[%s596 + $0x64] sm:$0xf] %vm185, %v427
        %v662 = vld [vmem:[%s596 + $0x68] sm:$0x1]
        %v663 = vsel %vm605, %v428, %v662
        %664 = vst [vmem:[%s596 + $0x68] sm:$0x1] %v663
        %v665 = vld [vmem:[%s596 + $0x6c] sm:$0xf]
        %v666 = vsel %vm599, %v435, %v665
        %667 = vst [vmem:[%s596 + $0x6c] sm:$0xf] %v666
        %668 = vst.msk [vmem:[%s596 + $0x70] sm:$0xf] %vm185, %v444
        %v669 = vld [vmem:[%s596 + $0x74] sm:$0x1]
        %v670 = vsel %vm605, %v445, %v669
        %671 = vst [vmem:[%s596 + $0x74] sm:$0x1] %v670
        %v672 = vld [vmem:[%s596 + $0x78] sm:$0xf]
        %v673 = vsel %vm599, %v452, %v672
        %674 = vst [vmem:[%s596 + $0x78] sm:$0xf] %v673
        %675 = vst.msk [vmem:[%s596 + $0x7c] sm:$0xf] %vm185, %v461
        %v676 = vld [vmem:[%s596 + $0x80] sm:$0x1]
        %v677 = vsel %vm605, %v462, %v676
        %678 = vst [vmem:[%s596 + $0x80] sm:$0x1] %v677
        %v679 = vld [vmem:[%s596 + $0x84] sm:$0xf]
        %v680 = vsel %vm599, %v469, %v679
        %681 = vst [vmem:[%s596 + $0x84] sm:$0xf] %v680
        %682 = vst.msk [vmem:[%s596 + $0x88] sm:$0xf] %vm185, %v478
        %v683 = vld [vmem:[%s596 + $0x8c] sm:$0x1]
        %v684 = vsel %vm605, %v479, %v683
        %685 = vst [vmem:[%s596 + $0x8c] sm:$0x1] %v684
        %v686 = vld [vmem:[%s596 + $0x90] sm:$0xf]
        %v687 = vsel %vm599, %v486, %v686
        %688 = vst [vmem:[%s596 + $0x90] sm:$0xf] %v687
        %689 = vst.msk [vmem:[%s596 + $0x94] sm:$0xf] %vm185, %v495
        %v690 = vld [vmem:[%s596 + $0x98] sm:$0x1]
        %v691 = vsel %vm605, %v496, %v690
        %692 = vst [vmem:[%s596 + $0x98] sm:$0x1] %v691
        %v693 = vld [vmem:[%s596 + $0x9c] sm:$0xf]
        %v694 = vsel %vm599, %v503, %v693
        %695 = vst [vmem:[%s596 + $0x9c] sm:$0xf] %v694
        %696 = vst.msk [vmem:[%s596 + $0xa0] sm:$0xf] %vm185, %v512
        %v697 = vld [vmem:[%s596 + $0xa4] sm:$0x1]
        %v698 = vsel %vm605, %v513, %v697
        %699 = vst [vmem:[%s596 + $0xa4] sm:$0x1] %v698
        %v700 = vld [vmem:[%s596 + $0xa8] sm:$0xf]
        %v701 = vsel %vm599, %v520, %v700
        %702 = vst [vmem:[%s596 + $0xa8] sm:$0xf] %v701
        %703 = vst.msk [vmem:[%s596 + $0xac] sm:$0xf] %vm185, %v529
        %v704 = vld [vmem:[%s596 + $0xb0] sm:$0x1]
        %v705 = vsel %vm605, %v530, %v704
        %706 = vst [vmem:[%s596 + $0xb0] sm:$0x1] %v705
        %v707 = vld [vmem:[%s596 + $0xb4] sm:$0xf]
        %v708 = vsel %vm599, %v537, %v707
        %709 = vst [vmem:[%s596 + $0xb4] sm:$0xf] %v708
        %710 = vst.msk [vmem:[%s596 + $0xb8] sm:$0xf] %vm185, %v546
        %v711 = vld [vmem:[%s596 + $0xbc] sm:$0x1]
        %v712 = vsel %vm605, %v547, %v711
        %713 = vst [vmem:[%s596 + $0xbc] sm:$0x1] %v712
        %v714 = vld [vmem:[#allocation2] sm:$0xf]
        %v715 = vld [vmem:[#allocation2 + $0x4] sm:$0xf]
        %v716 = vld [vmem:[#allocation2 + $0xc] sm:$0xf]
        %v717 = vld [vmem:[#allocation2 + $0x10] sm:$0xf]
        %v718 = vld [vmem:[#allocation2 + $0x18] sm:$0xf]
        %v719 = vld [vmem:[#allocation2 + $0x1c] sm:$0xf]
        %v720 = vld [vmem:[#allocation2 + $0x24] sm:$0xf]
        %v721 = vld [vmem:[#allocation2 + $0x28] sm:$0xf]
        %v722 = vld [vmem:[#allocation2 + $0x30] sm:$0xf]
        %v723 = vld [vmem:[#allocation2 + $0x34] sm:$0xf]
        %v724 = vld [vmem:[#allocation2 + $0x3c] sm:$0xf]
        %v725 = vld [vmem:[#allocation2 + $0x40] sm:$0xf]
        %v726 = vld [vmem:[#allocation2 + $0x48] sm:$0xf]
        %v727 = vld [vmem:[#allocation2 + $0x4c] sm:$0xf]
        %v728 = vld [vmem:[#allocation2 + $0x54] sm:$0xf]
        %v729 = vld [vmem:[#allocation2 + $0x58] sm:$0xf]
        %v730 = vld [vmem:[#allocation2 + $0x60] sm:$0xf]
        %v731 = vld [vmem:[#allocation2 + $0x64] sm:$0xf]
        %v732 = vld [vmem:[#allocation2 + $0x6c] sm:$0xf]
        %v733 = vld [vmem:[#allocation2 + $0x70] sm:$0xf]
        %v734 = vld [vmem:[#allocation2 + $0x78] sm:$0xf]
        %v735 = vld [vmem:[#allocation2 + $0x7c] sm:$0xf]
        %v736 = vld [vmem:[#allocation2 + $0x84] sm:$0xf]
        %v737 = vld [vmem:[#allocation2 + $0x88] sm:$0xf]
        %v738 = vld [vmem:[#allocation2 + $0x90] sm:$0xf]
        %v739 = vld [vmem:[#allocation2 + $0x94] sm:$0xf]
        %v740 = vld [vmem:[#allocation2 + $0x9c] sm:$0xf]
        %v741 = vld [vmem:[#allocation2 + $0xa0] sm:$0xf]
        %v742 = vld [vmem:[#allocation2 + $0xa8] sm:$0xf]
        %v743 = vld [vmem:[#allocation2 + $0xac] sm:$0xf]
        %v744 = vld [vmem:[#allocation2 + $0xb4] sm:$0xf]
        %v745 = vld [vmem:[#allocation2 + $0xb8] sm:$0xf]
        %v778 = vunpack.c.l.b16 %v714
        %v779 = vunpack.c.l.b16 %v715
        %v780 = vunpack.c.l.b16 %v716
        %v781 = vunpack.c.l.b16 %v717
        %v782 = vunpack.c.l.b16 %v718
        %v783 = vunpack.c.l.b16 %v719
        %v784 = vunpack.c.l.b16 %v720
        %v785 = vunpack.c.l.b16 %v721
        %v786 = vunpack.c.l.b16 %v722
        %v787 = vunpack.c.l.b16 %v723
        %v788 = vunpack.c.l.b16 %v724
        %v789 = vunpack.c.l.b16 %v725
        %v790 = vunpack.c.l.b16 %v726
        %v791 = vunpack.c.l.b16 %v727
        %v792 = vunpack.c.l.b16 %v728
        %v793 = vunpack.c.l.b16 %v729
        %v794 = vunpack.c.l.b16 %v730
        %v795 = vunpack.c.l.b16 %v731
        %v796 = vunpack.c.l.b16 %v732
        %v797 = vunpack.c.l.b16 %v733
        %v798 = vunpack.c.l.b16 %v734
        %v799 = vunpack.c.l.b16 %v735
        %v800 = vunpack.c.l.b16 %v736
        %v801 = vunpack.c.l.b16 %v737
        %v802 = vunpack.c.l.b16 %v738
        %v803 = vunpack.c.l.b16 %v739
        %v804 = vunpack.c.l.b16 %v740
        %v805 = vunpack.c.l.b16 %v741
        %v806 = vunpack.c.l.b16 %v742
        %v807 = vunpack.c.l.b16 %v743
        %v808 = vunpack.c.l.b16 %v744
        %v809 = vunpack.c.l.b16 %v745
        %v810 = vpack.c.b16 %v779, %v778
        %v811 = vpack.c.b16 %v781, %v780
        %v812 = vpack.c.b16 %v783, %v782
        %v813 = vpack.c.b16 %v785, %v784
        %v814 = vpack.c.b16 %v787, %v786
        %v815 = vpack.c.b16 %v789, %v788
        %v816 = vpack.c.b16 %v791, %v790
        %v817 = vpack.c.b16 %v793, %v792
        %v818 = vpack.c.b16 %v795, %v794
        %v819 = vpack.c.b16 %v797, %v796
        %v820 = vpack.c.b16 %v799, %v798
        %v821 = vpack.c.b16 %v801, %v800
        %v822 = vpack.c.b16 %v803, %v802
        %v823 = vpack.c.b16 %v805, %v804
        %v824 = vpack.c.b16 %v807, %v806
        %v825 = vpack.c.b16 %v809, %v808
        %vm842 = vcmask 31744
        %843 = vst.msk [vmem:[#allocation3] sm:$0xff] %vm842, %v810
        %844 = vst.msk [vmem:[#allocation3 + $0x8] sm:$0xff] %vm842, %v811
        %845 = vst.msk [vmem:[#allocation3 + $0x10] sm:$0xff] %vm842, %v812
        %846 = vst.msk [vmem:[#allocation3 + $0x18] sm:$0xff] %vm842, %v813
        %847 = vst.msk [vmem:[#allocation3 + $0x20] sm:$0xff] %vm842, %v814
        %848 = vst.msk [vmem:[#allocation3 + $0x28] sm:$0xff] %vm842, %v815
        %849 = vst.msk [vmem:[#allocation3 + $0x30] sm:$0xff] %vm842, %v816
        %850 = vst.msk [vmem:[#allocation3 + $0x38] sm:$0xff] %vm842, %v817
        %851 = vst.msk [vmem:[#allocation3 + $0x40] sm:$0xff] %vm842, %v818
        %852 = vst.msk [vmem:[#allocation3 + $0x48] sm:$0xff] %vm842, %v819
        %853 = vst.msk [vmem:[#allocation3 + $0x50] sm:$0xff] %vm842, %v820
        %854 = vst.msk [vmem:[#allocation3 + $0x58] sm:$0xff] %vm842, %v821
        %855 = vst.msk [vmem:[#allocation3 + $0x60] sm:$0xff] %vm842, %v822
        %856 = vst.msk [vmem:[#allocation3 + $0x68] sm:$0xff] %vm842, %v823
        %857 = vst.msk [vmem:[#allocation3 + $0x70] sm:$0xff] %vm842, %v824
        %858 = vst.msk [vmem:[#allocation3 + $0x78] sm:$0xff] %vm842, %v825
        %v859 = vld [vmem:[#allocation2] sm:$0xf]
        %v860 = vld [vmem:[#allocation2 + $0x4] sm:$0xf]
        %v861 = vld [vmem:[#allocation2 + $0x8] sm:$0x1]
        %v862 = vld [vmem:[#allocation2 + $0xc] sm:$0xf]
        %v863 = vld [vmem:[#allocation2 + $0x10] sm:$0xf]
        %v864 = vld [vmem:[#allocation2 + $0x14] sm:$0x1]
        %v865 = vld [vmem:[#allocation2 + $0x18] sm:$0xf]
        %v866 = vld [vmem:[#allocation2 + $0x1c] sm:$0xf]
        %v867 = vld [vmem:[#allocation2 + $0x20] sm:$0x1]
        %v868 = vld [vmem:[#allocation2 + $0x24] sm:$0xf]
        %v869 = vld [vmem:[#allocation2 + $0x28] sm:$0xf]
        %v870 = vld [vmem:[#allocation2 + $0x2c] sm:$0x1]
        %v871 = vld [vmem:[#allocation2 + $0x30] sm:$0xf]
        %v872 = vld [vmem:[#allocation2 + $0x34] sm:$0xf]
        %v873 = vld [vmem:[#allocation2 + $0x38] sm:$0x1]
        %v874 = vld [vmem:[#allocation2 + $0x3c] sm:$0xf]
        %v875 = vld [vmem:[#allocation2 + $0x40] sm:$0xf]
        %v876 = vld [vmem:[#allocation2 + $0x44] sm:$0x1]
        %v877 = vld [vmem:[#allocation2 + $0x48] sm:$0xf]
        %v878 = vld [vmem:[#allocation2 + $0x4c] sm:$0xf]
        %v879 = vld [vmem:[#allocation2 + $0x50] sm:$0x1]
        %v880 = vld [vmem:[#allocation2 + $0x54] sm:$0xf]
        %v881 = vld [vmem:[#allocation2 + $0x58] sm:$0xf]
        %v882 = vld [vmem:[#allocation2 + $0x5c] sm:$0x1]
        %v883 = vld [vmem:[#allocation2 + $0x60] sm:$0xf]
        %v884 = vld [vmem:[#allocation2 + $0x64] sm:$0xf]
        %v885 = vld [vmem:[#allocation2 + $0x68] sm:$0x1]
        %v886 = vld [vmem:[#allocation2 + $0x6c] sm:$0xf]
        %v887 = vld [vmem:[#allocation2 + $0x70] sm:$0xf]
        %v888 = vld [vmem:[#allocation2 + $0x74] sm:$0x1]
        %v889 = vld [vmem:[#allocation2 + $0x78] sm:$0xf]
        %v890 = vld [vmem:[#allocation2 + $0x7c] sm:$0xf]
        %v891 = vld [vmem:[#allocation2 + $0x80] sm:$0x1]
        %v892 = vld [vmem:[#allocation2 + $0x84] sm:$0xf]
        %v893 = vld [vmem:[#allocation2 + $0x88] sm:$0xf]
        %v894 = vld [vmem:[#allocation2 + $0x8c] sm:$0x1]
        %v895 = vld [vmem:[#allocation2 + $0x90] sm:$0xf]
        %v896 = vld [vmem:[#allocation2 + $0x94] sm:$0xf]
        %v897 = vld [vmem:[#allocation2 + $0x98] sm:$0x1]
        %v898 = vld [vmem:[#allocation2 + $0x9c] sm:$0xf]
        %v899 = vld [vmem:[#allocation2 + $0xa0] sm:$0xf]
        %v900 = vld [vmem:[#allocation2 + $0xa4] sm:$0x1]
        %v901 = vld [vmem:[#allocation2 + $0xa8] sm:$0xf]
        %v902 = vld [vmem:[#allocation2 + $0xac] sm:$0xf]
        %v903 = vld [vmem:[#allocation2 + $0xb0] sm:$0x1]
        %v904 = vld [vmem:[#allocation2 + $0xb4] sm:$0xf]
        %v905 = vld [vmem:[#allocation2 + $0xb8] sm:$0xf]
        %v906 = vld [vmem:[#allocation2 + $0xbc] sm:$0x1]
        %v955 = vunpack.c.l.b16 %v859
        %v956 = vunpack.c.l.b16 %v860
        %v957 = vunpack.c.l.b16 %v861
        %v958 = vunpack.c.l.b16 %v862
        %v959 = vunpack.c.l.b16 %v863
        %v960 = vunpack.c.l.b16 %v864
        %v961 = vunpack.c.l.b16 %v865
        %v962 = vunpack.c.l.b16 %v866
        %v963 = vunpack.c.l.b16 %v867
        %v964 = vunpack.c.l.b16 %v868
        %v965 = vunpack.c.l.b16 %v869
        %v966 = vunpack.c.l.b16 %v870
        %v967 = vunpack.c.l.b16 %v871
        %v968 = vunpack.c.l.b16 %v872
        %v969 = vunpack.c.l.b16 %v873
        %v970 = vunpack.c.l.b16 %v874
        %v971 = vunpack.c.l.b16 %v875
        %v972 = vunpack.c.l.b16 %v876
        %v973 = vunpack.c.l.b16 %v877
        %v974 = vunpack.c.l.b16 %v878
        %v975 = vunpack.c.l.b16 %v879
        %v976 = vunpack.c.l.b16 %v880
        %v977 = vunpack.c.l.b16 %v881
        %v978 = vunpack.c.l.b16 %v882
        %v979 = vunpack.c.l.b16 %v883
        %v980 = vunpack.c.l.b16 %v884
        %v981 = vunpack.c.l.b16 %v885
        %v982 = vunpack.c.l.b16 %v886
        %v983 = vunpack.c.l.b16 %v887
        %v984 = vunpack.c.l.b16 %v888
        %v985 = vunpack.c.l.b16 %v889
        %v986 = vunpack.c.l.b16 %v890
        %v987 = vunpack.c.l.b16 %v891
        %v988 = vunpack.c.l.b16 %v892
        %v989 = vunpack.c.l.b16 %v893
        %v990 = vunpack.c.l.b16 %v894
        %v991 = vunpack.c.l.b16 %v895
        %v992 = vunpack.c.l.b16 %v896
        %v993 = vunpack.c.l.b16 %v897
        %v994 = vunpack.c.l.b16 %v898
        %v995 = vunpack.c.l.b16 %v899
        %v996 = vunpack.c.l.b16 %v900
        %v997 = vunpack.c.l.b16 %v901
        %v998 = vunpack.c.l.b16 %v902
        %v999 = vunpack.c.l.b16 %v903
        %v1000 = vunpack.c.l.b16 %v904
        %v1001 = vunpack.c.l.b16 %v905
        %v1002 = vunpack.c.l.b16 %v906
        %v1003 = vpack.c.b16 %v956, %v955
        %v1004 = vpack.c.b16 %v957, %v957
        %v1005 = vpack.c.b16 %v959, %v958
        %v1006 = vpack.c.b16 %v960, %v960
        %v1007 = vpack.c.b16 %v962, %v961
        %v1008 = vpack.c.b16 %v963, %v963
        %v1009 = vpack.c.b16 %v965, %v964
        %v1010 = vpack.c.b16 %v966, %v966
        %v1011 = vpack.c.b16 %v968, %v967
        %v1012 = vpack.c.b16 %v969, %v969
        %v1013 = vpack.c.b16 %v971, %v970
        %v1014 = vpack.c.b16 %v972, %v972
        %v1015 = vpack.c.b16 %v974, %v973
        %v1016 = vpack.c.b16 %v975, %v975
        %v1017 = vpack.c.b16 %v977, %v976
        %v1018 = vpack.c.b16 %v978, %v978
        %v1019 = vpack.c.b16 %v980, %v979
        %v1020 = vpack.c.b16 %v981, %v981
        %v1021 = vpack.c.b16 %v983, %v982
        %v1022 = vpack.c.b16 %v984, %v984
        %v1023 = vpack.c.b16 %v986, %v985
        %v1024 = vpack.c.b16 %v987, %v987
        %v1025 = vpack.c.b16 %v989, %v988
        %v1026 = vpack.c.b16 %v990, %v990
        %v1027 = vpack.c.b16 %v992, %v991
        %v1028 = vpack.c.b16 %v993, %v993
        %v1029 = vpack.c.b16 %v995, %v994
        %v1030 = vpack.c.b16 %v996, %v996
        %v1031 = vpack.c.b16 %v998, %v997
        %v1032 = vpack.c.b16 %v999, %v999
        %v1033 = vpack.c.b16 %v1001, %v1000
        %v1034 = vpack.c.b16 %v1002, %v1002
        %vm1035 = vsmask.f32 7424
        %v1037 = vshrl.u32 %v1003, 16
        %v1039 = vshll.u32 %v1003, 16
        %v1041 = vrot.slane %v1039, 1
        %v1042 = vor.u32 %v1037, %v1041
        %v1044 = vshll.u32 %v1004, 16
        %v1046 = vrot.slane %v1044, 1
        %v1047 = vsel %vm1035, %v1042, %v1046
        %v1049 = vshrl.u32 %v1005, 16
        %v1051 = vshll.u32 %v1005, 16
        %v1053 = vrot.slane %v1051, 1
        %v1054 = vor.u32 %v1049, %v1053
        %v1056 = vshll.u32 %v1006, 16
        %v1058 = vrot.slane %v1056, 1
        %v1059 = vsel %vm1035, %v1054, %v1058
        %v1061 = vshrl.u32 %v1007, 16
        %v1063 = vshll.u32 %v1007, 16
        %v1065 = vrot.slane %v1063, 1
        %v1066 = vor.u32 %v1061, %v1065
        %v1068 = vshll.u32 %v1008, 16
        %v1070 = vrot.slane %v1068, 1
        %v1071 = vsel %vm1035, %v1066, %v1070
        %v1073 = vshrl.u32 %v1009, 16
        %v1075 = vshll.u32 %v1009, 16
        %v1077 = vrot.slane %v1075, 1
        %v1078 = vor.u32 %v1073, %v1077
        %v1080 = vshll.u32 %v1010, 16
        %v1082 = vrot.slane %v1080, 1
        %v1083 = vsel %vm1035, %v1078, %v1082
        %v1085 = vshrl.u32 %v1011, 16
        %v1087 = vshll.u32 %v1011, 16
        %v1089 = vrot.slane %v1087, 1
        %v1090 = vor.u32 %v1085, %v1089
        %v1092 = vshll.u32 %v1012, 16
        %v1094 = vrot.slane %v1092, 1
        %v1095 = vsel %vm1035, %v1090, %v1094
        %v1097 = vshrl.u32 %v1013, 16
        %v1099 = vshll.u32 %v1013, 16
        %v1101 = vrot.slane %v1099, 1
        %v1102 = vor.u32 %v1097, %v1101
        %v1104 = vshll.u32 %v1014, 16
        %v1106 = vrot.slane %v1104, 1
        %v1107 = vsel %vm1035, %v1102, %v1106
        %v1109 = vshrl.u32 %v1015, 16
        %v1111 = vshll.u32 %v1015, 16
        %v1113 = vrot.slane %v1111, 1
        %v1114 = vor.u32 %v1109, %v1113
        %v1116 = vshll.u32 %v1016, 16
        %v1118 = vrot.slane %v1116, 1
        %v1119 = vsel %vm1035, %v1114, %v1118
        %v1121 = vshrl.u32 %v1017, 16
        %v1123 = vshll.u32 %v1017, 16
        %v1125 = vrot.slane %v1123, 1
        %v1126 = vor.u32 %v1121, %v1125
        %v1128 = vshll.u32 %v1018, 16
        %v1130 = vrot.slane %v1128, 1
        %v1131 = vsel %vm1035, %v1126, %v1130
        %v1133 = vshrl.u32 %v1019, 16
        %v1135 = vshll.u32 %v1019, 16
        %v1137 = vrot.slane %v1135, 1
        %v1138 = vor.u32 %v1133, %v1137
        %v1140 = vshll.u32 %v1020, 16
        %v1142 = vrot.slane %v1140, 1
        %v1143 = vsel %vm1035, %v1138, %v1142
        %v1145 = vshrl.u32 %v1021, 16
        %v1147 = vshll.u32 %v1021, 16
        %v1149 = vrot.slane %v1147, 1
        %v1150 = vor.u32 %v1145, %v1149
        %v1152 = vshll.u32 %v1022, 16
        %v1154 = vrot.slane %v1152, 1
        %v1155 = vsel %vm1035, %v1150, %v1154
        %v1157 = vshrl.u32 %v1023, 16
        %v1159 = vshll.u32 %v1023, 16
        %v1161 = vrot.slane %v1159, 1
        %v1162 = vor.u32 %v1157, %v1161
        %v1164 = vshll.u32 %v1024, 16
        %v1166 = vrot.slane %v1164, 1
        %v1167 = vsel %vm1035, %v1162, %v1166
        %v1169 = vshrl.u32 %v1025, 16
        %v1171 = vshll.u32 %v1025, 16
        %v1173 = vrot.slane %v1171, 1
        %v1174 = vor.u32 %v1169, %v1173
        %v1176 = vshll.u32 %v1026, 16
        %v1178 = vrot.slane %v1176, 1
        %v1179 = vsel %vm1035, %v1174, %v1178
        %v1181 = vshrl.u32 %v1027, 16
        %v1183 = vshll.u32 %v1027, 16
        %v1185 = vrot.slane %v1183, 1
        %v1186 = vor.u32 %v1181, %v1185
        %v1188 = vshll.u32 %v1028, 16
        %v1190 = vrot.slane %v1188, 1
        %v1191 = vsel %vm1035, %v1186, %v1190
        %v1193 = vshrl.u32 %v1029, 16
        %v1195 = vshll.u32 %v1029, 16
        %v1197 = vrot.slane %v1195, 1
        %v1198 = vor.u32 %v1193, %v1197
        %v1200 = vshll.u32 %v1030, 16
        %v1202 = vrot.slane %v1200, 1
        %v1203 = vsel %vm1035, %v1198, %v1202
        %v1205 = vshrl.u32 %v1031, 16
        %v1207 = vshll.u32 %v1031, 16
        %v1209 = vrot.slane %v1207, 1
        %v1210 = vor.u32 %v1205, %v1209
        %v1212 = vshll.u32 %v1032, 16
        %v1214 = vrot.slane %v1212, 1
        %v1215 = vsel %vm1035, %v1210, %v1214
        %v1217 = vshrl.u32 %v1033, 16
        %v1219 = vshll.u32 %v1033, 16
        %v1221 = vrot.slane %v1219, 1
        %v1222 = vor.u32 %v1217, %v1221
        %v1224 = vshll.u32 %v1034, 16
        %v1226 = vrot.slane %v1224, 1
        %v1227 = vsel %vm1035, %v1222, %v1226
        %1228 = vrot.lane.b32.xlu0 %v1047, 4
        %v1229 = vpop.permute.xlu0 %1228
        %1230 = vrot.lane.b32.xlu0 %v1059, 4
        %v1231 = vpop.permute.xlu0 %1230
        %1232 = vrot.lane.b32.xlu0 %v1071, 4
        %v1233 = vpop.permute.xlu0 %1232
        %1234 = vrot.lane.b32.xlu0 %v1083, 4
        %v1235 = vpop.permute.xlu0 %1234
        %1236 = vrot.lane.b32.xlu0 %v1095, 4
        %v1237 = vpop.permute.xlu0 %1236
        %1238 = vrot.lane.b32.xlu0 %v1107, 4
        %v1239 = vpop.permute.xlu0 %1238
        %1240 = vrot.lane.b32.xlu0 %v1119, 4
        %v1241 = vpop.permute.xlu0 %1240
        %1242 = vrot.lane.b32.xlu0 %v1131, 4
        %v1243 = vpop.permute.xlu0 %1242
        %1244 = vrot.lane.b32.xlu0 %v1143, 4
        %v1245 = vpop.permute.xlu0 %1244
        %1246 = vrot.lane.b32.xlu0 %v1155, 4
        %v1247 = vpop.permute.xlu0 %1246
        %1248 = vrot.lane.b32.xlu0 %v1167, 4
        %v1249 = vpop.permute.xlu0 %1248
        %1250 = vrot.lane.b32.xlu0 %v1179, 4
        %v1251 = vpop.permute.xlu0 %1250
        %1252 = vrot.lane.b32.xlu0 %v1191, 4
        %v1253 = vpop.permute.xlu0 %1252
        %1254 = vrot.lane.b32.xlu0 %v1203, 4
        %v1255 = vpop.permute.xlu0 %1254
        %1256 = vrot.lane.b32.xlu0 %v1215, 4
        %v1257 = vpop.permute.xlu0 %1256
        %1258 = vrot.lane.b32.xlu0 %v1227, 4
        %v1259 = vpop.permute.xlu0 %1258
        %vm1276 = vcmask 64544
        %1277 = vst.msk [vmem:[#allocation3] sm:$0xff] %vm1276, %v1229
        %1278 = vst.msk [vmem:[#allocation3 + $0x8] sm:$0xff] %vm1276, %v1231
        %1279 = vst.msk [vmem:[#allocation3 + $0x10] sm:$0xff] %vm1276, %v1233
        %1280 = vst.msk [vmem:[#allocation3 + $0x18] sm:$0xff] %vm1276, %v1235
        %1281 = vst.msk [vmem:[#allocation3 + $0x20] sm:$0xff] %vm1276, %v1237
        %1282 = vst.msk [vmem:[#allocation3 + $0x28] sm:$0xff] %vm1276, %v1239
        %1283 = vst.msk [vmem:[#allocation3 + $0x30] sm:$0xff] %vm1276, %v1241
        %1284 = vst.msk [vmem:[#allocation3 + $0x38] sm:$0xff] %vm1276, %v1243
        %1285 = vst.msk [vmem:[#allocation3 + $0x40] sm:$0xff] %vm1276, %v1245
        %1286 = vst.msk [vmem:[#allocation3 + $0x48] sm:$0xff] %vm1276, %v1247
        %1287 = vst.msk [vmem:[#allocation3 + $0x50] sm:$0xff] %vm1276, %v1249
        %1288 = vst.msk [vmem:[#allocation3 + $0x58] sm:$0xff] %vm1276, %v1251
        %1289 = vst.msk [vmem:[#allocation3 + $0x60] sm:$0xff] %vm1276, %v1253
        %1290 = vst.msk [vmem:[#allocation3 + $0x68] sm:$0xff] %vm1276, %v1255
        %1291 = vst.msk [vmem:[#allocation3 + $0x70] sm:$0xff] %vm1276, %v1257
        %1292 = vst.msk [vmem:[#allocation3 + $0x78] sm:$0xff] %vm1276, %v1259
        %v1293 = vld [vmem:[#allocation2] sm:$0xe]
        %v1294 = vld [vmem:[#allocation2 + $0x4] sm:$0xf]
        %v1295 = vld [vmem:[#allocation2 + $0x8] sm:$0x1]
        %v1296 = vld [vmem:[#allocation2 + $0xc] sm:$0xe]
        %v1297 = vld [vmem:[#allocation2 + $0x10] sm:$0xf]
        %v1298 = vld [vmem:[#allocation2 + $0x14] sm:$0x1]
        %v1299 = vld [vmem:[#allocation2 + $0x18] sm:$0xe]
        %v1300 = vld [vmem:[#allocation2 + $0x1c] sm:$0xf]
        %v1301 = vld [vmem:[#allocation2 + $0x20] sm:$0x1]
        %v1302 = vld [vmem:[#allocation2 + $0x24] sm:$0xe]
        %v1303 = vld [vmem:[#allocation2 + $0x28] sm:$0xf]
        %v1304 = vld [vmem:[#allocation2 + $0x2c] sm:$0x1]
        %v1305 = vld [vmem:[#allocation2 + $0x30] sm:$0xe]
        %v1306 = vld [vmem:[#allocation2 + $0x34] sm:$0xf]
        %v1307 = vld [vmem:[#allocation2 + $0x38] sm:$0x1]
        %v1308 = vld [vmem:[#allocation2 + $0x3c] sm:$0xe]
        %v1309 = vld [vmem:[#allocation2 + $0x40] sm:$0xf]
        %v1310 = vld [vmem:[#allocation2 + $0x44] sm:$0x1]
        %v1311 = vld [vmem:[#allocation2 + $0x48] sm:$0xe]
        %v1312 = vld [vmem:[#allocation2 + $0x4c] sm:$0xf]
        %v1313 = vld [vmem:[#allocation2 + $0x50] sm:$0x1]
        %v1314 = vld [vmem:[#allocation2 + $0x54] sm:$0xe]
        %v1315 = vld [vmem:[#allocation2 + $0x58] sm:$0xf]
        %v1316 = vld [vmem:[#allocation2 + $0x5c] sm:$0x1]
        %v1317 = vld [vmem:[#allocation2 + $0x60] sm:$0xe]
        %v1318 = vld [vmem:[#allocation2 + $0x64] sm:$0xf]
        %v1319 = vld [vmem:[#allocation2 + $0x68] sm:$0x1]
        %v1320 = vld [vmem:[#allocation2 + $0x6c] sm:$0xe]
        %v1321 = vld [vmem:[#allocation2 + $0x70] sm:$0xf]
        %v1322 = vld [vmem:[#allocation2 + $0x74] sm:$0x1]
        %v1323 = vld [vmem:[#allocation2 + $0x78] sm:$0xe]
        %v1324 = vld [vmem:[#allocation2 + $0x7c] sm:$0xf]
        %v1325 = vld [vmem:[#allocation2 + $0x80] sm:$0x1]
        %v1326 = vld [vmem:[#allocation2 + $0x84] sm:$0xe]
        %v1327 = vld [vmem:[#allocation2 + $0x88] sm:$0xf]
        %v1328 = vld [vmem:[#allocation2 + $0x8c] sm:$0x1]
        %v1329 = vld [vmem:[#allocation2 + $0x90] sm:$0xe]
        %v1330 = vld [vmem:[#allocation2 + $0x94] sm:$0xf]
        %v1331 = vld [vmem:[#allocation2 + $0x98] sm:$0x1]
        %v1332 = vld [vmem:[#allocation2 + $0x9c] sm:$0xe]
        %v1333 = vld [vmem:[#allocation2 + $0xa0] sm:$0xf]
        %v1334 = vld [vmem:[#allocation2 + $0xa4] sm:$0x1]
        %v1335 = vld [vmem:[#allocation2 + $0xa8] sm:$0xe]
        %v1336 = vld [vmem:[#allocation2 + $0xac] sm:$0xf]
        %v1337 = vld [vmem:[#allocation2 + $0xb0] sm:$0x1]
        %v1338 = vld [vmem:[#allocation2 + $0xb4] sm:$0xe]
        %v1339 = vld [vmem:[#allocation2 + $0xb8] sm:$0xf]
        %v1340 = vld [vmem:[#allocation2 + $0xbc] sm:$0x1]
        %v1389 = vunpack.c.l.b16 %v1293
        %v1390 = vunpack.c.l.b16 %v1294
        %v1391 = vunpack.c.l.b16 %v1295
        %v1392 = vunpack.c.l.b16 %v1296
        %v1393 = vunpack.c.l.b16 %v1297
        %v1394 = vunpack.c.l.b16 %v1298
        %v1395 = vunpack.c.l.b16 %v1299
        %v1396 = vunpack.c.l.b16 %v1300
        %v1397 = vunpack.c.l.b16 %v1301
        %v1398 = vunpack.c.l.b16 %v1302
        %v1399 = vunpack.c.l.b16 %v1303
        %v1400 = vunpack.c.l.b16 %v1304
        %v1401 = vunpack.c.l.b16 %v1305
        %v1402 = vunpack.c.l.b16 %v1306
        %v1403 = vunpack.c.l.b16 %v1307
        %v1404 = vunpack.c.l.b16 %v1308
        %v1405 = vunpack.c.l.b16 %v1309
        %v1406 = vunpack.c.l.b16 %v1310
        %v1407 = vunpack.c.l.b16 %v1311
        %v1408 = vunpack.c.l.b16 %v1312
        %v1409 = vunpack.c.l.b16 %v1313
        %v1410 = vunpack.c.l.b16 %v1314
        %v1411 = vunpack.c.l.b16 %v1315
        %v1412 = vunpack.c.l.b16 %v1316
        %v1413 = vunpack.c.l.b16 %v1317
        %v1414 = vunpack.c.l.b16 %v1318
        %v1415 = vunpack.c.l.b16 %v1319
        %v1416 = vunpack.c.l.b16 %v1320
        %v1417 = vunpack.c.l.b16 %v1321
        %v1418 = vunpack.c.l.b16 %v1322
        %v1419 = vunpack.c.l.b16 %v1323
        %v1420 = vunpack.c.l.b16 %v1324
        %v1421 = vunpack.c.l.b16 %v1325
        %v1422 = vunpack.c.l.b16 %v1326
        %v1423 = vunpack.c.l.b16 %v1327
        %v1424 = vunpack.c.l.b16 %v1328
        %v1425 = vunpack.c.l.b16 %v1329
        %v1426 = vunpack.c.l.b16 %v1330
        %v1427 = vunpack.c.l.b16 %v1331
        %v1428 = vunpack.c.l.b16 %v1332
        %v1429 = vunpack.c.l.b16 %v1333
        %v1430 = vunpack.c.l.b16 %v1334
        %v1431 = vunpack.c.l.b16 %v1335
        %v1432 = vunpack.c.l.b16 %v1336
        %v1433 = vunpack.c.l.b16 %v1337
        %v1434 = vunpack.c.l.b16 %v1338
        %v1435 = vunpack.c.l.b16 %v1339
        %v1436 = vunpack.c.l.b16 %v1340
        %v1437 = vpack.c.b16 %v1390, %v1389
        %v1438 = vpack.c.b16 %v1391, %v1391
        %v1439 = vpack.c.b16 %v1393, %v1392
        %v1440 = vpack.c.b16 %v1394, %v1394
        %v1441 = vpack.c.b16 %v1396, %v1395
        %v1442 = vpack.c.b16 %v1397, %v1397
        %v1443 = vpack.c.b16 %v1399, %v1398
        %v1444 = vpack.c.b16 %v1400, %v1400
        %v1445 = vpack.c.b16 %v1402, %v1401
        %v1446 = vpack.c.b16 %v1403, %v1403
        %v1447 = vpack.c.b16 %v1405, %v1404
        %v1448 = vpack.c.b16 %v1406, %v1406
        %v1449 = vpack.c.b16 %v1408, %v1407
        %v1450 = vpack.c.b16 %v1409, %v1409
        %v1451 = vpack.c.b16 %v1411, %v1410
        %v1452 = vpack.c.b16 %v1412, %v1412
        %v1453 = vpack.c.b16 %v1414, %v1413
        %v1454 = vpack.c.b16 %v1415, %v1415
        %v1455 = vpack.c.b16 %v1417, %v1416
        %v1456 = vpack.c.b16 %v1418, %v1418
        %v1457 = vpack.c.b16 %v1420, %v1419
        %v1458 = vpack.c.b16 %v1421, %v1421
        %v1459 = vpack.c.b16 %v1423, %v1422
        %v1460 = vpack.c.b16 %v1424, %v1424
        %v1461 = vpack.c.b16 %v1426, %v1425
        %v1462 = vpack.c.b16 %v1427, %v1427
        %v1463 = vpack.c.b16 %v1429, %v1428
        %v1464 = vpack.c.b16 %v1430, %v1430
        %v1465 = vpack.c.b16 %v1432, %v1431
        %v1466 = vpack.c.b16 %v1433, %v1433
        %v1467 = vpack.c.b16 %v1435, %v1434
        %v1468 = vpack.c.b16 %v1436, %v1436
        %vm1469 = vcmask 1046528
        %v1470 = vrot.slane %v1437, 1
        %v1471 = vrot.slane %v1438, 1
        %v1472 = vsel %vm1469, %v1470, %v1471
        %v1473 = vrot.slane %v1439, 1
        %v1474 = vrot.slane %v1440, 1
        %v1475 = vsel %vm1469, %v1473, %v1474
        %v1476 = vrot.slane %v1441, 1
        %v1477 = vrot.slane %v1442, 1
        %v1478 = vsel %vm1469, %v1476, %v1477
        %v1479 = vrot.slane %v1443, 1
        %v1480 = vrot.slane %v1444, 1
        %v1481 = vsel %vm1469, %v1479, %v1480
        %v1482 = vrot.slane %v1445, 1
        %v1483 = vrot.slane %v1446, 1
        %v1484 = vsel %vm1469, %v1482, %v1483
        %v1485 = vrot.slane %v1447, 1
        %v1486 = vrot.slane %v1448, 1
        %v1487 = vsel %vm1469, %v1485, %v1486
        %v1488 = vrot.slane %v1449, 1
        %v1489 = vrot.slane %v1450, 1
        %v1490 = vsel %vm1469, %v1488, %v1489
        %v1491 = vrot.slane %v1451, 1
        %v1492 = vrot.slane %v1452, 1
        %v1493 = vsel %vm1469, %v1491, %v1492
        %v1494 = vrot.slane %v1453, 1
        %v1495 = vrot.slane %v1454, 1
        %v1496 = vsel %vm1469, %v1494, %v1495
        %v1497 = vrot.slane %v1455, 1
        %v1498 = vrot.slane %v1456, 1
        %v1499 = vsel %vm1469, %v1497, %v1498
        %v1500 = vrot.slane %v1457, 1
        %v1501 = vrot.slane %v1458, 1
        %v1502 = vsel %vm1469, %v1500, %v1501
        %v1503 = vrot.slane %v1459, 1
        %v1504 = vrot.slane %v1460, 1
        %v1505 = vsel %vm1469, %v1503, %v1504
        %v1506 = vrot.slane %v1461, 1
        %v1507 = vrot.slane %v1462, 1
        %v1508 = vsel %vm1469, %v1506, %v1507
        %v1509 = vrot.slane %v1463, 1
        %v1510 = vrot.slane %v1464, 1
        %v1511 = vsel %vm1469, %v1509, %v1510
        %v1512 = vrot.slane %v1465, 1
        %v1513 = vrot.slane %v1466, 1
        %v1514 = vsel %vm1469, %v1512, %v1513
        %v1515 = vrot.slane %v1467, 1
        %v1516 = vrot.slane %v1468, 1
        %v1517 = vsel %vm1469, %v1515, %v1516
        %1518 = vrot.lane.b32.xlu0 %v1472, 8
        %v1519 = vpop.permute.xlu0 %1518
        %1520 = vrot.lane.b32.xlu0 %v1475, 8
        %v1521 = vpop.permute.xlu0 %1520
        %1522 = vrot.lane.b32.xlu0 %v1478, 8
        %v1523 = vpop.permute.xlu0 %1522
        %1524 = vrot.lane.b32.xlu0 %v1481, 8
        %v1525 = vpop.permute.xlu0 %1524
        %1526 = vrot.lane.b32.xlu0 %v1484, 8
        %v1527 = vpop.permute.xlu0 %1526
        %1528 = vrot.lane.b32.xlu0 %v1487, 8
        %v1529 = vpop.permute.xlu0 %1528
        %1530 = vrot.lane.b32.xlu0 %v1490, 8
        %v1531 = vpop.permute.xlu0 %1530
        %1532 = vrot.lane.b32.xlu0 %v1493, 8
        %v1533 = vpop.permute.xlu0 %1532
        %1534 = vrot.lane.b32.xlu0 %v1496, 8
        %v1535 = vpop.permute.xlu0 %1534
        %1536 = vrot.lane.b32.xlu0 %v1499, 8
        %v1537 = vpop.permute.xlu0 %1536
        %1538 = vrot.lane.b32.xlu0 %v1502, 8
        %v1539 = vpop.permute.xlu0 %1538
        %1540 = vrot.lane.b32.xlu0 %v1505, 8
        %v1541 = vpop.permute.xlu0 %1540
        %1542 = vrot.lane.b32.xlu0 %v1508, 8
        %v1543 = vpop.permute.xlu0 %1542
        %1544 = vrot.lane.b32.xlu0 %v1511, 8
        %v1545 = vpop.permute.xlu0 %1544
        %1546 = vrot.lane.b32.xlu0 %v1514, 8
        %v1547 = vpop.permute.xlu0 %1546
        %1548 = vrot.lane.b32.xlu0 %v1517, 8
        %v1549 = vpop.permute.xlu0 %1548
        %vm1566 = vcmask 97344
        %1567 = vst.msk [vmem:[#allocation3] sm:$0xff] %vm1566, %v1519
        %1568 = vst.msk [vmem:[#allocation3 + $0x8] sm:$0xff] %vm1566, %v1521
        %1569 = vst.msk [vmem:[#allocation3 + $0x10] sm:$0xff] %vm1566, %v1523
        %1570 = vst.msk [vmem:[#allocation3 + $0x18] sm:$0xff] %vm1566, %v1525
        %1571 = vst.msk [vmem:[#allocation3 + $0x20] sm:$0xff] %vm1566, %v1527
        %1572 = vst.msk [vmem:[#allocation3 + $0x28] sm:$0xff] %vm1566, %v1529
        %1573 = vst.msk [vmem:[#allocation3 + $0x30] sm:$0xff] %vm1566, %v1531
        %1574 = vst.msk [vmem:[#allocation3 + $0x38] sm:$0xff] %vm1566, %v1533
        %1575 = vst.msk [vmem:[#allocation3 + $0x40] sm:$0xff] %vm1566, %v1535
        %1576 = vst.msk [vmem:[#allocation3 + $0x48] sm:$0xff] %vm1566, %v1537
        %1577 = vst.msk [vmem:[#allocation3 + $0x50] sm:$0xff] %vm1566, %v1539
        %1578 = vst.msk [vmem:[#allocation3 + $0x58] sm:$0xff] %vm1566, %v1541
        %1579 = vst.msk [vmem:[#allocation3 + $0x60] sm:$0xff] %vm1566, %v1543
        %1580 = vst.msk [vmem:[#allocation3 + $0x68] sm:$0xff] %vm1566, %v1545
        %1581 = vst.msk [vmem:[#allocation3 + $0x70] sm:$0xff] %vm1566, %v1547
        %1582 = vst.msk [vmem:[#allocation3 + $0x78] sm:$0xff] %vm1566, %v1549
        %v1583 = vld [vmem:[%s596] sm:$0xf]
        %v1584 = vld [vmem:[%s596 + $0x4] sm:$0xf]
        %v1585 = vld [vmem:[%s596 + $0xc] sm:$0xf]
        %v1586 = vld [vmem:[%s596 + $0x10] sm:$0xf]
        %v1587 = vld [vmem:[%s596 + $0x18] sm:$0xf]
        %v1588 = vld [vmem:[%s596 + $0x1c] sm:$0xf]
        %v1589 = vld [vmem:[%s596 + $0x24] sm:$0xf]
        %v1590 = vld [vmem:[%s596 + $0x28] sm:$0xf]
        %v1591 = vld [vmem:[%s596 + $0x30] sm:$0xf]
        %v1592 = vld [vmem:[%s596 + $0x34] sm:$0xf]
        %v1593 = vld [vmem:[%s596 + $0x3c] sm:$0xf]
        %v1594 = vld [vmem:[%s596 + $0x40] sm:$0xf]
        %v1595 = vld [vmem:[%s596 + $0x48] sm:$0xf]
        %v1596 = vld [vmem:[%s596 + $0x4c] sm:$0xf]
        %v1597 = vld [vmem:[%s596 + $0x54] sm:$0xf]
        %v1598 = vld [vmem:[%s596 + $0x58] sm:$0xf]
        %v1599 = vld [vmem:[%s596 + $0x60] sm:$0xf]
        %v1600 = vld [vmem:[%s596 + $0x64] sm:$0xf]
        %v1601 = vld [vmem:[%s596 + $0x6c] sm:$0xf]
        %v1602 = vld [vmem:[%s596 + $0x70] sm:$0xf]
        %v1603 = vld [vmem:[%s596 + $0x78] sm:$0xf]
        %v1604 = vld [vmem:[%s596 + $0x7c] sm:$0xf]
        %v1605 = vld [vmem:[%s596 + $0x84] sm:$0xf]
        %v1606 = vld [vmem:[%s596 + $0x88] sm:$0xf]
        %v1607 = vld [vmem:[%s596 + $0x90] sm:$0xf]
        %v1608 = vld [vmem:[%s596 + $0x94] sm:$0xf]
        %v1609 = vld [vmem:[%s596 + $0x9c] sm:$0xf]
        %v1610 = vld [vmem:[%s596 + $0xa0] sm:$0xf]
        %v1611 = vld [vmem:[%s596 + $0xa8] sm:$0xf]
        %v1612 = vld [vmem:[%s596 + $0xac] sm:$0xf]
        %v1613 = vld [vmem:[%s596 + $0xb4] sm:$0xf]
        %v1614 = vld [vmem:[%s596 + $0xb8] sm:$0xf]
        %v1647 = vunpack.c.l.b16 %v1583
        %v1648 = vunpack.c.l.b16 %v1584
        %v1649 = vunpack.c.l.b16 %v1585
        %v1650 = vunpack.c.l.b16 %v1586
        %v1651 = vunpack.c.l.b16 %v1587
        %v1652 = vunpack.c.l.b16 %v1588
        %v1653 = vunpack.c.l.b16 %v1589
        %v1654 = vunpack.c.l.b16 %v1590
        %v1655 = vunpack.c.l.b16 %v1591
        %v1656 = vunpack.c.l.b16 %v1592
        %v1657 = vunpack.c.l.b16 %v1593
        %v1658 = vunpack.c.l.b16 %v1594
        %v1659 = vunpack.c.l.b16 %v1595
        %v1660 = vunpack.c.l.b16 %v1596
        %v1661 = vunpack.c.l.b16 %v1597
        %v1662 = vunpack.c.l.b16 %v1598
        %v1663 = vunpack.c.l.b16 %v1599
        %v1664 = vunpack.c.l.b16 %v1600
        %v1665 = vunpack.c.l.b16 %v1601
        %v1666 = vunpack.c.l.b16 %v1602
        %v1667 = vunpack.c.l.b16 %v1603
        %v1668 = vunpack.c.l.b16 %v1604
        %v1669 = vunpack.c.l.b16 %v1605
        %v1670 = vunpack.c.l.b16 %v1606
        %v1671 = vunpack.c.l.b16 %v1607
        %v1672 = vunpack.c.l.b16 %v1608
        %v1673 = vunpack.c.l.b16 %v1609
        %v1674 = vunpack.c.l.b16 %v1610
        %v1675 = vunpack.c.l.b16 %v1611
        %v1676 = vunpack.c.l.b16 %v1612
        %v1677 = vunpack.c.l.b16 %v1613
        %v1678 = vunpack.c.l.b16 %v1614
        %v1679 = vpack.c.b16 %v1648, %v1647
        %v1680 = vpack.c.b16 %v1650, %v1649
        %v1681 = vpack.c.b16 %v1652, %v1651
        %v1682 = vpack.c.b16 %v1654, %v1653
        %v1683 = vpack.c.b16 %v1656, %v1655
        %v1684 = vpack.c.b16 %v1658, %v1657
        %v1685 = vpack.c.b16 %v1660, %v1659
        %v1686 = vpack.c.b16 %v1662, %v1661
        %v1687 = vpack.c.b16 %v1664, %v1663
        %v1688 = vpack.c.b16 %v1666, %v1665
        %v1689 = vpack.c.b16 %v1668, %v1667
        %v1690 = vpack.c.b16 %v1670, %v1669
        %v1691 = vpack.c.b16 %v1672, %v1671
        %v1692 = vpack.c.b16 %v1674, %v1673
        %v1693 = vpack.c.b16 %v1676, %v1675
        %v1694 = vpack.c.b16 %v1678, %v1677
        %1695 = vrot.lane.b32.xlu0 %v1679, 12
        %v1696 = vpop.permute.xlu0 %1695
        %1697 = vrot.lane.b32.xlu0 %v1680, 12
        %v1698 = vpop.permute.xlu0 %1697
        %1699 = vrot.lane.b32.xlu0 %v1681, 12
        %v1700 = vpop.permute.xlu0 %1699
        %1701 = vrot.lane.b32.xlu0 %v1682, 12
        %v1702 = vpop.permute.xlu0 %1701
        %1703 = vrot.lane.b32.xlu0 %v1683, 12
        %v1704 = vpop.permute.xlu0 %1703
        %1705 = vrot.lane.b32.xlu0 %v1684, 12
        %v1706 = vpop.permute.xlu0 %1705
        %1707 = vrot.lane.b32.xlu0 %v1685, 12
        %v1708 = vpop.permute.xlu0 %1707
        %1709 = vrot.lane.b32.xlu0 %v1686, 12
        %v1710 = vpop.permute.xlu0 %1709
        %1711 = vrot.lane.b32.xlu0 %v1687, 12
        %v1712 = vpop.permute.xlu0 %1711
        %1713 = vrot.lane.b32.xlu0 %v1688, 12
        %v1714 = vpop.permute.xlu0 %1713
        %1715 = vrot.lane.b32.xlu0 %v1689, 12
        %v1716 = vpop.permute.xlu0 %1715
        %1717 = vrot.lane.b32.xlu0 %v1690, 12
        %v1718 = vpop.permute.xlu0 %1717
        %1719 = vrot.lane.b32.xlu0 %v1691, 12
        %v1720 = vpop.permute.xlu0 %1719
        %1721 = vrot.lane.b32.xlu0 %v1692, 12
        %v1722 = vpop.permute.xlu0 %1721
        %1723 = vrot.lane.b32.xlu0 %v1693, 12
        %v1724 = vpop.permute.xlu0 %1723
        %1725 = vrot.lane.b32.xlu0 %v1694, 12
        %v1726 = vpop.permute.xlu0 %1725
        %vm1743 = vcmask 130144
        %1744 = vst.msk [vmem:[#allocation3] sm:$0xff] %vm1743, %v1696
        %1745 = vst.msk [vmem:[#allocation3 + $0x8] sm:$0xff] %vm1743, %v1698
        %1746 = vst.msk [vmem:[#allocation3 + $0x10] sm:$0xff] %vm1743, %v1700
        %1747 = vst.msk [vmem:[#allocation3 + $0x18] sm:$0xff] %vm1743, %v1702
        %1748 = vst.msk [vmem:[#allocation3 + $0x20] sm:$0xff] %vm1743, %v1704
        %1749 = vst.msk [vmem:[#allocation3 + $0x28] sm:$0xff] %vm1743, %v1706
        %1750 = vst.msk [vmem:[#allocation3 + $0x30] sm:$0xff] %vm1743, %v1708
        %1751 = vst.msk [vmem:[#allocation3 + $0x38] sm:$0xff] %vm1743, %v1710
        %1752 = vst.msk [vmem:[#allocation3 + $0x40] sm:$0xff] %vm1743, %v1712
        %1753 = vst.msk [vmem:[#allocation3 + $0x48] sm:$0xff] %vm1743, %v1714
        %1754 = vst.msk [vmem:[#allocation3 + $0x50] sm:$0xff] %vm1743, %v1716
        %1755 = vst.msk [vmem:[#allocation3 + $0x58] sm:$0xff] %vm1743, %v1718
        %1756 = vst.msk [vmem:[#allocation3 + $0x60] sm:$0xff] %vm1743, %v1720
        %1757 = vst.msk [vmem:[#allocation3 + $0x68] sm:$0xff] %vm1743, %v1722
        %1758 = vst.msk [vmem:[#allocation3 + $0x70] sm:$0xff] %vm1743, %v1724
        %1759 = vst.msk [vmem:[#allocation3 + $0x78] sm:$0xff] %vm1743, %v1726
        %v1760 = vld [vmem:[%s596] sm:$0xf]
        %v1761 = vld [vmem:[%s596 + $0x4] sm:$0xf]
        %v1762 = vld [vmem:[%s596 + $0x8] sm:$0x1]
        %v1763 = vld [vmem:[%s596 + $0xc] sm:$0xf]
        %v1764 = vld [vmem:[%s596 + $0x10] sm:$0xf]
        %v1765 = vld [vmem:[%s596 + $0x14] sm:$0x1]
        %v1766 = vld [vmem:[%s596 + $0x18] sm:$0xf]
        %v1767 = vld [vmem:[%s596 + $0x1c] sm:$0xf]
        %v1768 = vld [vmem:[%s596 + $0x20] sm:$0x1]
        %v1769 = vld [vmem:[%s596 + $0x24] sm:$0xf]
        %v1770 = vld [vmem:[%s596 + $0x28] sm:$0xf]
        %v1771 = vld [vmem:[%s596 + $0x2c] sm:$0x1]
        %v1772 = vld [vmem:[%s596 + $0x30] sm:$0xf]
        %v1773 = vld [vmem:[%s596 + $0x34] sm:$0xf]
        %v1774 = vld [vmem:[%s596 + $0x38] sm:$0x1]
        %v1775 = vld [vmem:[%s596 + $0x3c] sm:$0xf]
        %v1776 = vld [vmem:[%s596 + $0x40] sm:$0xf]
        %v1777 = vld [vmem:[%s596 + $0x44] sm:$0x1]
        %v1778 = vld [vmem:[%s596 + $0x48] sm:$0xf]
        %v1779 = vld [vmem:[%s596 + $0x4c] sm:$0xf]
        %v1780 = vld [vmem:[%s596 + $0x50] sm:$0x1]
        %v1781 = vld [vmem:[%s596 + $0x54] sm:$0xf]
        %v1782 = vld [vmem:[%s596 + $0x58] sm:$0xf]
        %v1783 = vld [vmem:[%s596 + $0x5c] sm:$0x1]
        %v1784 = vld [vmem:[%s596 + $0x60] sm:$0xf]
        %v1785 = vld [vmem:[%s596 + $0x64] sm:$0xf]
        %v1786 = vld [vmem:[%s596 + $0x68] sm:$0x1]
        %v1787 = vld [vmem:[%s596 + $0x6c] sm:$0xf]
        %v1788 = vld [vmem:[%s596 + $0x70] sm:$0xf]
        %v1789 = vld [vmem:[%s596 + $0x74] sm:$0x1]
        %v1790 = vld [vmem:[%s596 + $0x78] sm:$0xf]
        %v1791 = vld [vmem:[%s596 + $0x7c] sm:$0xf]
        %v1792 = vld [vmem:[%s596 + $0x80] sm:$0x1]
        %v1793 = vld [vmem:[%s596 + $0x84] sm:$0xf]
        %v1794 = vld [vmem:[%s596 + $0x88] sm:$0xf]
        %v1795 = vld [vmem:[%s596 + $0x8c] sm:$0x1]
        %v1796 = vld [vmem:[%s596 + $0x90] sm:$0xf]
        %v1797 = vld [vmem:[%s596 + $0x94] sm:$0xf]
        %v1798 = vld [vmem:[%s596 + $0x98] sm:$0x1]
        %v1799 = vld [vmem:[%s596 + $0x9c] sm:$0xf]
        %v1800 = vld [vmem:[%s596 + $0xa0] sm:$0xf]
        %v1801 = vld [vmem:[%s596 + $0xa4] sm:$0x1]
        %v1802 = vld [vmem:[%s596 + $0xa8] sm:$0xf]
        %v1803 = vld [vmem:[%s596 + $0xac] sm:$0xf]
        %v1804 = vld [vmem:[%s596 + $0xb0] sm:$0x1]
        %v1805 = vld [vmem:[%s596 + $0xb4] sm:$0xf]
        %v1806 = vld [vmem:[%s596 + $0xb8] sm:$0xf]
        %v1807 = vld [vmem:[%s596 + $0xbc] sm:$0x1]
        %v1856 = vunpack.c.l.b16 %v1760
        %v1857 = vunpack.c.l.b16 %v1761
        %v1858 = vunpack.c.l.b16 %v1762
        %v1859 = vunpack.c.l.b16 %v1763
        %v1860 = vunpack.c.l.b16 %v1764
        %v1861 = vunpack.c.l.b16 %v1765
        %v1862 = vunpack.c.l.b16 %v1766
        %v1863 = vunpack.c.l.b16 %v1767
        %v1864 = vunpack.c.l.b16 %v1768
        %v1865 = vunpack.c.l.b16 %v1769
        %v1866 = vunpack.c.l.b16 %v1770
        %v1867 = vunpack.c.l.b16 %v1771
        %v1868 = vunpack.c.l.b16 %v1772
        %v1869 = vunpack.c.l.b16 %v1773
        %v1870 = vunpack.c.l.b16 %v1774
        %v1871 = vunpack.c.l.b16 %v1775
        %v1872 = vunpack.c.l.b16 %v1776
        %v1873 = vunpack.c.l.b16 %v1777
        %v1874 = vunpack.c.l.b16 %v1778
        %v1875 = vunpack.c.l.b16 %v1779
        %v1876 = vunpack.c.l.b16 %v1780
        %v1877 = vunpack.c.l.b16 %v1781
        %v1878 = vunpack.c.l.b16 %v1782
        %v1879 = vunpack.c.l.b16 %v1783
        %v1880 = vunpack.c.l.b16 %v1784
        %v1881 = vunpack.c.l.b16 %v1785
        %v1882 = vunpack.c.l.b16 %v1786
        %v1883 = vunpack.c.l.b16 %v1787
        %v1884 = vunpack.c.l.b16 %v1788
        %v1885 = vunpack.c.l.b16 %v1789
        %v1886 = vunpack.c.l.b16 %v1790
        %v1887 = vunpack.c.l.b16 %v1791
        %v1888 = vunpack.c.l.b16 %v1792
        %v1889 = vunpack.c.l.b16 %v1793
        %v1890 = vunpack.c.l.b16 %v1794
        %v1891 = vunpack.c.l.b16 %v1795
        %v1892 = vunpack.c.l.b16 %v1796
        %v1893 = vunpack.c.l.b16 %v1797
        %v1894 = vunpack.c.l.b16 %v1798
        %v1895 = vunpack.c.l.b16 %v1799
        %v1896 = vunpack.c.l.b16 %v1800
        %v1897 = vunpack.c.l.b16 %v1801
        %v1898 = vunpack.c.l.b16 %v1802
        %v1899 = vunpack.c.l.b16 %v1803
        %v1900 = vunpack.c.l.b16 %v1804
        %v1901 = vunpack.c.l.b16 %v1805
        %v1902 = vunpack.c.l.b16 %v1806
        %v1903 = vunpack.c.l.b16 %v1807
        %v1904 = vpack.c.b16 %v1857, %v1856
        %v1905 = vpack.c.b16 %v1858, %v1858
        %v1906 = vpack.c.b16 %v1860, %v1859
        %v1907 = vpack.c.b16 %v1861, %v1861
        %v1908 = vpack.c.b16 %v1863, %v1862
        %v1909 = vpack.c.b16 %v1864, %v1864
        %v1910 = vpack.c.b16 %v1866, %v1865
        %v1911 = vpack.c.b16 %v1867, %v1867
        %v1912 = vpack.c.b16 %v1869, %v1868
        %v1913 = vpack.c.b16 %v1870, %v1870
        %v1914 = vpack.c.b16 %v1872, %v1871
        %v1915 = vpack.c.b16 %v1873, %v1873
        %v1916 = vpack.c.b16 %v1875, %v1874
        %v1917 = vpack.c.b16 %v1876, %v1876
        %v1918 = vpack.c.b16 %v1878, %v1877
        %v1919 = vpack.c.b16 %v1879, %v1879
        %v1920 = vpack.c.b16 %v1881, %v1880
        %v1921 = vpack.c.b16 %v1882, %v1882
        %v1922 = vpack.c.b16 %v1884, %v1883
        %v1923 = vpack.c.b16 %v1885, %v1885
        %v1924 = vpack.c.b16 %v1887, %v1886
        %v1925 = vpack.c.b16 %v1888, %v1888
        %v1926 = vpack.c.b16 %v1890, %v1889
        %v1927 = vpack.c.b16 %v1891, %v1891
        %v1928 = vpack.c.b16 %v1893, %v1892
        %v1929 = vpack.c.b16 %v1894, %v1894
        %v1930 = vpack.c.b16 %v1896, %v1895
        %v1931 = vpack.c.b16 %v1897, %v1897
        %v1932 = vpack.c.b16 %v1899, %v1898
        %v1933 = vpack.c.b16 %v1900, %v1900
        %v1934 = vpack.c.b16 %v1902, %v1901
        %v1935 = vpack.c.b16 %v1903, %v1903
        %v1937 = vshrl.u32 %v1904, 16
        %v1939 = vshll.u32 %v1904, 16
        %v1941 = vrot.slane %v1939, 1
        %v1942 = vor.u32 %v1937, %v1941
        %v1944 = vshll.u32 %v1905, 16
        %v1946 = vrot.slane %v1944, 1
        %v1947 = vsel %vm1035, %v1942, %v1946
        %v1949 = vshrl.u32 %v1906, 16
        %v1951 = vshll.u32 %v1906, 16
        %v1953 = vrot.slane %v1951, 1
        %v1954 = vor.u32 %v1949, %v1953
        %v1956 = vshll.u32 %v1907, 16
        %v1958 = vrot.slane %v1956, 1
        %v1959 = vsel %vm1035, %v1954, %v1958
        %v1961 = vshrl.u32 %v1908, 16
        %v1963 = vshll.u32 %v1908, 16
        %v1965 = vrot.slane %v1963, 1
        %v1966 = vor.u32 %v1961, %v1965
        %v1968 = vshll.u32 %v1909, 16
        %v1970 = vrot.slane %v1968, 1
        %v1971 = vsel %vm1035, %v1966, %v1970
        %v1973 = vshrl.u32 %v1910, 16
        %v1975 = vshll.u32 %v1910, 16
        %v1977 = vrot.slane %v1975, 1
        %v1978 = vor.u32 %v1973, %v1977
        %v1980 = vshll.u32 %v1911, 16
        %v1982 = vrot.slane %v1980, 1
        %v1983 = vsel %vm1035, %v1978, %v1982
        %v1985 = vshrl.u32 %v1912, 16
        %v1987 = vshll.u32 %v1912, 16
        %v1989 = vrot.slane %v1987, 1
        %v1990 = vor.u32 %v1985, %v1989
        %v1992 = vshll.u32 %v1913, 16
        %v1994 = vrot.slane %v1992, 1
        %v1995 = vsel %vm1035, %v1990, %v1994
        %v1997 = vshrl.u32 %v1914, 16
        %v1999 = vshll.u32 %v1914, 16
        %v2001 = vrot.slane %v1999, 1
        %v2002 = vor.u32 %v1997, %v2001
        %v2004 = vshll.u32 %v1915, 16
        %v2006 = vrot.slane %v2004, 1
        %v2007 = vsel %vm1035, %v2002, %v2006
        %v2009 = vshrl.u32 %v1916, 16
        %v2011 = vshll.u32 %v1916, 16
        %v2013 = vrot.slane %v2011, 1
        %v2014 = vor.u32 %v2009, %v2013
        %v2016 = vshll.u32 %v1917, 16
        %v2018 = vrot.slane %v2016, 1
        %v2019 = vsel %vm1035, %v2014, %v2018
        %v2021 = vshrl.u32 %v1918, 16
        %v2023 = vshll.u32 %v1918, 16
        %v2025 = vrot.slane %v2023, 1
        %v2026 = vor.u32 %v2021, %v2025
        %v2028 = vshll.u32 %v1919, 16
        %v2030 = vrot.slane %v2028, 1
        %v2031 = vsel %vm1035, %v2026, %v2030
        %v2033 = vshrl.u32 %v1920, 16
        %v2035 = vshll.u32 %v1920, 16
        %v2037 = vrot.slane %v2035, 1
        %v2038 = vor.u32 %v2033, %v2037
        %v2040 = vshll.u32 %v1921, 16
        %v2042 = vrot.slane %v2040, 1
        %v2043 = vsel %vm1035, %v2038, %v2042
        %v2045 = vshrl.u32 %v1922, 16
        %v2047 = vshll.u32 %v1922, 16
        %v2049 = vrot.slane %v2047, 1
        %v2050 = vor.u32 %v2045, %v2049
        %v2052 = vshll.u32 %v1923, 16
        %v2054 = vrot.slane %v2052, 1
        %v2055 = vsel %vm1035, %v2050, %v2054
        %v2057 = vshrl.u32 %v1924, 16
        %v2059 = vshll.u32 %v1924, 16
        %v2061 = vrot.slane %v2059, 1
        %v2062 = vor.u32 %v2057, %v2061
        %v2064 = vshll.u32 %v1925, 16
        %v2066 = vrot.slane %v2064, 1
        %v2067 = vsel %vm1035, %v2062, %v2066
        %v2069 = vshrl.u32 %v1926, 16
        %v2071 = vshll.u32 %v1926, 16
        %v2073 = vrot.slane %v2071, 1
        %v2074 = vor.u32 %v2069, %v2073
        %v2076 = vshll.u32 %v1927, 16
        %v2078 = vrot.slane %v2076, 1
        %v2079 = vsel %vm1035, %v2074, %v2078
        %v2081 = vshrl.u32 %v1928, 16
        %v2083 = vshll.u32 %v1928, 16
        %v2085 = vrot.slane %v2083, 1
        %v2086 = vor.u32 %v2081, %v2085
        %v2088 = vshll.u32 %v1929, 16
        %v2090 = vrot.slane %v2088, 1
        %v2091 = vsel %vm1035, %v2086, %v2090
        %v2093 = vshrl.u32 %v1930, 16
        %v2095 = vshll.u32 %v1930, 16
        %v2097 = vrot.slane %v2095, 1
        %v2098 = vor.u32 %v2093, %v2097
        %v2100 = vshll.u32 %v1931, 16
        %v2102 = vrot.slane %v2100, 1
        %v2103 = vsel %vm1035, %v2098, %v2102
        %v2105 = vshrl.u32 %v1932, 16
        %v2107 = vshll.u32 %v1932, 16
        %v2109 = vrot.slane %v2107, 1
        %v2110 = vor.u32 %v2105, %v2109
        %v2112 = vshll.u32 %v1933, 16
        %v2114 = vrot.slane %v2112, 1
        %v2115 = vsel %vm1035, %v2110, %v2114
        %v2117 = vshrl.u32 %v1934, 16
        %v2119 = vshll.u32 %v1934, 16
        %v2121 = vrot.slane %v2119, 1
        %v2122 = vor.u32 %v2117, %v2121
        %v2124 = vshll.u32 %v1935, 16
        %v2126 = vrot.slane %v2124, 1
        %v2127 = vsel %vm1035, %v2122, %v2126
        %2128 = vrot.lane.b32.xlu0 %v1947, 16
        %v2129 = vpop.permute.xlu0 %2128
        %2130 = vrot.lane.b32.xlu0 %v1959, 16
        %v2131 = vpop.permute.xlu0 %2130
        %2132 = vrot.lane.b32.xlu0 %v1971, 16
        %v2133 = vpop.permute.xlu0 %2132
        %2134 = vrot.lane.b32.xlu0 %v1983, 16
        %v2135 = vpop.permute.xlu0 %2134
        %2136 = vrot.lane.b32.xlu0 %v1995, 16
        %v2137 = vpop.permute.xlu0 %2136
        %2138 = vrot.lane.b32.xlu0 %v2007, 16
        %v2139 = vpop.permute.xlu0 %2138
        %2140 = vrot.lane.b32.xlu0 %v2019, 16
        %v2141 = vpop.permute.xlu0 %2140
        %2142 = vrot.lane.b32.xlu0 %v2031, 16
        %v2143 = vpop.permute.xlu0 %2142
        %2144 = vrot.lane.b32.xlu0 %v2043, 16
        %v2145 = vpop.permute.xlu0 %2144
        %2146 = vrot.lane.b32.xlu0 %v2055, 16
        %v2147 = vpop.permute.xlu0 %2146
        %2148 = vrot.lane.b32.xlu0 %v2067, 16
        %v2149 = vpop.permute.xlu0 %2148
        %2150 = vrot.lane.b32.xlu0 %v2079, 16
        %v2151 = vpop.permute.xlu0 %2150
        %2152 = vrot.lane.b32.xlu0 %v2091, 16
        %v2153 = vpop.permute.xlu0 %2152
        %2154 = vrot.lane.b32.xlu0 %v2103, 16
        %v2155 = vpop.permute.xlu0 %2154
        %2156 = vrot.lane.b32.xlu0 %v2115, 16
        %v2157 = vpop.permute.xlu0 %2156
        %2158 = vrot.lane.b32.xlu0 %v2127, 16
        %v2159 = vpop.permute.xlu0 %2158
        %vm2176 = vcmask 162944
        %2177 = vst.msk [vmem:[#allocation3] sm:$0xff] %vm2176, %v2129
        %2178 = vst.msk [vmem:[#allocation3 + $0x8] sm:$0xff] %vm2176, %v2131
        %2179 = vst.msk [vmem:[#allocation3 + $0x10] sm:$0xff] %vm2176, %v2133
        %2180 = vst.msk [vmem:[#allocation3 + $0x18] sm:$0xff] %vm2176, %v2135
        %2181 = vst.msk [vmem:[#allocation3 + $0x20] sm:$0xff] %vm2176, %v2137
        %2182 = vst.msk [vmem:[#allocation3 + $0x28] sm:$0xff] %vm2176, %v2139
        %2183 = vst.msk [vmem:[#allocation3 + $0x30] sm:$0xff] %vm2176, %v2141
        %2184 = vst.msk [vmem:[#allocation3 + $0x38] sm:$0xff] %vm2176, %v2143
        %2185 = vst.msk [vmem:[#allocation3 + $0x40] sm:$0xff] %vm2176, %v2145
        %2186 = vst.msk [vmem:[#allocation3 + $0x48] sm:$0xff] %vm2176, %v2147
        %2187 = vst.msk [vmem:[#allocation3 + $0x50] sm:$0xff] %vm2176, %v2149
        %2188 = vst.msk [vmem:[#allocation3 + $0x58] sm:$0xff] %vm2176, %v2151
        %2189 = vst.msk [vmem:[#allocation3 + $0x60] sm:$0xff] %vm2176, %v2153
        %2190 = vst.msk [vmem:[#allocation3 + $0x68] sm:$0xff] %vm2176, %v2155
        %2191 = vst.msk [vmem:[#allocation3 + $0x70] sm:$0xff] %vm2176, %v2157
        %2192 = vst.msk [vmem:[#allocation3 + $0x78] sm:$0xff] %vm2176, %v2159
        %v2193 = vld [vmem:[%s596] sm:$0xe]
        %v2194 = vld [vmem:[%s596 + $0x4] sm:$0xf]
        %v2195 = vld [vmem:[%s596 + $0x8] sm:$0x1]
        %v2196 = vld [vmem:[%s596 + $0xc] sm:$0xe]
        %v2197 = vld [vmem:[%s596 + $0x10] sm:$0xf]
        %v2198 = vld [vmem:[%s596 + $0x14] sm:$0x1]
        %v2199 = vld [vmem:[%s596 + $0x18] sm:$0xe]
        %v2200 = vld [vmem:[%s596 + $0x1c] sm:$0xf]
        %v2201 = vld [vmem:[%s596 + $0x20] sm:$0x1]
        %v2202 = vld [vmem:[%s596 + $0x24] sm:$0xe]
        %v2203 = vld [vmem:[%s596 + $0x28] sm:$0xf]
        %v2204 = vld [vmem:[%s596 + $0x2c] sm:$0x1]
        %v2205 = vld [vmem:[%s596 + $0x30] sm:$0xe]
        %v2206 = vld [vmem:[%s596 + $0x34] sm:$0xf]
        %v2207 = vld [vmem:[%s596 + $0x38] sm:$0x1]
        %v2208 = vld [vmem:[%s596 + $0x3c] sm:$0xe]
        %v2209 = vld [vmem:[%s596 + $0x40] sm:$0xf]
        %v2210 = vld [vmem:[%s596 + $0x44] sm:$0x1]
        %v2211 = vld [vmem:[%s596 + $0x48] sm:$0xe]
        %v2212 = vld [vmem:[%s596 + $0x4c] sm:$0xf]
        %v2213 = vld [vmem:[%s596 + $0x50] sm:$0x1]
        %v2214 = vld [vmem:[%s596 + $0x54] sm:$0xe]
        %v2215 = vld [vmem:[%s596 + $0x58] sm:$0xf]
        %v2216 = vld [vmem:[%s596 + $0x5c] sm:$0x1]
        %v2217 = vld [vmem:[%s596 + $0x60] sm:$0xe]
        %v2218 = vld [vmem:[%s596 + $0x64] sm:$0xf]
        %v2219 = vld [vmem:[%s596 + $0x68] sm:$0x1]
        %v2220 = vld [vmem:[%s596 + $0x6c] sm:$0xe]
        %v2221 = vld [vmem:[%s596 + $0x70] sm:$0xf]
        %v2222 = vld [vmem:[%s596 + $0x74] sm:$0x1]
        %v2223 = vld [vmem:[%s596 + $0x78] sm:$0xe]
        %v2224 = vld [vmem:[%s596 + $0x7c] sm:$0xf]
        %v2225 = vld [vmem:[%s596 + $0x80] sm:$0x1]
        %v2226 = vld [vmem:[%s596 + $0x84] sm:$0xe]
        %v2227 = vld [vmem:[%s596 + $0x88] sm:$0xf]
        %v2228 = vld [vmem:[%s596 + $0x8c] sm:$0x1]
        %v2229 = vld [vmem:[%s596 + $0x90] sm:$0xe]
        %v2230 = vld [vmem:[%s596 + $0x94] sm:$0xf]
        %v2231 = vld [vmem:[%s596 + $0x98] sm:$0x1]
        %v2232 = vld [vmem:[%s596 + $0x9c] sm:$0xe]
        %v2233 = vld [vmem:[%s596 + $0xa0] sm:$0xf]
        %v2234 = vld [vmem:[%s596 + $0xa4] sm:$0x1]
        %v2235 = vld [vmem:[%s596 + $0xa8] sm:$0xe]
        %v2236 = vld [vmem:[%s596 + $0xac] sm:$0xf]
        %v2237 = vld [vmem:[%s596 + $0xb0] sm:$0x1]
        %v2238 = vld [vmem:[%s596 + $0xb4] sm:$0xe]
        %v2239 = vld [vmem:[%s596 + $0xb8] sm:$0xf]
        %v2240 = vld [vmem:[%s596 + $0xbc] sm:$0x1]
        %v2289 = vunpack.c.l.b16 %v2193
        %v2290 = vunpack.c.l.b16 %v2194
        %v2291 = vunpack.c.l.b16 %v2195
        %v2292 = vunpack.c.l.b16 %v2196
        %v2293 = vunpack.c.l.b16 %v2197
        %v2294 = vunpack.c.l.b16 %v2198
        %v2295 = vunpack.c.l.b16 %v2199
        %v2296 = vunpack.c.l.b16 %v2200
        %v2297 = vunpack.c.l.b16 %v2201
        %v2298 = vunpack.c.l.b16 %v2202
        %v2299 = vunpack.c.l.b16 %v2203
        %v2300 = vunpack.c.l.b16 %v2204
        %v2301 = vunpack.c.l.b16 %v2205
        %v2302 = vunpack.c.l.b16 %v2206
        %v2303 = vunpack.c.l.b16 %v2207
        %v2304 = vunpack.c.l.b16 %v2208
        %v2305 = vunpack.c.l.b16 %v2209
        %v2306 = vunpack.c.l.b16 %v2210
        %v2307 = vunpack.c.l.b16 %v2211
        %v2308 = vunpack.c.l.b16 %v2212
        %v2309 = vunpack.c.l.b16 %v2213
        %v2310 = vunpack.c.l.b16 %v2214
        %v2311 = vunpack.c.l.b16 %v2215
        %v2312 = vunpack.c.l.b16 %v2216
        %v2313 = vunpack.c.l.b16 %v2217
        %v2314 = vunpack.c.l.b16 %v2218
        %v2315 = vunpack.c.l.b16 %v2219
        %v2316 = vunpack.c.l.b16 %v2220
        %v2317 = vunpack.c.l.b16 %v2221
        %v2318 = vunpack.c.l.b16 %v2222
        %v2319 = vunpack.c.l.b16 %v2223
        %v2320 = vunpack.c.l.b16 %v2224
        %v2321 = vunpack.c.l.b16 %v2225
        %v2322 = vunpack.c.l.b16 %v2226
        %v2323 = vunpack.c.l.b16 %v2227
        %v2324 = vunpack.c.l.b16 %v2228
        %v2325 = vunpack.c.l.b16 %v2229
        %v2326 = vunpack.c.l.b16 %v2230
        %v2327 = vunpack.c.l.b16 %v2231
        %v2328 = vunpack.c.l.b16 %v2232
        %v2329 = vunpack.c.l.b16 %v2233
        %v2330 = vunpack.c.l.b16 %v2234
        %v2331 = vunpack.c.l.b16 %v2235
        %v2332 = vunpack.c.l.b16 %v2236
        %v2333 = vunpack.c.l.b16 %v2237
        %v2334 = vunpack.c.l.b16 %v2238
        %v2335 = vunpack.c.l.b16 %v2239
        %v2336 = vunpack.c.l.b16 %v2240
        %v2337 = vpack.c.b16 %v2290, %v2289
        %v2338 = vpack.c.b16 %v2291, %v2291
        %v2339 = vpack.c.b16 %v2293, %v2292
        %v2340 = vpack.c.b16 %v2294, %v2294
        %v2341 = vpack.c.b16 %v2296, %v2295
        %v2342 = vpack.c.b16 %v2297, %v2297
        %v2343 = vpack.c.b16 %v2299, %v2298
        %v2344 = vpack.c.b16 %v2300, %v2300
        %v2345 = vpack.c.b16 %v2302, %v2301
        %v2346 = vpack.c.b16 %v2303, %v2303
        %v2347 = vpack.c.b16 %v2305, %v2304
        %v2348 = vpack.c.b16 %v2306, %v2306
        %v2349 = vpack.c.b16 %v2308, %v2307
        %v2350 = vpack.c.b16 %v2309, %v2309
        %v2351 = vpack.c.b16 %v2311, %v2310
        %v2352 = vpack.c.b16 %v2312, %v2312
        %v2353 = vpack.c.b16 %v2314, %v2313
        %v2354 = vpack.c.b16 %v2315, %v2315
        %v2355 = vpack.c.b16 %v2317, %v2316
        %v2356 = vpack.c.b16 %v2318, %v2318
        %v2357 = vpack.c.b16 %v2320, %v2319
        %v2358 = vpack.c.b16 %v2321, %v2321
        %v2359 = vpack.c.b16 %v2323, %v2322
        %v2360 = vpack.c.b16 %v2324, %v2324
        %v2361 = vpack.c.b16 %v2326, %v2325
        %v2362 = vpack.c.b16 %v2327, %v2327
        %v2363 = vpack.c.b16 %v2329, %v2328
        %v2364 = vpack.c.b16 %v2330, %v2330
        %v2365 = vpack.c.b16 %v2332, %v2331
        %v2366 = vpack.c.b16 %v2333, %v2333
        %v2367 = vpack.c.b16 %v2335, %v2334
        %v2368 = vpack.c.b16 %v2336, %v2336
        %v2369 = vrot.slane %v2337, 1
        %v2370 = vrot.slane %v2338, 1
        %v2371 = vsel %vm1469, %v2369, %v2370
        %v2372 = vrot.slane %v2339, 1
        %v2373 = vrot.slane %v2340, 1
        %v2374 = vsel %vm1469, %v2372, %v2373
        %v2375 = vrot.slane %v2341, 1
        %v2376 = vrot.slane %v2342, 1
        %v2377 = vsel %vm1469, %v2375, %v2376
        %v2378 = vrot.slane %v2343, 1
        %v2379 = vrot.slane %v2344, 1
        %v2380 = vsel %vm1469, %v2378, %v2379
        %v2381 = vrot.slane %v2345, 1
        %v2382 = vrot.slane %v2346, 1
        %v2383 = vsel %vm1469, %v2381, %v2382
        %v2384 = vrot.slane %v2347, 1
        %v2385 = vrot.slane %v2348, 1
        %v2386 = vsel %vm1469, %v2384, %v2385
        %v2387 = vrot.slane %v2349, 1
        %v2388 = vrot.slane %v2350, 1
        %v2389 = vsel %vm1469, %v2387, %v2388
        %v2390 = vrot.slane %v2351, 1
        %v2391 = vrot.slane %v2352, 1
        %v2392 = vsel %vm1469, %v2390, %v2391
        %v2393 = vrot.slane %v2353, 1
        %v2394 = vrot.slane %v2354, 1
        %v2395 = vsel %vm1469, %v2393, %v2394
        %v2396 = vrot.slane %v2355, 1
        %v2397 = vrot.slane %v2356, 1
        %v2398 = vsel %vm1469, %v2396, %v2397
        %v2399 = vrot.slane %v2357, 1
        %v2400 = vrot.slane %v2358, 1
        %v2401 = vsel %vm1469, %v2399, %v2400
        %v2402 = vrot.slane %v2359, 1
        %v2403 = vrot.slane %v2360, 1
        %v2404 = vsel %vm1469, %v2402, %v2403
        %v2405 = vrot.slane %v2361, 1
        %v2406 = vrot.slane %v2362, 1
        %v2407 = vsel %vm1469, %v2405, %v2406
        %v2408 = vrot.slane %v2363, 1
        %v2409 = vrot.slane %v2364, 1
        %v2410 = vsel %vm1469, %v2408, %v2409
        %v2411 = vrot.slane %v2365, 1
        %v2412 = vrot.slane %v2366, 1
        %v2413 = vsel %vm1469, %v2411, %v2412
        %v2414 = vrot.slane %v2367, 1
        %v2415 = vrot.slane %v2368, 1
        %v2416 = vsel %vm1469, %v2414, %v2415
        %2417 = vrot.lane.b32.xlu0 %v2371, 20
        %v2418 = vpop.permute.xlu0 %2417
        %2419 = vrot.lane.b32.xlu0 %v2374, 20
        %v2420 = vpop.permute.xlu0 %2419
        %2421 = vrot.lane.b32.xlu0 %v2377, 20
        %v2422 = vpop.permute.xlu0 %2421
        %2423 = vrot.lane.b32.xlu0 %v2380, 20
        %v2424 = vpop.permute.xlu0 %2423
        %2425 = vrot.lane.b32.xlu0 %v2383, 20
        %v2426 = vpop.permute.xlu0 %2425
        %2427 = vrot.lane.b32.xlu0 %v2386, 20
        %v2428 = vpop.permute.xlu0 %2427
        %2429 = vrot.lane.b32.xlu0 %v2389, 20
        %v2430 = vpop.permute.xlu0 %2429
        %2431 = vrot.lane.b32.xlu0 %v2392, 20
        %v2432 = vpop.permute.xlu0 %2431
        %2433 = vrot.lane.b32.xlu0 %v2395, 20
        %v2434 = vpop.permute.xlu0 %2433
        %2435 = vrot.lane.b32.xlu0 %v2398, 20
        %v2436 = vpop.permute.xlu0 %2435
        %2437 = vrot.lane.b32.xlu0 %v2401, 20
        %v2438 = vpop.permute.xlu0 %2437
        %2439 = vrot.lane.b32.xlu0 %v2404, 20
        %v2440 = vpop.permute.xlu0 %2439
        %2441 = vrot.lane.b32.xlu0 %v2407, 20
        %v2442 = vpop.permute.xlu0 %2441
        %2443 = vrot.lane.b32.xlu0 %v2410, 20
        %v2444 = vpop.permute.xlu0 %2443
        %2445 = vrot.lane.b32.xlu0 %v2413, 20
        %v2446 = vpop.permute.xlu0 %2445
        %2447 = vrot.lane.b32.xlu0 %v2416, 20
        %v2448 = vpop.permute.xlu0 %2447
        %vm2465 = vcmask 195744
        %2466 = vst.msk [vmem:[#allocation3] sm:$0xff] %vm2465, %v2418
        %2467 = vst.msk [vmem:[#allocation3 + $0x8] sm:$0xff] %vm2465, %v2420
        %2468 = vst.msk [vmem:[#allocation3 + $0x10] sm:$0xff] %vm2465, %v2422
        %2469 = vst.msk [vmem:[#allocation3 + $0x18] sm:$0xff] %vm2465, %v2424
        %2470 = vst.msk [vmem:[#allocation3 + $0x20] sm:$0xff] %vm2465, %v2426
        %2471 = vst.msk [vmem:[#allocation3 + $0x28] sm:$0xff] %vm2465, %v2428
        %2472 = vst.msk [vmem:[#allocation3 + $0x30] sm:$0xff] %vm2465, %v2430
        %2473 = vst.msk [vmem:[#allocation3 + $0x38] sm:$0xff] %vm2465, %v2432
        %2474 = vst.msk [vmem:[#allocation3 + $0x40] sm:$0xff] %vm2465, %v2434
        %2475 = vst.msk [vmem:[#allocation3 + $0x48] sm:$0xff] %vm2465, %v2436
        %2476 = vst.msk [vmem:[#allocation3 + $0x50] sm:$0xff] %vm2465, %v2438
        %2477 = vst.msk [vmem:[#allocation3 + $0x58] sm:$0xff] %vm2465, %v2440
        %2478 = vst.msk [vmem:[#allocation3 + $0x60] sm:$0xff] %vm2465, %v2442
        %2479 = vst.msk [vmem:[#allocation3 + $0x68] sm:$0xff] %vm2465, %v2444
        %2480 = vst.msk [vmem:[#allocation3 + $0x70] sm:$0xff] %vm2465, %v2446
        %2481 = vst.msk [vmem:[#allocation3 + $0x78] sm:$0xff] %vm2465, %v2448
        %s2482 = scalar_lea.vmem [#allocation2], 24
        %v2483 = vld [vmem:[%s2482] sm:$0xf]
        %v2484 = vld [vmem:[%s2482 + $0x4] sm:$0xf]
        %v2485 = vld [vmem:[%s2482 + $0xc] sm:$0xf]
        %v2486 = vld [vmem:[%s2482 + $0x10] sm:$0xf]
        %v2487 = vld [vmem:[%s2482 + $0x18] sm:$0xf]
        %v2488 = vld [vmem:[%s2482 + $0x1c] sm:$0xf]
        %v2489 = vld [vmem:[%s2482 + $0x24] sm:$0xf]
        %v2490 = vld [vmem:[%s2482 + $0x28] sm:$0xf]
        %v2491 = vld [vmem:[%s2482 + $0x30] sm:$0xf]
        %v2492 = vld [vmem:[%s2482 + $0x34] sm:$0xf]
        %v2493 = vld [vmem:[%s2482 + $0x3c] sm:$0xf]
        %v2494 = vld [vmem:[%s2482 + $0x40] sm:$0xf]
        %v2495 = vld [vmem:[%s2482 + $0x48] sm:$0xf]
        %v2496 = vld [vmem:[%s2482 + $0x4c] sm:$0xf]
        %v2497 = vld [vmem:[%s2482 + $0x54] sm:$0xf]
        %v2498 = vld [vmem:[%s2482 + $0x58] sm:$0xf]
        %v2499 = vld [vmem:[%s2482 + $0x60] sm:$0xf]
        %v2500 = vld [vmem:[%s2482 + $0x64] sm:$0xf]
        %v2501 = vld [vmem:[%s2482 + $0x6c] sm:$0xf]
        %v2502 = vld [vmem:[%s2482 + $0x70] sm:$0xf]
        %v2503 = vld [vmem:[%s2482 + $0x78] sm:$0xf]
        %v2504 = vld [vmem:[%s2482 + $0x7c] sm:$0xf]
        %v2505 = vld [vmem:[%s2482 + $0x84] sm:$0xf]
        %v2506 = vld [vmem:[%s2482 + $0x88] sm:$0xf]
        %v2507 = vld [vmem:[%s2482 + $0x90] sm:$0xf]
        %v2508 = vld [vmem:[%s2482 + $0x94] sm:$0xf]
        %v2509 = vld [vmem:[%s2482 + $0x9c] sm:$0xf]
        %v2510 = vld [vmem:[%s2482 + $0xa0] sm:$0xf]
        %v2511 = vld [vmem:[%s2482 + $0xa8] sm:$0xf]
        %v2512 = vld [vmem:[%s2482 + $0xac] sm:$0xf]
        %v2513 = vld [vmem:[%s2482 + $0xb4] sm:$0xf]
        %v2514 = vld [vmem:[%s2482 + $0xb8] sm:$0xf]
        %v2547 = vunpack.c.l.b16 %v2483
        %v2548 = vunpack.c.l.b16 %v2484
        %v2549 = vunpack.c.l.b16 %v2485
        %v2550 = vunpack.c.l.b16 %v2486
        %v2551 = vunpack.c.l.b16 %v2487
        %v2552 = vunpack.c.l.b16 %v2488
        %v2553 = vunpack.c.l.b16 %v2489
        %v2554 = vunpack.c.l.b16 %v2490
        %v2555 = vunpack.c.l.b16 %v2491
        %v2556 = vunpack.c.l.b16 %v2492
        %v2557 = vunpack.c.l.b16 %v2493
        %v2558 = vunpack.c.l.b16 %v2494
        %v2559 = vunpack.c.l.b16 %v2495
        %v2560 = vunpack.c.l.b16 %v2496
        %v2561 = vunpack.c.l.b16 %v2497
        %v2562 = vunpack.c.l.b16 %v2498
        %v2563 = vunpack.c.l.b16 %v2499
        %v2564 = vunpack.c.l.b16 %v2500
        %v2565 = vunpack.c.l.b16 %v2501
        %v2566 = vunpack.c.l.b16 %v2502
        %v2567 = vunpack.c.l.b16 %v2503
        %v2568 = vunpack.c.l.b16 %v2504
        %v2569 = vunpack.c.l.b16 %v2505
        %v2570 = vunpack.c.l.b16 %v2506
        %v2571 = vunpack.c.l.b16 %v2507
        %v2572 = vunpack.c.l.b16 %v2508
        %v2573 = vunpack.c.l.b16 %v2509
        %v2574 = vunpack.c.l.b16 %v2510
        %v2575 = vunpack.c.l.b16 %v2511
        %v2576 = vunpack.c.l.b16 %v2512
        %v2577 = vunpack.c.l.b16 %v2513
        %v2578 = vunpack.c.l.b16 %v2514
        %v2579 = vpack.c.b16 %v2548, %v2547
        %v2580 = vpack.c.b16 %v2550, %v2549
        %v2581 = vpack.c.b16 %v2552, %v2551
        %v2582 = vpack.c.b16 %v2554, %v2553
        %v2583 = vpack.c.b16 %v2556, %v2555
        %v2584 = vpack.c.b16 %v2558, %v2557
        %v2585 = vpack.c.b16 %v2560, %v2559
        %v2586 = vpack.c.b16 %v2562, %v2561
        %v2587 = vpack.c.b16 %v2564, %v2563
        %v2588 = vpack.c.b16 %v2566, %v2565
        %v2589 = vpack.c.b16 %v2568, %v2567
        %v2590 = vpack.c.b16 %v2570, %v2569
        %v2591 = vpack.c.b16 %v2572, %v2571
        %v2592 = vpack.c.b16 %v2574, %v2573
        %v2593 = vpack.c.b16 %v2576, %v2575
        %v2594 = vpack.c.b16 %v2578, %v2577
        %2595 = vrot.lane.b32.xlu0 %v2579, 24
        %v2596 = vpop.permute.xlu0 %2595
        %2597 = vrot.lane.b32.xlu0 %v2580, 24
        %v2598 = vpop.permute.xlu0 %2597
        %2599 = vrot.lane.b32.xlu0 %v2581, 24
        %v2600 = vpop.permute.xlu0 %2599
        %2601 = vrot.lane.b32.xlu0 %v2582, 24
        %v2602 = vpop.permute.xlu0 %2601
        %2603 = vrot.lane.b32.xlu0 %v2583, 24
        %v2604 = vpop.permute.xlu0 %2603
        %2605 = vrot.lane.b32.xlu0 %v2584, 24
        %v2606 = vpop.permute.xlu0 %2605
        %2607 = vrot.lane.b32.xlu0 %v2585, 24
        %v2608 = vpop.permute.xlu0 %2607
        %2609 = vrot.lane.b32.xlu0 %v2586, 24
        %v2610 = vpop.permute.xlu0 %2609
        %2611 = vrot.lane.b32.xlu0 %v2587, 24
        %v2612 = vpop.permute.xlu0 %2611
        %2613 = vrot.lane.b32.xlu0 %v2588, 24
        %v2614 = vpop.permute.xlu0 %2613
        %2615 = vrot.lane.b32.xlu0 %v2589, 24
        %v2616 = vpop.permute.xlu0 %2615
        %2617 = vrot.lane.b32.xlu0 %v2590, 24
        %v2618 = vpop.permute.xlu0 %2617
        %2619 = vrot.lane.b32.xlu0 %v2591, 24
        %v2620 = vpop.permute.xlu0 %2619
        %2621 = vrot.lane.b32.xlu0 %v2592, 24
        %v2622 = vpop.permute.xlu0 %2621
        %2623 = vrot.lane.b32.xlu0 %v2593, 24
        %v2624 = vpop.permute.xlu0 %2623
        %2625 = vrot.lane.b32.xlu0 %v2594, 24
        %v2626 = vpop.permute.xlu0 %2625
        %vm2643 = vcmask 228544
        %2644 = vst.msk [vmem:[#allocation3] sm:$0xff] %vm2643, %v2596
        %2645 = vst.msk [vmem:[#allocation3 + $0x8] sm:$0xff] %vm2643, %v2598
        %2646 = vst.msk [vmem:[#allocation3 + $0x10] sm:$0xff] %vm2643, %v2600
        %2647 = vst.msk [vmem:[#allocation3 + $0x18] sm:$0xff] %vm2643, %v2602
        %2648 = vst.msk [vmem:[#allocation3 + $0x20] sm:$0xff] %vm2643, %v2604
        %2649 = vst.msk [vmem:[#allocation3 + $0x28] sm:$0xff] %vm2643, %v2606
        %2650 = vst.msk [vmem:[#allocation3 + $0x30] sm:$0xff] %vm2643, %v2608
        %2651 = vst.msk [vmem:[#allocation3 + $0x38] sm:$0xff] %vm2643, %v2610
        %2652 = vst.msk [vmem:[#allocation3 + $0x40] sm:$0xff] %vm2643, %v2612
        %2653 = vst.msk [vmem:[#allocation3 + $0x48] sm:$0xff] %vm2643, %v2614
        %2654 = vst.msk [vmem:[#allocation3 + $0x50] sm:$0xff] %vm2643, %v2616
        %2655 = vst.msk [vmem:[#allocation3 + $0x58] sm:$0xff] %vm2643, %v2618
        %2656 = vst.msk [vmem:[#allocation3 + $0x60] sm:$0xff] %vm2643, %v2620
        %2657 = vst.msk [vmem:[#allocation3 + $0x68] sm:$0xff] %vm2643, %v2622
        %2658 = vst.msk [vmem:[#allocation3 + $0x70] sm:$0xff] %vm2643, %v2624
        %2659 = vst.msk [vmem:[#allocation3 + $0x78] sm:$0xff] %vm2643, %v2626
        %v2660 = vld [vmem:[%s2482] sm:$0xf]
        %v2661 = vld [vmem:[%s2482 + $0x4] sm:$0xf]
        %v2662 = vld [vmem:[%s2482 + $0x8] sm:$0x1]
        %v2663 = vld [vmem:[%s2482 + $0xc] sm:$0xf]
        %v2664 = vld [vmem:[%s2482 + $0x10] sm:$0xf]
        %v2665 = vld [vmem:[%s2482 + $0x14] sm:$0x1]
        %v2666 = vld [vmem:[%s2482 + $0x18] sm:$0xf]
        %v2667 = vld [vmem:[%s2482 + $0x1c] sm:$0xf]
        %v2668 = vld [vmem:[%s2482 + $0x20] sm:$0x1]
        %v2669 = vld [vmem:[%s2482 + $0x24] sm:$0xf]
        %v2670 = vld [vmem:[%s2482 + $0x28] sm:$0xf]
        %v2671 = vld [vmem:[%s2482 + $0x2c] sm:$0x1]
        %v2672 = vld [vmem:[%s2482 + $0x30] sm:$0xf]
        %v2673 = vld [vmem:[%s2482 + $0x34] sm:$0xf]
        %v2674 = vld [vmem:[%s2482 + $0x38] sm:$0x1]
        %v2675 = vld [vmem:[%s2482 + $0x3c] sm:$0xf]
        %v2676 = vld [vmem:[%s2482 + $0x40] sm:$0xf]
        %v2677 = vld [vmem:[%s2482 + $0x44] sm:$0x1]
        %v2678 = vld [vmem:[%s2482 + $0x48] sm:$0xf]
        %v2679 = vld [vmem:[%s2482 + $0x4c] sm:$0xf]
        %v2680 = vld [vmem:[%s2482 + $0x50] sm:$0x1]
        %v2681 = vld [vmem:[%s2482 + $0x54] sm:$0xf]
        %v2682 = vld [vmem:[%s2482 + $0x58] sm:$0xf]
        %v2683 = vld [vmem:[%s2482 + $0x5c] sm:$0x1]
        %v2684 = vld [vmem:[%s2482 + $0x60] sm:$0xf]
        %v2685 = vld [vmem:[%s2482 + $0x64] sm:$0xf]
        %v2686 = vld [vmem:[%s2482 + $0x68] sm:$0x1]
        %v2687 = vld [vmem:[%s2482 + $0x6c] sm:$0xf]
        %v2688 = vld [vmem:[%s2482 + $0x70] sm:$0xf]
        %v2689 = vld [vmem:[%s2482 + $0x74] sm:$0x1]
        %v2690 = vld [vmem:[%s2482 + $0x78] sm:$0xf]
        %v2691 = vld [vmem:[%s2482 + $0x7c] sm:$0xf]
        %v2692 = vld [vmem:[%s2482 + $0x80] sm:$0x1]
        %v2693 = vld [vmem:[%s2482 + $0x84] sm:$0xf]
        %v2694 = vld [vmem:[%s2482 + $0x88] sm:$0xf]
        %v2695 = vld [vmem:[%s2482 + $0x8c] sm:$0x1]
        %v2696 = vld [vmem:[%s2482 + $0x90] sm:$0xf]
        %v2697 = vld [vmem:[%s2482 + $0x94] sm:$0xf]
        %v2698 = vld [vmem:[%s2482 + $0x98] sm:$0x1]
        %v2699 = vld [vmem:[%s2482 + $0x9c] sm:$0xf]
        %v2700 = vld [vmem:[%s2482 + $0xa0] sm:$0xf]
        %v2701 = vld [vmem:[%s2482 + $0xa4] sm:$0x1]
        %v2702 = vld [vmem:[%s2482 + $0xa8] sm:$0xf]
        %v2703 = vld [vmem:[%s2482 + $0xac] sm:$0xf]
        %v2704 = vld [vmem:[%s2482 + $0xb0] sm:$0x1]
        %v2705 = vld [vmem:[%s2482 + $0xb4] sm:$0xf]
        %v2706 = vld [vmem:[%s2482 + $0xb8] sm:$0xf]
        %v2707 = vld [vmem:[%s2482 + $0xbc] sm:$0x1]
        %v2756 = vunpack.c.l.b16 %v2660
        %v2757 = vunpack.c.l.b16 %v2661
        %v2758 = vunpack.c.l.b16 %v2662
        %v2759 = vunpack.c.l.b16 %v2663
        %v2760 = vunpack.c.l.b16 %v2664
        %v2761 = vunpack.c.l.b16 %v2665
        %v2762 = vunpack.c.l.b16 %v2666
        %v2763 = vunpack.c.l.b16 %v2667
        %v2764 = vunpack.c.l.b16 %v2668
        %v2765 = vunpack.c.l.b16 %v2669
        %v2766 = vunpack.c.l.b16 %v2670
        %v2767 = vunpack.c.l.b16 %v2671
        %v2768 = vunpack.c.l.b16 %v2672
        %v2769 = vunpack.c.l.b16 %v2673
        %v2770 = vunpack.c.l.b16 %v2674
        %v2771 = vunpack.c.l.b16 %v2675
        %v2772 = vunpack.c.l.b16 %v2676
        %v2773 = vunpack.c.l.b16 %v2677
        %v2774 = vunpack.c.l.b16 %v2678
        %v2775 = vunpack.c.l.b16 %v2679
        %v2776 = vunpack.c.l.b16 %v2680
        %v2777 = vunpack.c.l.b16 %v2681
        %v2778 = vunpack.c.l.b16 %v2682
        %v2779 = vunpack.c.l.b16 %v2683
        %v2780 = vunpack.c.l.b16 %v2684
        %v2781 = vunpack.c.l.b16 %v2685
        %v2782 = vunpack.c.l.b16 %v2686
        %v2783 = vunpack.c.l.b16 %v2687
        %v2784 = vunpack.c.l.b16 %v2688
        %v2785 = vunpack.c.l.b16 %v2689
        %v2786 = vunpack.c.l.b16 %v2690
        %v2787 = vunpack.c.l.b16 %v2691
        %v2788 = vunpack.c.l.b16 %v2692
        %v2789 = vunpack.c.l.b16 %v2693
        %v2790 = vunpack.c.l.b16 %v2694
        %v2791 = vunpack.c.l.b16 %v2695
        %v2792 = vunpack.c.l.b16 %v2696
        %v2793 = vunpack.c.l.b16 %v2697
        %v2794 = vunpack.c.l.b16 %v2698
        %v2795 = vunpack.c.l.b16 %v2699
        %v2796 = vunpack.c.l.b16 %v2700
        %v2797 = vunpack.c.l.b16 %v2701
        %v2798 = vunpack.c.l.b16 %v2702
        %v2799 = vunpack.c.l.b16 %v2703
        %v2800 = vunpack.c.l.b16 %v2704
        %v2801 = vunpack.c.l.b16 %v2705
        %v2802 = vunpack.c.l.b16 %v2706
        %v2803 = vunpack.c.l.b16 %v2707
        %v2804 = vpack.c.b16 %v2757, %v2756
        %v2805 = vpack.c.b16 %v2758, %v2758
        %v2806 = vpack.c.b16 %v2760, %v2759
        %v2807 = vpack.c.b16 %v2761, %v2761
        %v2808 = vpack.c.b16 %v2763, %v2762
        %v2809 = vpack.c.b16 %v2764, %v2764
        %v2810 = vpack.c.b16 %v2766, %v2765
        %v2811 = vpack.c.b16 %v2767, %v2767
        %v2812 = vpack.c.b16 %v2769, %v2768
        %v2813 = vpack.c.b16 %v2770, %v2770
        %v2814 = vpack.c.b16 %v2772, %v2771
        %v2815 = vpack.c.b16 %v2773, %v2773
        %v2816 = vpack.c.b16 %v2775, %v2774
        %v2817 = vpack.c.b16 %v2776, %v2776
        %v2818 = vpack.c.b16 %v2778, %v2777
        %v2819 = vpack.c.b16 %v2779, %v2779
        %v2820 = vpack.c.b16 %v2781, %v2780
        %v2821 = vpack.c.b16 %v2782, %v2782
        %v2822 = vpack.c.b16 %v2784, %v2783
        %v2823 = vpack.c.b16 %v2785, %v2785
        %v2824 = vpack.c.b16 %v2787, %v2786
        %v2825 = vpack.c.b16 %v2788, %v2788
        %v2826 = vpack.c.b16 %v2790, %v2789
        %v2827 = vpack.c.b16 %v2791, %v2791
        %v2828 = vpack.c.b16 %v2793, %v2792
        %v2829 = vpack.c.b16 %v2794, %v2794
        %v2830 = vpack.c.b16 %v2796, %v2795
        %v2831 = vpack.c.b16 %v2797, %v2797
        %v2832 = vpack.c.b16 %v2799, %v2798
        %v2833 = vpack.c.b16 %v2800, %v2800
        %v2834 = vpack.c.b16 %v2802, %v2801
        %v2835 = vpack.c.b16 %v2803, %v2803
        %v2837 = vshrl.u32 %v2804, 16
        %v2839 = vshll.u32 %v2804, 16
        %v2841 = vrot.slane %v2839, 1
        %v2842 = vor.u32 %v2837, %v2841
        %v2844 = vshll.u32 %v2805, 16
        %v2846 = vrot.slane %v2844, 1
        %v2847 = vsel %vm1035, %v2842, %v2846
        %v2849 = vshrl.u32 %v2806, 16
        %v2851 = vshll.u32 %v2806, 16
        %v2853 = vrot.slane %v2851, 1
        %v2854 = vor.u32 %v2849, %v2853
        %v2856 = vshll.u32 %v2807, 16
        %v2858 = vrot.slane %v2856, 1
        %v2859 = vsel %vm1035, %v2854, %v2858
        %v2861 = vshrl.u32 %v2808, 16
        %v2863 = vshll.u32 %v2808, 16
        %v2865 = vrot.slane %v2863, 1
        %v2866 = vor.u32 %v2861, %v2865
        %v2868 = vshll.u32 %v2809, 16
        %v2870 = vrot.slane %v2868, 1
        %v2871 = vsel %vm1035, %v2866, %v2870
        %v2873 = vshrl.u32 %v2810, 16
        %v2875 = vshll.u32 %v2810, 16
        %v2877 = vrot.slane %v2875, 1
        %v2878 = vor.u32 %v2873, %v2877
        %v2880 = vshll.u32 %v2811, 16
        %v2882 = vrot.slane %v2880, 1
        %v2883 = vsel %vm1035, %v2878, %v2882
        %v2885 = vshrl.u32 %v2812, 16
        %v2887 = vshll.u32 %v2812, 16
        %v2889 = vrot.slane %v2887, 1
        %v2890 = vor.u32 %v2885, %v2889
        %v2892 = vshll.u32 %v2813, 16
        %v2894 = vrot.slane %v2892, 1
        %v2895 = vsel %vm1035, %v2890, %v2894
        %v2897 = vshrl.u32 %v2814, 16
        %v2899 = vshll.u32 %v2814, 16
        %v2901 = vrot.slane %v2899, 1
        %v2902 = vor.u32 %v2897, %v2901
        %v2904 = vshll.u32 %v2815, 16
        %v2906 = vrot.slane %v2904, 1
        %v2907 = vsel %vm1035, %v2902, %v2906
        %v2909 = vshrl.u32 %v2816, 16
        %v2911 = vshll.u32 %v2816, 16
        %v2913 = vrot.slane %v2911, 1
        %v2914 = vor.u32 %v2909, %v2913
        %v2916 = vshll.u32 %v2817, 16
        %v2918 = vrot.slane %v2916, 1
        %v2919 = vsel %vm1035, %v2914, %v2918
        %v2921 = vshrl.u32 %v2818, 16
        %v2923 = vshll.u32 %v2818, 16
        %v2925 = vrot.slane %v2923, 1
        %v2926 = vor.u32 %v2921, %v2925
        %v2928 = vshll.u32 %v2819, 16
        %v2930 = vrot.slane %v2928, 1
        %v2931 = vsel %vm1035, %v2926, %v2930
        %v2933 = vshrl.u32 %v2820, 16
        %v2935 = vshll.u32 %v2820, 16
        %v2937 = vrot.slane %v2935, 1
        %v2938 = vor.u32 %v2933, %v2937
        %v2940 = vshll.u32 %v2821, 16
        %v2942 = vrot.slane %v2940, 1
        %v2943 = vsel %vm1035, %v2938, %v2942
        %v2945 = vshrl.u32 %v2822, 16
        %v2947 = vshll.u32 %v2822, 16
        %v2949 = vrot.slane %v2947, 1
        %v2950 = vor.u32 %v2945, %v2949
        %v2952 = vshll.u32 %v2823, 16
        %v2954 = vrot.slane %v2952, 1
        %v2955 = vsel %vm1035, %v2950, %v2954
        %v2957 = vshrl.u32 %v2824, 16
        %v2959 = vshll.u32 %v2824, 16
        %v2961 = vrot.slane %v2959, 1
        %v2962 = vor.u32 %v2957, %v2961
        %v2964 = vshll.u32 %v2825, 16
        %v2966 = vrot.slane %v2964, 1
        %v2967 = vsel %vm1035, %v2962, %v2966
        %v2969 = vshrl.u32 %v2826, 16
        %v2971 = vshll.u32 %v2826, 16
        %v2973 = vrot.slane %v2971, 1
        %v2974 = vor.u32 %v2969, %v2973
        %v2976 = vshll.u32 %v2827, 16
        %v2978 = vrot.slane %v2976, 1
        %v2979 = vsel %vm1035, %v2974, %v2978
        %v2981 = vshrl.u32 %v2828, 16
        %v2983 = vshll.u32 %v2828, 16
        %v2985 = vrot.slane %v2983, 1
        %v2986 = vor.u32 %v2981, %v2985
        %v2988 = vshll.u32 %v2829, 16
        %v2990 = vrot.slane %v2988, 1
        %v2991 = vsel %vm1035, %v2986, %v2990
        %v2993 = vshrl.u32 %v2830, 16
        %v2995 = vshll.u32 %v2830, 16
        %v2997 = vrot.slane %v2995, 1
        %v2998 = vor.u32 %v2993, %v2997
        %v3000 = vshll.u32 %v2831, 16
        %v3002 = vrot.slane %v3000, 1
        %v3003 = vsel %vm1035, %v2998, %v3002
        %v3005 = vshrl.u32 %v2832, 16
        %v3007 = vshll.u32 %v2832, 16
        %v3009 = vrot.slane %v3007, 1
        %v3010 = vor.u32 %v3005, %v3009
        %v3012 = vshll.u32 %v2833, 16
        %v3014 = vrot.slane %v3012, 1
        %v3015 = vsel %vm1035, %v3010, %v3014
        %v3017 = vshrl.u32 %v2834, 16
        %v3019 = vshll.u32 %v2834, 16
        %v3021 = vrot.slane %v3019, 1
        %v3022 = vor.u32 %v3017, %v3021
        %v3024 = vshll.u32 %v2835, 16
        %v3026 = vrot.slane %v3024, 1
        %v3027 = vsel %vm1035, %v3022, %v3026
        %3028 = vrot.lane.b32.xlu0 %v2847, 28
        %v3029 = vpop.permute.xlu0 %3028
        %3030 = vrot.lane.b32.xlu0 %v2859, 28
        %v3031 = vpop.permute.xlu0 %3030
        %3032 = vrot.lane.b32.xlu0 %v2871, 28
        %v3033 = vpop.permute.xlu0 %3032
        %3034 = vrot.lane.b32.xlu0 %v2883, 28
        %v3035 = vpop.permute.xlu0 %3034
        %3036 = vrot.lane.b32.xlu0 %v2895, 28
        %v3037 = vpop.permute.xlu0 %3036
        %3038 = vrot.lane.b32.xlu0 %v2907, 28
        %v3039 = vpop.permute.xlu0 %3038
        %3040 = vrot.lane.b32.xlu0 %v2919, 28
        %v3041 = vpop.permute.xlu0 %3040
        %3042 = vrot.lane.b32.xlu0 %v2931, 28
        %v3043 = vpop.permute.xlu0 %3042
        %3044 = vrot.lane.b32.xlu0 %v2943, 28
        %v3045 = vpop.permute.xlu0 %3044
        %3046 = vrot.lane.b32.xlu0 %v2955, 28
        %v3047 = vpop.permute.xlu0 %3046
        %3048 = vrot.lane.b32.xlu0 %v2967, 28
        %v3049 = vpop.permute.xlu0 %3048
        %3050 = vrot.lane.b32.xlu0 %v2979, 28
        %v3051 = vpop.permute.xlu0 %3050
        %3052 = vrot.lane.b32.xlu0 %v2991, 28
        %v3053 = vpop.permute.xlu0 %3052
        %3054 = vrot.lane.b32.xlu0 %v3003, 28
        %v3055 = vpop.permute.xlu0 %3054
        %3056 = vrot.lane.b32.xlu0 %v3015, 28
        %v3057 = vpop.permute.xlu0 %3056
        %3058 = vrot.lane.b32.xlu0 %v3027, 28
        %v3059 = vpop.permute.xlu0 %3058
        %vm3076 = vcmask 261344
        %3077 = vst.msk [vmem:[#allocation3] sm:$0xff] %vm3076, %v3029
        %3078 = vst.msk [vmem:[#allocation3 + $0x8] sm:$0xff] %vm3076, %v3031
        %3079 = vst.msk [vmem:[#allocation3 + $0x10] sm:$0xff] %vm3076, %v3033
        %3080 = vst.msk [vmem:[#allocation3 + $0x18] sm:$0xff] %vm3076, %v3035
        %3081 = vst.msk [vmem:[#allocation3 + $0x20] sm:$0xff] %vm3076, %v3037
        %3082 = vst.msk [vmem:[#allocation3 + $0x28] sm:$0xff] %vm3076, %v3039
        %3083 = vst.msk [vmem:[#allocation3 + $0x30] sm:$0xff] %vm3076, %v3041
        %3084 = vst.msk [vmem:[#allocation3 + $0x38] sm:$0xff] %vm3076, %v3043
        %3085 = vst.msk [vmem:[#allocation3 + $0x40] sm:$0xff] %vm3076, %v3045
        %3086 = vst.msk [vmem:[#allocation3 + $0x48] sm:$0xff] %vm3076, %v3047
        %3087 = vst.msk [vmem:[#allocation3 + $0x50] sm:$0xff] %vm3076, %v3049
        %3088 = vst.msk [vmem:[#allocation3 + $0x58] sm:$0xff] %vm3076, %v3051
        %3089 = vst.msk [vmem:[#allocation3 + $0x60] sm:$0xff] %vm3076, %v3053
        %3090 = vst.msk [vmem:[#allocation3 + $0x68] sm:$0xff] %vm3076, %v3055
        %3091 = vst.msk [vmem:[#allocation3 + $0x70] sm:$0xff] %vm3076, %v3057
        %3092 = vst.msk [vmem:[#allocation3 + $0x78] sm:$0xff] %vm3076, %v3059
        %v3093 = vld [vmem:[%s2482] sm:$0xe]
        %v3094 = vld [vmem:[%s2482 + $0x4] sm:$0xf]
        %v3095 = vld [vmem:[%s2482 + $0x8] sm:$0x1]
        %v3096 = vld [vmem:[%s2482 + $0xc] sm:$0xe]
        %v3097 = vld [vmem:[%s2482 + $0x10] sm:$0xf]
        %v3098 = vld [vmem:[%s2482 + $0x14] sm:$0x1]
        %v3099 = vld [vmem:[%s2482 + $0x18] sm:$0xe]
        %v3100 = vld [vmem:[%s2482 + $0x1c] sm:$0xf]
        %v3101 = vld [vmem:[%s2482 + $0x20] sm:$0x1]
        %v3102 = vld [vmem:[%s2482 + $0x24] sm:$0xe]
        %v3103 = vld [vmem:[%s2482 + $0x28] sm:$0xf]
        %v3104 = vld [vmem:[%s2482 + $0x2c] sm:$0x1]
        %v3105 = vld [vmem:[%s2482 + $0x30] sm:$0xe]
        %v3106 = vld [vmem:[%s2482 + $0x34] sm:$0xf]
        %v3107 = vld [vmem:[%s2482 + $0x38] sm:$0x1]
        %v3108 = vld [vmem:[%s2482 + $0x3c] sm:$0xe]
        %v3109 = vld [vmem:[%s2482 + $0x40] sm:$0xf]
        %v3110 = vld [vmem:[%s2482 + $0x44] sm:$0x1]
        %v3111 = vld [vmem:[%s2482 + $0x48] sm:$0xe]
        %v3112 = vld [vmem:[%s2482 + $0x4c] sm:$0xf]
        %v3113 = vld [vmem:[%s2482 + $0x50] sm:$0x1]
        %v3114 = vld [vmem:[%s2482 + $0x54] sm:$0xe]
        %v3115 = vld [vmem:[%s2482 + $0x58] sm:$0xf]
        %v3116 = vld [vmem:[%s2482 + $0x5c] sm:$0x1]
        %v3117 = vld [vmem:[%s2482 + $0x60] sm:$0xe]
        %v3118 = vld [vmem:[%s2482 + $0x64] sm:$0xf]
        %v3119 = vld [vmem:[%s2482 + $0x68] sm:$0x1]
        %v3120 = vld [vmem:[%s2482 + $0x6c] sm:$0xe]
        %v3121 = vld [vmem:[%s2482 + $0x70] sm:$0xf]
        %v3122 = vld [vmem:[%s2482 + $0x74] sm:$0x1]
        %v3123 = vld [vmem:[%s2482 + $0x78] sm:$0xe]
        %v3124 = vld [vmem:[%s2482 + $0x7c] sm:$0xf]
        %v3125 = vld [vmem:[%s2482 + $0x80] sm:$0x1]
        %v3126 = vld [vmem:[%s2482 + $0x84] sm:$0xe]
        %v3127 = vld [vmem:[%s2482 + $0x88] sm:$0xf]
        %v3128 = vld [vmem:[%s2482 + $0x8c] sm:$0x1]
        %v3129 = vld [vmem:[%s2482 + $0x90] sm:$0xe]
        %v3130 = vld [vmem:[%s2482 + $0x94] sm:$0xf]
        %v3131 = vld [vmem:[%s2482 + $0x98] sm:$0x1]
        %v3132 = vld [vmem:[%s2482 + $0x9c] sm:$0xe]
        %v3133 = vld [vmem:[%s2482 + $0xa0] sm:$0xf]
        %v3134 = vld [vmem:[%s2482 + $0xa4] sm:$0x1]
        %v3135 = vld [vmem:[%s2482 + $0xa8] sm:$0xe]
        %v3136 = vld [vmem:[%s2482 + $0xac] sm:$0xf]
        %v3137 = vld [vmem:[%s2482 + $0xb0] sm:$0x1]
        %v3138 = vld [vmem:[%s2482 + $0xb4] sm:$0xe]
        %v3139 = vld [vmem:[%s2482 + $0xb8] sm:$0xf]
        %v3140 = vld [vmem:[%s2482 + $0xbc] sm:$0x1]
        %v3189 = vunpack.c.l.b16 %v3093
        %v3190 = vunpack.c.l.b16 %v3094
        %v3191 = vunpack.c.l.b16 %v3095
        %v3192 = vunpack.c.l.b16 %v3096
        %v3193 = vunpack.c.l.b16 %v3097
        %v3194 = vunpack.c.l.b16 %v3098
        %v3195 = vunpack.c.l.b16 %v3099
        %v3196 = vunpack.c.l.b16 %v3100
        %v3197 = vunpack.c.l.b16 %v3101
        %v3198 = vunpack.c.l.b16 %v3102
        %v3199 = vunpack.c.l.b16 %v3103
        %v3200 = vunpack.c.l.b16 %v3104
        %v3201 = vunpack.c.l.b16 %v3105
        %v3202 = vunpack.c.l.b16 %v3106
        %v3203 = vunpack.c.l.b16 %v3107
        %v3204 = vunpack.c.l.b16 %v3108
        %v3205 = vunpack.c.l.b16 %v3109
        %v3206 = vunpack.c.l.b16 %v3110
        %v3207 = vunpack.c.l.b16 %v3111
        %v3208 = vunpack.c.l.b16 %v3112
        %v3209 = vunpack.c.l.b16 %v3113
        %v3210 = vunpack.c.l.b16 %v3114
        %v3211 = vunpack.c.l.b16 %v3115
        %v3212 = vunpack.c.l.b16 %v3116
        %v3213 = vunpack.c.l.b16 %v3117
        %v3214 = vunpack.c.l.b16 %v3118
        %v3215 = vunpack.c.l.b16 %v3119
        %v3216 = vunpack.c.l.b16 %v3120
        %v3217 = vunpack.c.l.b16 %v3121
        %v3218 = vunpack.c.l.b16 %v3122
        %v3219 = vunpack.c.l.b16 %v3123
        %v3220 = vunpack.c.l.b16 %v3124
        %v3221 = vunpack.c.l.b16 %v3125
        %v3222 = vunpack.c.l.b16 %v3126
        %v3223 = vunpack.c.l.b16 %v3127
        %v3224 = vunpack.c.l.b16 %v3128
        %v3225 = vunpack.c.l.b16 %v3129
        %v3226 = vunpack.c.l.b16 %v3130
        %v3227 = vunpack.c.l.b16 %v3131
        %v3228 = vunpack.c.l.b16 %v3132
        %v3229 = vunpack.c.l.b16 %v3133
        %v3230 = vunpack.c.l.b16 %v3134
        %v3231 = vunpack.c.l.b16 %v3135
        %v3232 = vunpack.c.l.b16 %v3136
        %v3233 = vunpack.c.l.b16 %v3137
        %v3234 = vunpack.c.l.b16 %v3138
        %v3235 = vunpack.c.l.b16 %v3139
        %v3236 = vunpack.c.l.b16 %v3140
        %v3237 = vpack.c.b16 %v3190, %v3189
        %v3238 = vpack.c.b16 %v3191, %v3191
        %v3239 = vpack.c.b16 %v3193, %v3192
        %v3240 = vpack.c.b16 %v3194, %v3194
        %v3241 = vpack.c.b16 %v3196, %v3195
        %v3242 = vpack.c.b16 %v3197, %v3197
        %v3243 = vpack.c.b16 %v3199, %v3198
        %v3244 = vpack.c.b16 %v3200, %v3200
        %v3245 = vpack.c.b16 %v3202, %v3201
        %v3246 = vpack.c.b16 %v3203, %v3203
        %v3247 = vpack.c.b16 %v3205, %v3204
        %v3248 = vpack.c.b16 %v3206, %v3206
        %v3249 = vpack.c.b16 %v3208, %v3207
        %v3250 = vpack.c.b16 %v3209, %v3209
        %v3251 = vpack.c.b16 %v3211, %v3210
        %v3252 = vpack.c.b16 %v3212, %v3212
        %v3253 = vpack.c.b16 %v3214, %v3213
        %v3254 = vpack.c.b16 %v3215, %v3215
        %v3255 = vpack.c.b16 %v3217, %v3216
        %v3256 = vpack.c.b16 %v3218, %v3218
        %v3257 = vpack.c.b16 %v3220, %v3219
        %v3258 = vpack.c.b16 %v3221, %v3221
        %v3259 = vpack.c.b16 %v3223, %v3222
        %v3260 = vpack.c.b16 %v3224, %v3224
        %v3261 = vpack.c.b16 %v3226, %v3225
        %v3262 = vpack.c.b16 %v3227, %v3227
        %v3263 = vpack.c.b16 %v3229, %v3228
        %v3264 = vpack.c.b16 %v3230, %v3230
        %v3265 = vpack.c.b16 %v3232, %v3231
        %v3266 = vpack.c.b16 %v3233, %v3233
        %v3267 = vpack.c.b16 %v3235, %v3234
        %v3268 = vpack.c.b16 %v3236, %v3236
        %v3269 = vrot.slane %v3237, 1
        %v3270 = vrot.slane %v3238, 1
        %v3271 = vsel %vm1469, %v3269, %v3270
        %v3272 = vrot.slane %v3239, 1
        %v3273 = vrot.slane %v3240, 1
        %v3274 = vsel %vm1469, %v3272, %v3273
        %v3275 = vrot.slane %v3241, 1
        %v3276 = vrot.slane %v3242, 1
        %v3277 = vsel %vm1469, %v3275, %v3276
        %v3278 = vrot.slane %v3243, 1
        %v3279 = vrot.slane %v3244, 1
        %v3280 = vsel %vm1469, %v3278, %v3279
        %v3281 = vrot.slane %v3245, 1
        %v3282 = vrot.slane %v3246, 1
        %v3283 = vsel %vm1469, %v3281, %v3282
        %v3284 = vrot.slane %v3247, 1
        %v3285 = vrot.slane %v3248, 1
        %v3286 = vsel %vm1469, %v3284, %v3285
        %v3287 = vrot.slane %v3249, 1
        %v3288 = vrot.slane %v3250, 1
        %v3289 = vsel %vm1469, %v3287, %v3288
        %v3290 = vrot.slane %v3251, 1
        %v3291 = vrot.slane %v3252, 1
        %v3292 = vsel %vm1469, %v3290, %v3291
        %v3293 = vrot.slane %v3253, 1
        %v3294 = vrot.slane %v3254, 1
        %v3295 = vsel %vm1469, %v3293, %v3294
        %v3296 = vrot.slane %v3255, 1
        %v3297 = vrot.slane %v3256, 1
        %v3298 = vsel %vm1469, %v3296, %v3297
        %v3299 = vrot.slane %v3257, 1
        %v3300 = vrot.slane %v3258, 1
        %v3301 = vsel %vm1469, %v3299, %v3300
        %v3302 = vrot.slane %v3259, 1
        %v3303 = vrot.slane %v3260, 1
        %v3304 = vsel %vm1469, %v3302, %v3303
        %v3305 = vrot.slane %v3261, 1
        %v3306 = vrot.slane %v3262, 1
        %v3307 = vsel %vm1469, %v3305, %v3306
        %v3308 = vrot.slane %v3263, 1
        %v3309 = vrot.slane %v3264, 1
        %v3310 = vsel %vm1469, %v3308, %v3309
        %v3311 = vrot.slane %v3265, 1
        %v3312 = vrot.slane %v3266, 1
        %v3313 = vsel %vm1469, %v3311, %v3312
        %v3314 = vrot.slane %v3267, 1
        %v3315 = vrot.slane %v3268, 1
        %v3316 = vsel %vm1469, %v3314, %v3315
        %3317 = vrot.lane.b32.xlu0 %v3271, 32
        %v3318 = vpop.permute.xlu0 %3317
        %3319 = vrot.lane.b32.xlu0 %v3274, 32
        %v3320 = vpop.permute.xlu0 %3319
        %3321 = vrot.lane.b32.xlu0 %v3277, 32
        %v3322 = vpop.permute.xlu0 %3321
        %3323 = vrot.lane.b32.xlu0 %v3280, 32
        %v3324 = vpop.permute.xlu0 %3323
        %3325 = vrot.lane.b32.xlu0 %v3283, 32
        %v3326 = vpop.permute.xlu0 %3325
        %3327 = vrot.lane.b32.xlu0 %v3286, 32
        %v3328 = vpop.permute.xlu0 %3327
        %3329 = vrot.lane.b32.xlu0 %v3289, 32
        %v3330 = vpop.permute.xlu0 %3329
        %3331 = vrot.lane.b32.xlu0 %v3292, 32
        %v3332 = vpop.permute.xlu0 %3331
        %3333 = vrot.lane.b32.xlu0 %v3295, 32
        %v3334 = vpop.permute.xlu0 %3333
        %3335 = vrot.lane.b32.xlu0 %v3298, 32
        %v3336 = vpop.permute.xlu0 %3335
        %3337 = vrot.lane.b32.xlu0 %v3301, 32
        %v3338 = vpop.permute.xlu0 %3337
        %3339 = vrot.lane.b32.xlu0 %v3304, 32
        %v3340 = vpop.permute.xlu0 %3339
        %3341 = vrot.lane.b32.xlu0 %v3307, 32
        %v3342 = vpop.permute.xlu0 %3341
        %3343 = vrot.lane.b32.xlu0 %v3310, 32
        %v3344 = vpop.permute.xlu0 %3343
        %3345 = vrot.lane.b32.xlu0 %v3313, 32
        %v3346 = vpop.permute.xlu0 %3345
        %3347 = vrot.lane.b32.xlu0 %v3316, 32
        %v3348 = vpop.permute.xlu0 %3347
        %vm3365 = vcmask 294144
        %3366 = vst.msk [vmem:[#allocation3] sm:$0xff] %vm3365, %v3318
        %3367 = vst.msk [vmem:[#allocation3 + $0x8] sm:$0xff] %vm3365, %v3320
        %3368 = vst.msk [vmem:[#allocation3 + $0x10] sm:$0xff] %vm3365, %v3322
        %3369 = vst.msk [vmem:[#allocation3 + $0x18] sm:$0xff] %vm3365, %v3324
        %3370 = vst.msk [vmem:[#allocation3 + $0x20] sm:$0xff] %vm3365, %v3326
        %3371 = vst.msk [vmem:[#allocation3 + $0x28] sm:$0xff] %vm3365, %v3328
        %3372 = vst.msk [vmem:[#allocation3 + $0x30] sm:$0xff] %vm3365, %v3330
        %3373 = vst.msk [vmem:[#allocation3 + $0x38] sm:$0xff] %vm3365, %v3332
        %3374 = vst.msk [vmem:[#allocation3 + $0x40] sm:$0xff] %vm3365, %v3334
        %3375 = vst.msk [vmem:[#allocation3 + $0x48] sm:$0xff] %vm3365, %v3336
        %3376 = vst.msk [vmem:[#allocation3 + $0x50] sm:$0xff] %vm3365, %v3338
        %3377 = vst.msk [vmem:[#allocation3 + $0x58] sm:$0xff] %vm3365, %v3340
        %3378 = vst.msk [vmem:[#allocation3 + $0x60] sm:$0xff] %vm3365, %v3342
        %3379 = vst.msk [vmem:[#allocation3 + $0x68] sm:$0xff] %vm3365, %v3344
        %3380 = vst.msk [vmem:[#allocation3 + $0x70] sm:$0xff] %vm3365, %v3346
        %3381 = vst.msk [vmem:[#allocation3 + $0x78] sm:$0xff] %vm3365, %v3348
        %v3382 = vld [vmem:[#allocation3] sm:$0xff]
        %v3383 = vld [vmem:[#allocation3 + $0x8] sm:$0xff]
        %v3384 = vld [vmem:[#allocation3 + $0x10] sm:$0xff]
        %v3385 = vld [vmem:[#allocation3 + $0x18] sm:$0xff]
        %v3386 = vld [vmem:[#allocation3 + $0x20] sm:$0xff]
        %v3387 = vld [vmem:[#allocation3 + $0x28] sm:$0xff]
        %v3388 = vld [vmem:[#allocation3 + $0x30] sm:$0xff]
        %v3389 = vld [vmem:[#allocation3 + $0x38] sm:$0xff]
        %v3390 = vld [vmem:[#allocation3 + $0x40] sm:$0xff]
        %v3391 = vld [vmem:[#allocation3 + $0x48] sm:$0xff]
        %v3392 = vld [vmem:[#allocation3 + $0x50] sm:$0xff]
        %v3393 = vld [vmem:[#allocation3 + $0x58] sm:$0xff]
        %v3394 = vld [vmem:[#allocation3 + $0x60] sm:$0xff]
        %v3395 = vld [vmem:[#allocation3 + $0x68] sm:$0xff]
        %v3396 = vld [vmem:[#allocation3 + $0x70] sm:$0xff]
        %v3397 = vld [vmem:[#allocation3 + $0x78] sm:$0xff]
        %v3398 = vld [vmem:[%s1] sm:$0xf]
        %v3399 = vld [vmem:[%s1 + $0x4] sm:$0xf]
        %v3400 = vld [vmem:[%s1 + $0x8] sm:$0xf]
        %v3401 = vld [vmem:[%s1 + $0xc] sm:$0xf]
        %v3402 = vld [vmem:[%s1 + $0x10] sm:$0x3]
        %v3403 = vld [vmem:[%s2] sm:$0x1]
        %v3405 = vlaneseq
        %v3406 = vshrl.u32 %v3405, 7
        %v3407 = vsub.s32 0, %v3406
        %v3408 = vrot.slane %v3403, %v3407
        %v3415 = vunpack.c.l.b16 %v3398
        %v3416 = vunpack.c.l.b16 %v3399
        %v3417 = vunpack.c.l.b16 %v3400
        %v3418 = vunpack.c.l.b16 %v3401
        %v3419 = vunpack.c.l.b16 %v3402
        %v3420 = vpack.c.b16 %v3416, %v3415
        %v3421 = vpack.c.b16 %v3418, %v3417
        %v3422 = vpack.c.b16 %v3419, %v3419
        %vm3425 = vcmask 293888
        %v3427 = vsel %vm3425, %v3382, 0
        %v3430 = vsel %vm3425, %v3383, 0
        %v3433 = vsel %vm3425, %v3384, 0
        %v3436 = vsel %vm3425, %v3385, 0
        %v3439 = vsel %vm3425, %v3386, 0
        %v3442 = vsel %vm3425, %v3387, 0
        %v3445 = vsel %vm3425, %v3388, 0
        %v3448 = vsel %vm3425, %v3389, 0
        %v3451 = vsel %vm3425, %v3390, 0
        %v3454 = vsel %vm3425, %v3391, 0
        %v3457 = vsel %vm3425, %v3392, 0
        %v3460 = vsel %vm3425, %v3393, 0
        %v3463 = vsel %vm3425, %v3394, 0
        %v3466 = vsel %vm3425, %v3395, 0
        %v3469 = vsel %vm3425, %v3396, 0
        %v3472 = vsel %vm3425, %v3397, 0
        %vm3474 = vcmask 1041408
        %v3476 = vsel %vm3474, %v3422, 0
        %3478 = vmatprep.subr.bf16.mxu0 0
        %3479 = vmatpush1.bf16.msra.mxu0 %v3420
        %3480 = vmatprep.subr.bf16.mxu0 0
        %3481 = vmatpush1.bf16.msra.mxu0 %v3421
        %3482 = vmatprep.subr.bf16.mxu0 0
        %3483 = vmatpush1.bf16.msra.mxu0 %v3476
        %3484 = vmatprep.subr.bf16.mxu0 0
        %3485 = vmatpush1.bf16.msra.mxu0 0
        %3486 = vmatprep.subr.bf16.mxu0 0
        %3487 = vmatpush1.bf16.msra.mxu0 0
        %3488 = vmatprep.subr.bf16.mxu0 0
        %3489 = vmatpush1.bf16.msra.mxu0 0
        %3490 = vmatprep.subr.bf16.mxu0 0
        %3491 = vmatpush1.bf16.msra.mxu0 0
        %3492 = vmatprep.subr.bf16.mxu0 0
        %3493 = vmatpush1.bf16.msra.mxu0 0
        %3494 = vmatprep.subr.bf16.mxu0 0
        %3495 = vmatpush1.bf16.msra.mxu0 0
        %3496 = vmatprep.subr.bf16.mxu0 0
        %3497 = vmatpush1.bf16.msra.mxu0 0
        %3498 = vmatprep.subr.bf16.mxu0 0
        %3499 = vmatpush1.bf16.msra.mxu0 0
        %3500 = vmatprep.subr.bf16.mxu0 0
        %3501 = vmatpush1.bf16.msra.mxu0 0
        %3502 = vmatprep.subr.bf16.mxu0 0
        %3503 = vmatpush1.bf16.msra.mxu0 0
        %3504 = vmatprep.subr.bf16.mxu0 0
        %3505 = vmatpush1.bf16.msra.mxu0 0
        %3506 = vmatprep.subr.bf16.mxu0 0
        %3507 = vmatpush1.bf16.msra.mxu0 0
        %3508 = vmatprep.subr.bf16.mxu0 0
        %3509 = vmatpush1.bf16.msra.mxu0 0
        %3510 = vmatprep.mubr.bf16.mxu0 0
        %3511 = vmatmul.mubr.bf16.gmra.mrb[0].mxu0 %v3427
        %v3512 = vpop.f32.mrb[0].mxu0
        %v3513 = vadd.f32 %v3408, %v3512
        %v3514 = vpop.f32.mrb[0].mxu0
        %v3515 = vpop.f32.mrb[0].mxu0
        %v3516 = vadd.f32 %v3408, %v3515
        %v3517 = vpop.f32.mrb[0].mxu0
        %3518 = vmatprep.mubr.bf16.mxu0 0
        %3519 = vmatmul.mubr.bf16.gmra.mrb[0].mxu0 %v3430
        %v3520 = vpop.f32.mrb[0].mxu0
        %v3521 = vadd.f32 %v3408, %v3520
        %v3522 = vpop.f32.mrb[0].mxu0
        %v3523 = vpop.f32.mrb[0].mxu0
        %v3524 = vadd.f32 %v3408, %v3523
        %v3525 = vpop.f32.mrb[0].mxu0
        %3526 = vmatprep.mubr.bf16.mxu0 0
        %3527 = vmatmul.mubr.bf16.gmra.mrb[0].mxu0 %v3433
        %v3528 = vpop.f32.mrb[0].mxu0
        %v3529 = vadd.f32 %v3408, %v3528
        %v3530 = vpop.f32.mrb[0].mxu0
        %v3531 = vpop.f32.mrb[0].mxu0
        %v3532 = vadd.f32 %v3408, %v3531
        %v3533 = vpop.f32.mrb[0].mxu0
        %3534 = vmatprep.mubr.bf16.mxu0 0
        %3535 = vmatmul.mubr.bf16.gmra.mrb[0].mxu0 %v3436
        %v3536 = vpop.f32.mrb[0].mxu0
        %v3537 = vadd.f32 %v3408, %v3536
        %v3538 = vpop.f32.mrb[0].mxu0
        %v3539 = vpop.f32.mrb[0].mxu0
        %v3540 = vadd.f32 %v3408, %v3539
        %v3541 = vpop.f32.mrb[0].mxu0
        %3542 = vmatprep.mubr.bf16.mxu0 0
        %3543 = vmatmul.mubr.bf16.gmra.mrb[0].mxu0 %v3439
        %v3544 = vpop.f32.mrb[0].mxu0
        %v3545 = vadd.f32 %v3408, %v3544
        %v3546 = vpop.f32.mrb[0].mxu0
        %v3547 = vpop.f32.mrb[0].mxu0
        %v3548 = vadd.f32 %v3408, %v3547
        %v3549 = vpop.f32.mrb[0].mxu0
        %3550 = vmatprep.mubr.bf16.mxu0 0
        %3551 = vmatmul.mubr.bf16.gmra.mrb[0].mxu0 %v3442
        %v3552 = vpop.f32.mrb[0].mxu0
        %v3553 = vadd.f32 %v3408, %v3552
        %v3554 = vpop.f32.mrb[0].mxu0
        %v3555 = vpop.f32.mrb[0].mxu0
        %v3556 = vadd.f32 %v3408, %v3555
        %v3557 = vpop.f32.mrb[0].mxu0
        %3558 = vmatprep.mubr.bf16.mxu0 0
        %3559 = vmatmul.mubr.bf16.gmra.mrb[0].mxu0 %v3445
        %v3560 = vpop.f32.mrb[0].mxu0
        %v3561 = vadd.f32 %v3408, %v3560
        %v3562 = vpop.f32.mrb[0].mxu0
        %v3563 = vpop.f32.mrb[0].mxu0
        %v3564 = vadd.f32 %v3408, %v3563
        %v3565 = vpop.f32.mrb[0].mxu0
        %3566 = vmatprep.mubr.bf16.mxu0 0
        %3567 = vmatmul.mubr.bf16.gmra.mrb[0].mxu0 %v3448
        %v3568 = vpop.f32.mrb[0].mxu0
        %v3569 = vadd.f32 %v3408, %v3568
        %v3570 = vpop.f32.mrb[0].mxu0
        %v3571 = vpop.f32.mrb[0].mxu0
        %v3572 = vadd.f32 %v3408, %v3571
        %v3573 = vpop.f32.mrb[0].mxu0
        %3574 = vmatprep.mubr.bf16.mxu0 0
        %3575 = vmatmul.mubr.bf16.gmra.mrb[0].mxu0 %v3451
        %v3576 = vpop.f32.mrb[0].mxu0
        %v3577 = vadd.f32 %v3408, %v3576
        %v3578 = vpop.f32.mrb[0].mxu0
        %v3579 = vpop.f32.mrb[0].mxu0
        %v3580 = vadd.f32 %v3408, %v3579
        %v3581 = vpop.f32.mrb[0].mxu0
        %3582 = vmatprep.mubr.bf16.mxu0 0
        %3583 = vmatmul.mubr.bf16.gmra.mrb[0].mxu0 %v3454
        %v3584 = vpop.f32.mrb[0].mxu0
        %v3585 = vadd.f32 %v3408, %v3584
        %v3586 = vpop.f32.mrb[0].mxu0
        %v3587 = vpop.f32.mrb[0].mxu0
        %v3588 = vadd.f32 %v3408, %v3587
        %v3589 = vpop.f32.mrb[0].mxu0
        %3590 = vmatprep.mubr.bf16.mxu0 0
        %3591 = vmatmul.mubr.bf16.gmra.mrb[0].mxu0 %v3457
        %v3592 = vpop.f32.mrb[0].mxu0
        %v3593 = vadd.f32 %v3408, %v3592
        %v3594 = vpop.f32.mrb[0].mxu0
        %v3595 = vpop.f32.mrb[0].mxu0
        %v3596 = vadd.f32 %v3408, %v3595
        %v3597 = vpop.f32.mrb[0].mxu0
        %3598 = vmatprep.mubr.bf16.mxu0 0
        %3599 = vmatmul.mubr.bf16.gmra.mrb[0].mxu0 %v3460
        %v3600 = vpop.f32.mrb[0].mxu0
        %v3601 = vadd.f32 %v3408, %v3600
        %v3602 = vpop.f32.mrb[0].mxu0
        %v3603 = vpop.f32.mrb[0].mxu0
        %v3604 = vadd.f32 %v3408, %v3603
        %v3605 = vpop.f32.mrb[0].mxu0
        %3606 = vmatprep.mubr.bf16.mxu0 0
        %3607 = vmatmul.mubr.bf16.gmra.mrb[0].mxu0 %v3463
        %v3608 = vpop.f32.mrb[0].mxu0
        %v3609 = vadd.f32 %v3408, %v3608
        %v3610 = vpop.f32.mrb[0].mxu0
        %v3611 = vpop.f32.mrb[0].mxu0
        %v3612 = vadd.f32 %v3408, %v3611
        %v3613 = vpop.f32.mrb[0].mxu0
        %3614 = vmatprep.mubr.bf16.mxu0 0
        %3615 = vmatmul.mubr.bf16.gmra.mrb[0].mxu0 %v3466
        %v3616 = vpop.f32.mrb[0].mxu0
        %v3617 = vadd.f32 %v3408, %v3616
        %v3618 = vpop.f32.mrb[0].mxu0
        %v3619 = vpop.f32.mrb[0].mxu0
        %v3620 = vadd.f32 %v3408, %v3619
        %v3621 = vpop.f32.mrb[0].mxu0
        %3622 = vmatprep.mubr.bf16.mxu0 0
        %3623 = vmatmul.mubr.bf16.gmra.mrb[0].mxu0 %v3469
        %v3624 = vpop.f32.mrb[0].mxu0
        %v3625 = vadd.f32 %v3408, %v3624
        %v3626 = vpop.f32.mrb[0].mxu0
        %v3627 = vpop.f32.mrb[0].mxu0
        %v3628 = vadd.f32 %v3408, %v3627
        %v3629 = vpop.f32.mrb[0].mxu0
        %3630 = vmatprep.mubr.bf16.mxu0 0
        %3631 = vmatmul.mubr.bf16.gmra.mrb[0].mxu0 %v3472
        %v3632 = vpop.f32.mrb[0].mxu0
        %v3633 = vadd.f32 %v3408, %v3632
        %v3634 = vpop.f32.mrb[0].mxu0
        %v3635 = vpop.f32.mrb[0].mxu0
        %v3636 = vadd.f32 %v3408, %v3635
        %v3637 = vpop.f32.mrb[0].mxu0
        %3638 = vdwg.mxu0
        %3639 = vst [vmem:[%s177] sm:$0xff] %v3513
        %3640 = vst [vmem:[%s177 + $0x8] sm:$0xff] %v3516
        %3641 = vst [vmem:[%s177 + $0x10] sm:$0xff] %v3521
        %3642 = vst [vmem:[%s177 + $0x18] sm:$0xff] %v3524
        %3643 = vst [vmem:[%s177 + $0x20] sm:$0xff] %v3529
        %3644 = vst [vmem:[%s177 + $0x28] sm:$0xff] %v3532
        %3645 = vst [vmem:[%s177 + $0x30] sm:$0xff] %v3537
        %3646 = vst [vmem:[%s177 + $0x38] sm:$0xff] %v3540
        %3647 = vst [vmem:[%s177 + $0x40] sm:$0xff] %v3545
        %3648 = vst [vmem:[%s177 + $0x48] sm:$0xff] %v3548
        %3649 = vst [vmem:[%s177 + $0x50] sm:$0xff] %v3553
        %3650 = vst [vmem:[%s177 + $0x58] sm:$0xff] %v3556
        %3651 = vst [vmem:[%s177 + $0x60] sm:$0xff] %v3561
        %3652 = vst [vmem:[%s177 + $0x68] sm:$0xff] %v3564
        %3653 = vst [vmem:[%s177 + $0x70] sm:$0xff] %v3569
        %3654 = vst [vmem:[%s177 + $0x78] sm:$0xff] %v3572
        %3655 = vst [vmem:[%s177 + $0x80] sm:$0xff] %v3577
        %3656 = vst [vmem:[%s177 + $0x88] sm:$0xff] %v3580
        %3657 = vst [vmem:[%s177 + $0x90] sm:$0xff] %v3585
        %3658 = vst [vmem:[%s177 + $0x98] sm:$0xff] %v3588
        %3659 = vst [vmem:[%s177 + $0xa0] sm:$0xff] %v3593
        %3660 = vst [vmem:[%s177 + $0xa8] sm:$0xff] %v3596
        %3661 = vst [vmem:[%s177 + $0xb0] sm:$0xff] %v3601
        %3662 = vst [vmem:[%s177 + $0xb8] sm:$0xff] %v3604
        %3663 = vst [vmem:[%s177 + $0xc0] sm:$0xff] %v3609
        %3664 = vst [vmem:[%s177 + $0xc8] sm:$0xff] %v3612
        %3665 = vst [vmem:[%s177 + $0xd0] sm:$0xff] %v3617
        %3666 = vst [vmem:[%s177 + $0xd8] sm:$0xff] %v3620
        %3667 = vst [vmem:[%s177 + $0xe0] sm:$0xff] %v3625
        %3668 = vst [vmem:[%s177 + $0xe8] sm:$0xff] %v3628
        %3669 = vst [vmem:[%s177 + $0xf0] sm:$0xff] %v3633
        %3670 = vst [vmem:[%s177 + $0xf8] sm:$0xff] %v3636
        %s3671 = sand.u32 %s107, 1
        %s3672 = scalar_lea.sflag [#allocation5], %s3671
        %s3673 = sand.u32 %s107, 1
        %s3674 = smul.addr %s3673, 256
        %s3675 = scalar_lea.vmem [#allocation4], %s3674
        // Predicated region
        $region33: #{tpu_custom_call.1} parent=31 // pred_check
          %p3676 = pneg %p117
        $region34: #{tpu_custom_call.1} parent=31 // pred_check_branch
          %3678 = sbr.rel (%p3676) target = $region36
        $region35: #{tpu_custom_call.1} parent=31 // pred_region
          %s3679 = smul.u32 16, %s22
          %s3681 = ssub.s32 4096, 4096
          %3682 = vsyncadd %s3672, %s3681
          %s3683 = smul.addr %s3679, 2
          %s3684 = smul.addr %s21, 32
          %s3685 = sadd.s32 %s3683, %s3684
          %s3686 = smul.addr %s3685, 128
          %s3687 = scalar_lea.hbm %s3, %s3686
          %s3688 = sshll.u32 %s3675, 4
          %s3689 = int_to_ptr.vmem [resolvable:$true] %s3688
          %3694 = dma.vmem_to_hbm [thread:$0]  %s3689, 4096, %s3687, %s3672, 128, 128, 8
        $region36: #{tpu_custom_call.1} parent=31 // pred_fallthru
          _
      $region32: #{tpu_custom_call.1} parent=5 // pred_fallthru
        _
      %p3695 = scmp.le.s32.totalorder 2, %s12
      // Predicated region
      $region37: #{tpu_custom_call.1} parent=5 // pred_check
        %p3696 = pneg %p3695
      $region38: #{tpu_custom_call.1} parent=5 // pred_check_branch
        %3698 = sbr.rel (%p3696) target = $region40
      $region39: #{tpu_custom_call.1} parent=5 // pred_region
        %s3699 = ssub.s32 %s12, 2
        // Predicated region
        $region41: #{tpu_custom_call.1} parent=39 // pred_check
          %p3700 = pneg %p123
        $region42: #{tpu_custom_call.1} parent=39 // pred_check_branch
          %3702 = sbr.rel (%p3700) target = $region44
        $region43: #{tpu_custom_call.1} parent=39 // pred_region
          %s3703 = sand.u32 %s108, 1
          %s3704 = scalar_lea.sflag [#allocation5], %s3703
          %s3705 = sand.u32 %s108, 1
          %s3706 = smul.addr %s3705, 256
          %s3707 = scalar_lea.vmem [#allocation4], %s3706
          %3708 = dma.done %s3704, 4096
        $region44: #{tpu_custom_call.1} parent=39 // pred_fallthru
          _
      $region40: #{tpu_custom_call.1} parent=5 // pred_fallthru
        _
    $region6: #{tpu_custom_call.1} parent=1 // loop_footer
      %s16 = sadd.s32 1, %s12
    $region7: #{tpu_custom_call.1} parent=1 // loop_footer_branch
      %11 = sbr.rel target = $region3
    $region8: #{tpu_custom_call.1} parent=1 // loop_exit
      _
    %3709 = vsyncpa [#allocation5], 1
    %s3710 = scalar_lea.sflag [#allocation5], 1
    %3711 = vsyncpa %s3710, 1

</llo_original>
